<compile_context>
chip_gen: v7x
topology: tpu7x:2x2x1
jax: 0.10.0
libtpu: 0.0.40
codegen_flags: <defaults>
</compile_context>

<pallas_src>
import jax
import jax.numpy as jnp
import numpy as np
from jax.experimental import pallas as pl
from jax.experimental.pallas import tpu as pltpu


def _round_up(x, m):
    return ((x + m - 1) // m) * m


# ---------------------------------------------------------------------------
# Fused kernel: linear1 + Conv2d + ReLU + attention + linear2 for one batch block
# ---------------------------------------------------------------------------
def _tpa_fused_kernel(x_ref, ht_ref, y_ref, bc_ref, w1t_ref, b1_ref,
                      sel_jT_ref, sel_i_ref, sel_iT_ref, sel_j_ref,
                      w2a_ref, w2b_ref, b2_ref, out_ref):
    x = x_ref[0]          # (Bblk, T*A)  -- H flattened per batch row
    ht = ht_ref[0]        # (Bblk, A)

    # linear1:  w = ht @ W1^T + b1                         (Bblk, N)
    w = jnp.dot(ht, w1t_ref[...], preferred_element_type=jnp.float32) + b1_ref[...]

    # Conv2d as ONE dense MXU contraction over the whole (attn_len*attn_size) window
    # (im2col folded into the weight) + channel bias + ReLU.
    # r[b, n*F + f] == ReLU(conv_raw[b, n, f]); columns >= N*F are zero padding.
    r = jnp.dot(x, y_ref[...], preferred_element_type=jnp.float32) + bc_ref[...]
    r = jnp.maximum(r, 0.0)                               # (Bblk, NFp)

    # PyTorch view: cv[b, i, j] = r[b, i*N + j]  (raw reinterpretation of the flat
    # (N, F) conv block).  Attention score s[b, i] = sum_j cv[b, i, j] * w[b, j]:
    #   wrep[b, m] = w[b, m % N]   (via constant 0/1 selector, MXU)
    #   s = (r * wrep) @ sel_i     (groups m by i = m // N)
    wrep = jnp.dot(w, sel_jT_ref[...], preferred_element_type=jnp.float32)   # (Bblk, NFp)
    s = jnp.dot(r * wrep, sel_i_ref[...], preferred_element_type=jnp.float32)  # (Bblk, Fp)
    alpha = 1.0 / (1.0 + jnp.exp(-s))                     # sigmoid (exact)

    # Context: v[b, j] = sum_i alpha[b, i] * cv[b, i, j]:
    #   arep[b, m] = alpha[b, m // N];  v = (r * arep) @ sel_j  (groups m by j = m % N)
    arep = jnp.dot(alpha, sel_iT_ref[...], preferred_element_type=jnp.float32)  # (Bblk, NFp)
    v = jnp.dot(r * arep, sel_j_ref[...], preferred_element_type=jnp.float32)   # (Bblk, N)

    # linear2 on concat([ht, v]):  ht @ W2[:, :A]^T + v @ W2[:, A:]^T + b2
    out = (jnp.dot(ht, w2a_ref[...], preferred_element_type=jnp.float32)
           + jnp.dot(v, w2b_ref[...], preferred_element_type=jnp.float32)
           + b2_ref[...])
    out_ref[0] = out.astype(out_ref.dtype)


# ---------------------------------------------------------------------------
# Wrapper
# ---------------------------------------------------------------------------
def temporal_pattern_attention(H, ht, params):
    """H: (B, 1, attn_len, attn_size) f32, ht: (B, attn_size) f32 -> (B, attn_size)."""
    conv_w, conv_b = params["conv_w"], params["conv_b"]
    w1, b1 = params["w1"], params["b1"]
    w2, b2 = params["w2"], params["b2"]

    B, C, T, A = H.shape
    assert C == 1
    N, _, _, K = conv_w.shape        # (filter_num, 1, attn_len, filter_size)
    F = A - K + 1                    # feat_size
    NF = N * F
    NFp = _round_up(NF, 128)         # lane-dense flat conv width
    Fp = _round_up(F, 8)

    # ---- weight preprocessing (pure reformatting, traced once under jit) ----
    # Dense conv weight: Y[t*A + a, n*F + f] = conv_w[n, 0, t, a - f] if 0 <= a-f < K.
    Wk = conv_w[:, 0]                                        # (N, T, K)
    a_idx = jnp.arange(A)[None, :, None]
    f_idx = jnp.arange(F)[None, None, :]
    k_idx = jnp.arange(K)[:, None, None]
    tap = (a_idx == (f_idx + k_idx)).astype(jnp.float32)     # (K, A, F)
    Y = jnp.einsum('ntk,kaf->tanf', Wk, tap).reshape(T * A, NF)
    Y = jnp.pad(Y, ((0, 0), (0, NFp - NF)))                  # (T*A, NFp)

    bconv = jnp.pad(jnp.repeat(conv_b, F), (0, NFp - NF)).reshape(1, NFp)

    # Constant 0/1 selector matrices for the "view" regrouping (numpy -> constants).
    m = np.arange(NF)
    sel_i_np = np.zeros((NFp, Fp), np.float32); sel_i_np[m, m // N] = 1.0
    sel_j_np = np.zeros((NFp, N), np.float32);  sel_j_np[m, m % N] = 1.0
    sel_i, sel_iT = jnp.asarray(sel_i_np), jnp.asarray(sel_i_np.T)
    sel_j, sel_jT = jnp.asarray(sel_j_np), jnp.asarray(sel_j_np.T)

    w1t = w1.T                       # (A, N)
    b1r = b1.reshape(1, N)
    w2a = w2[:, :A].T                # (A, A)
    w2b = w2[:, A:].T                # (N, A)
    b2r = b2.reshape(1, A)

    # ---- batch blocking: >= 2 parallel grid steps when possible (v7x megacore) ----
    if B >= 2:
        G = 2
        if -(-B // G) > 256:         # cap per-step block so VMEM stays modest
            G = -(-B // 256)
    else:
        G = 1
    Bblk = -(-B // G)
    Bpad = G * Bblk

    x = H.reshape(B, T * A)
    htp = ht
    if Bpad != B:
        x = jnp.pad(x, ((0, Bpad - B), (0, 0)))
        htp = jnp.pad(ht, ((0, Bpad - B), (0, 0)))
    x = x.reshape(G, Bblk, T * A)
    ht3 = htp.reshape(G, Bblk, A)

    const2 = lambda g: (0, 0)
    out = pl.pallas_call(
        _tpa_fused_kernel,
        grid=(G,),
        in_specs=[
            pl.BlockSpec((1, Bblk, T * A), lambda g: (g, 0, 0)),   # H (flat)
            pl.BlockSpec((1, Bblk, A), lambda g: (g, 0, 0)),       # ht
            pl.BlockSpec((T * A, NFp), const2),                    # dense conv weight
            pl.BlockSpec((1, NFp), const2),                        # conv bias (replicated)
            pl.BlockSpec((A, N), const2),                          # linear1 weight.T
            pl.BlockSpec((1, N), const2),                          # linear1 bias
            pl.BlockSpec((N, NFp), const2),                        # sel_jT (w -> wrep)
            pl.BlockSpec((NFp, Fp), const2),                       # sel_i  (group by i)
            pl.BlockSpec((Fp, NFp), const2),                       # sel_iT (alpha -> arep)
            pl.BlockSpec((NFp, N), const2),                        # sel_j  (group by j)
            pl.BlockSpec((A, A), const2),                          # W2[:, :A].T
            pl.BlockSpec((N, A), const2),                          # W2[:, A:].T
            pl.BlockSpec((1, A), const2),                          # linear2 bias
        ],
        out_specs=pl.BlockSpec((1, Bblk, A), lambda g: (g, 0, 0)),
        out_shape=jax.ShapeDtypeStruct((G, Bblk, A), jnp.float32),
        compiler_params=pltpu.CompilerParams(dimension_semantics=("parallel",)),
    )(x, ht3, Y, bconv, w1t, b1r, sel_jT, sel_i, sel_iT, sel_j, w2a, w2b, b2r)

    return out.reshape(Bpad, A)[:B]


# ---------------------------------------------------------------------------
# Pure-JAX reference (mirrors the PyTorch forward exactly)
# ---------------------------------------------------------------------------
def reference(H, ht, params):
    conv_w, conv_b = params["conv_w"], params["conv_b"]
    w1, b1 = params["w1"], params["b1"]
    w2, b2 = params["w2"], params["b2"]
    B, _, T, A = H.shape
    N, _, _, K = conv_w.shape
    F = A - K + 1
    Hs = H[:, 0]
    w = ht @ w1.T + b1                                     # (B, N)
    conv = jnp.zeros((B, N, F), jnp.float32) + conv_b[None, :, None]
    for k in range(K):
        conv = conv + jnp.einsum('bta,nt->bna', Hs[:, :, k:k + F], conv_w[:, 0, :, k])
    conv_vecs = jax.nn.relu(conv.reshape(B, F, N))         # .view then relu
    s = (conv_vecs * w[:, None, :]).sum(-1)                # (B, F)
    alpha = jax.nn.sigmoid(s)
    v = (alpha[:, :, None] * conv_vecs).sum(1)             # (B, N)
    concat = jnp.concatenate([ht, v], axis=1)
    return concat @ w2.T + b2


if __name__ == "__main__":
    filter_size, filter_num, attn_len, attn_size = 3, 32, 16, 32
    batch = 4

    key = jax.random.PRNGKey(0)
    ks = jax.random.split(key, 8)
    params = {
        "conv_w": 0.1 * jax.random.normal(ks[0], (filter_num, 1, attn_len, filter_size), jnp.float32),
        "conv_b": 0.1 * jax.random.normal(ks[1], (filter_num,), jnp.float32),
        "w1": 0.1 * jax.random.normal(ks[2], (filter_num, attn_size), jnp.float32),
        "b1": 0.1 * jax.random.normal(ks[3], (filter_num,), jnp.float32),
        "w2": 0.1 * jax.random.normal(ks[4], (attn_size, attn_size + filter_num), jnp.float32),
        "b2": 0.1 * jax.random.normal(ks[5], (attn_size,), jnp.float32),
    }
    H = jax.random.normal(ks[6], (batch, 1, attn_len, attn_size), jnp.float32)
    ht = jax.random.normal(ks[7], (batch, attn_size), jnp.float32)

    tpa = jax.jit(temporal_pattern_attention)
    out = jax.block_until_ready(tpa(H, ht, params))
    ref = jax.block_until_ready(reference(H, ht, params))

    assert out.shape == (batch, attn_size)
    np.testing.assert_allclose(np.asarray(out), np.asarray(ref), rtol=2e-3, atol=2e-4)
    print("KERNEL_OK")
</pallas_src>

<mosaic_0001>
module attributes {stable_mosaic.version = 11 : i64} {
  func.func @_tpa_fused_kernel(%arg0: i32, %arg1: memref<1x2x512xf32, #tpu.memory_space<vmem>>, %arg2: memref<1x2x32xf32, #tpu.memory_space<vmem>>, %arg3: memref<512x1024xf32, #tpu.memory_space<vmem>>, %arg4: memref<1x1024xf32, #tpu.memory_space<vmem>>, %arg5: memref<32x32xf32, #tpu.memory_space<vmem>>, %arg6: memref<1x32xf32, #tpu.memory_space<vmem>>, %arg7: memref<32x1024xf32, #tpu.memory_space<vmem>>, %arg8: memref<1024x32xf32, #tpu.memory_space<vmem>>, %arg9: memref<32x1024xf32, #tpu.memory_space<vmem>>, %arg10: memref<1024x32xf32, #tpu.memory_space<vmem>>, %arg11: memref<32x32xf32, #tpu.memory_space<vmem>>, %arg12: memref<32x32xf32, #tpu.memory_space<vmem>>, %arg13: memref<1x32xf32, #tpu.memory_space<vmem>>, %arg14: memref<1x2x32xf32, #tpu.memory_space<vmem>>) attributes {dimension_semantics = [#tpu.dimension_semantics<parallel>], iteration_bounds = array<i64: 2>, scalar_prefetch = 0 : i64, scratch_operands = 0 : i64, tpu.core_type = #tpu.core_type<tc>, window_params = [{transform_indices = @transform_0, window_bounds = array<i64: 1, 2, 512>}, {transform_indices = @transform_1, window_bounds = array<i64: 1, 2, 32>}, {pipeline_mode = #tpu.pipeline_mode<synchronous>, transform_indices = @transform_2, window_bounds = array<i64: 512, 1024>}, {pipeline_mode = #tpu.pipeline_mode<synchronous>, transform_indices = @transform_3, window_bounds = array<i64: 1, 1024>}, {pipeline_mode = #tpu.pipeline_mode<synchronous>, transform_indices = @transform_4, window_bounds = array<i64: 32, 32>}, {pipeline_mode = #tpu.pipeline_mode<synchronous>, transform_indices = @transform_5, window_bounds = array<i64: 1, 32>}, {pipeline_mode = #tpu.pipeline_mode<synchronous>, transform_indices = @transform_6, window_bounds = array<i64: 32, 1024>}, {pipeline_mode = #tpu.pipeline_mode<synchronous>, transform_indices = @transform_7, window_bounds = array<i64: 1024, 32>}, {pipeline_mode = #tpu.pipeline_mode<synchronous>, transform_indices = @transform_8, window_bounds = array<i64: 32, 1024>}, {pipeline_mode = #tpu.pipeline_mode<synchronous>, transform_indices = @transform_9, window_bounds = array<i64: 1024, 32>}, {pipeline_mode = #tpu.pipeline_mode<synchronous>, transform_indices = @transform_10, window_bounds = array<i64: 32, 32>}, {pipeline_mode = #tpu.pipeline_mode<synchronous>, transform_indices = @transform_11, window_bounds = array<i64: 32, 32>}, {pipeline_mode = #tpu.pipeline_mode<synchronous>, transform_indices = @transform_12, window_bounds = array<i64: 1, 32>}, {transform_indices = @transform_13, window_bounds = array<i64: 1, 2, 32>}]} {
    %c0 = arith.constant 0 : index
    %c0_0 = arith.constant 0 : index
    %c0_1 = arith.constant 0 : index
    %0 = vector.load %arg1[%c0, %c0_0, %c0_1] : memref<1x2x512xf32, #tpu.memory_space<vmem>>, vector<1x2x512xf32>
    %1 = vector.shape_cast %0 : vector<1x2x512xf32> to vector<2x512xf32>
    %c0_2 = arith.constant 0 : index
    %c0_3 = arith.constant 0 : index
    %c0_4 = arith.constant 0 : index
    %2 = vector.load %arg2[%c0_2, %c0_3, %c0_4] : memref<1x2x32xf32, #tpu.memory_space<vmem>>, vector<1x2x32xf32>
    %3 = vector.shape_cast %2 : vector<1x2x32xf32> to vector<2x32xf32>
    %c0_5 = arith.constant 0 : index
    %c0_6 = arith.constant 0 : index
    %4 = vector.load %arg5[%c0_5, %c0_6] : memref<32x32xf32, #tpu.memory_space<vmem>>, vector<32x32xf32>
    %cst = arith.constant dense<0.000000e+00> : vector<2x32xf32>
    %5 = tpu.matmul %3, %4, %cst {dimension_numbers = #tpu.dot_dimension_numbers<[1], [0], [0], [1], [0, 0, 1, 1], [], []>} : vector<2x32xf32>, vector<32x32xf32>, vector<2x32xf32> -> vector<2x32xf32>
    %c0_7 = arith.constant 0 : index
    %c0_8 = arith.constant 0 : index
    %6 = vector.load %arg6[%c0_7, %c0_8] : memref<1x32xf32, #tpu.memory_space<vmem>>, vector<1x32xf32>
    %7 = vector.broadcast %6 : vector<1x32xf32> to vector<2x32xf32>
    %8 = arith.addf %5, %7 : vector<2x32xf32>
    %c0_9 = arith.constant 0 : index
    %c0_10 = arith.constant 0 : index
    %9 = vector.load %arg3[%c0_9, %c0_10] : memref<512x1024xf32, #tpu.memory_space<vmem>>, vector<512x1024xf32>
    %cst_11 = arith.constant dense<0.000000e+00> : vector<2x1024xf32>
    %10 = tpu.matmul %1, %9, %cst_11 {dimension_numbers = #tpu.dot_dimension_numbers<[1], [0], [0], [1], [0, 0, 1, 1], [], []>} : vector<2x512xf32>, vector<512x1024xf32>, vector<2x1024xf32> -> vector<2x1024xf32>
    %c0_12 = arith.constant 0 : index
    %c0_13 = arith.constant 0 : index
    %11 = vector.load %arg4[%c0_12, %c0_13] : memref<1x1024xf32, #tpu.memory_space<vmem>>, vector<1x1024xf32>
    %12 = vector.broadcast %11 : vector<1x1024xf32> to vector<2x1024xf32>
    %13 = arith.addf %10, %12 : vector<2x1024xf32>
    %cst_14 = arith.constant 0.000000e+00 : f32
    %14 = vector.broadcast %cst_14 : f32 to vector<2x1024xf32>
    %15 = arith.maximumf %13, %14 : vector<2x1024xf32>
    %c0_15 = arith.constant 0 : index
    %c0_16 = arith.constant 0 : index
    %16 = vector.load %arg7[%c0_15, %c0_16] : memref<32x1024xf32, #tpu.memory_space<vmem>>, vector<32x1024xf32>
    %cst_17 = arith.constant dense<0.000000e+00> : vector<2x1024xf32>
    %17 = tpu.matmul %8, %16, %cst_17 {dimension_numbers = #tpu.dot_dimension_numbers<[1], [0], [0], [1], [0, 0, 1, 1], [], []>} : vector<2x32xf32>, vector<32x1024xf32>, vector<2x1024xf32> -> vector<2x1024xf32>
    %18 = arith.mulf %15, %17 : vector<2x1024xf32>
    %c0_18 = arith.constant 0 : index
    %c0_19 = arith.constant 0 : index
    %19 = vector.load %arg8[%c0_18, %c0_19] : memref<1024x32xf32, #tpu.memory_space<vmem>>, vector<1024x32xf32>
    %cst_20 = arith.constant dense<0.000000e+00> : vector<2x32xf32>
    %20 = tpu.matmul %18, %19, %cst_20 {dimension_numbers = #tpu.dot_dimension_numbers<[1], [0], [0], [1], [0, 0, 1, 1], [], []>} : vector<2x1024xf32>, vector<1024x32xf32>, vector<2x32xf32> -> vector<2x32xf32>
    %cst_21 = arith.constant 0.000000e+00 : f32
    %21 = vector.broadcast %cst_21 : f32 to vector<2x32xf32>
    %22 = arith.subf %21, %20 : vector<2x32xf32>
    %23 = math.exp %22 : vector<2x32xf32>
    %cst_22 = arith.constant 1.000000e+00 : f32
    %24 = vector.broadcast %cst_22 : f32 to vector<2x32xf32>
    %25 = arith.addf %24, %23 : vector<2x32xf32>
    %cst_23 = arith.constant 1.000000e+00 : f32
    %26 = vector.broadcast %cst_23 : f32 to vector<2x32xf32>
    %27 = arith.divf %26, %25 : vector<2x32xf32>
    %c0_24 = arith.constant 0 : index
    %c0_25 = arith.constant 0 : index
    %28 = vector.load %arg9[%c0_24, %c0_25] : memref<32x1024xf32, #tpu.memory_space<vmem>>, vector<32x1024xf32>
    %cst_26 = arith.constant dense<0.000000e+00> : vector<2x1024xf32>
    %29 = tpu.matmul %27, %28, %cst_26 {dimension_numbers = #tpu.dot_dimension_numbers<[1], [0], [0], [1], [0, 0, 1, 1], [], []>} : vector<2x32xf32>, vector<32x1024xf32>, vector<2x1024xf32> -> vector<2x1024xf32>
    %30 = arith.mulf %15, %29 : vector<2x1024xf32>
    %c0_27 = arith.constant 0 : index
    %c0_28 = arith.constant 0 : index
    %31 = vector.load %arg10[%c0_27, %c0_28] : memref<1024x32xf32, #tpu.memory_space<vmem>>, vector<1024x32xf32>
    %cst_29 = arith.constant dense<0.000000e+00> : vector<2x32xf32>
    %32 = tpu.matmul %30, %31, %cst_29 {dimension_numbers = #tpu.dot_dimension_numbers<[1], [0], [0], [1], [0, 0, 1, 1], [], []>} : vector<2x1024xf32>, vector<1024x32xf32>, vector<2x32xf32> -> vector<2x32xf32>
    %c0_30 = arith.constant 0 : index
    %c0_31 = arith.constant 0 : index
    %33 = vector.load %arg11[%c0_30, %c0_31] : memref<32x32xf32, #tpu.memory_space<vmem>>, vector<32x32xf32>
    %cst_32 = arith.constant dense<0.000000e+00> : vector<2x32xf32>
    %34 = tpu.matmul %3, %33, %cst_32 {dimension_numbers = #tpu.dot_dimension_numbers<[1], [0], [0], [1], [0, 0, 1, 1], [], []>} : vector<2x32xf32>, vector<32x32xf32>, vector<2x32xf32> -> vector<2x32xf32>
    %c0_33 = arith.constant 0 : index
    %c0_34 = arith.constant 0 : index
    %35 = vector.load %arg12[%c0_33, %c0_34] : memref<32x32xf32, #tpu.memory_space<vmem>>, vector<32x32xf32>
    %cst_35 = arith.constant dense<0.000000e+00> : vector<2x32xf32>
    %36 = tpu.matmul %32, %35, %cst_35 {dimension_numbers = #tpu.dot_dimension_numbers<[1], [0], [0], [1], [0, 0, 1, 1], [], []>} : vector<2x32xf32>, vector<32x32xf32>, vector<2x32xf32> -> vector<2x32xf32>
    %37 = arith.addf %34, %36 : vector<2x32xf32>
    %c0_36 = arith.constant 0 : index
    %c0_37 = arith.constant 0 : index
    %38 = vector.load %arg13[%c0_36, %c0_37] : memref<1x32xf32, #tpu.memory_space<vmem>>, vector<1x32xf32>
    %39 = vector.broadcast %38 : vector<1x32xf32> to vector<2x32xf32>
    %40 = arith.addf %37, %39 : vector<2x32xf32>
    %c0_38 = arith.constant 0 : index
    %c0_39 = arith.constant 0 : index
    %c0_40 = arith.constant 0 : index
    %41 = vector.load %arg14[%c0_38, %c0_39, %c0_40] : memref<1x2x32xf32, #tpu.memory_space<vmem>>, vector<1x2x32xf32>
    %42 = vector.shape_cast %41 : vector<1x2x32xf32> to vector<2x32xf32>
    %43 = vector.shape_cast %40 : vector<2x32xf32> to vector<1x2x32xf32>
    tpu.vector_store %arg14[%c0_38, %c0_39, %c0_40], %43 {strides = array<i32>} : memref<1x2x32xf32, #tpu.memory_space<vmem>>, vector<1x2x32xf32>,
    return
  }
  func.func @transform_0(%arg0: i32) -> (i32, i32, i32) {
    %c0_i32 = arith.constant 0 : i32
    %c0_i32_0 = arith.constant 0 : i32
    %c0_i32_1 = arith.constant 0 : i32
    return %arg0, %c0_i32, %c0_i32_0 : i32, i32, i32
  }
  func.func @transform_1(%arg0: i32) -> (i32, i32, i32) {
    %c0_i32 = arith.constant 0 : i32
    %c0_i32_0 = arith.constant 0 : i32
    %c0_i32_1 = arith.constant 0 : i32
    return %arg0, %c0_i32, %c0_i32_0 : i32, i32, i32
  }
  func.func @transform_2(%arg0: i32) -> (i32, i32) {
    %c0_i32 = arith.constant 0 : i32
    %c0_i32_0 = arith.constant 0 : i32
    %c0_i32_1 = arith.constant 0 : i32
    return %c0_i32, %c0_i32_0 : i32, i32
  }
  func.func @transform_3(%arg0: i32) -> (i32, i32) {
    %c0_i32 = arith.constant 0 : i32
    %c0_i32_0 = arith.constant 0 : i32
    %c0_i32_1 = arith.constant 0 : i32
    return %c0_i32, %c0_i32_0 : i32, i32
  }
  func.func @transform_4(%arg0: i32) -> (i32, i32) {
    %c0_i32 = arith.constant 0 : i32
    %c0_i32_0 = arith.constant 0 : i32
    %c0_i32_1 = arith.constant 0 : i32
    return %c0_i32, %c0_i32_0 : i32, i32
  }
  func.func @transform_5(%arg0: i32) -> (i32, i32) {
    %c0_i32 = arith.constant 0 : i32
    %c0_i32_0 = arith.constant 0 : i32
    %c0_i32_1 = arith.constant 0 : i32
    return %c0_i32, %c0_i32_0 : i32, i32
  }
  func.func @transform_6(%arg0: i32) -> (i32, i32) {
    %c0_i32 = arith.constant 0 : i32
    %c0_i32_0 = arith.constant 0 : i32
    %c0_i32_1 = arith.constant 0 : i32
    return %c0_i32, %c0_i32_0 : i32, i32
  }
  func.func @transform_7(%arg0: i32) -> (i32, i32) {
    %c0_i32 = arith.constant 0 : i32
    %c0_i32_0 = arith.constant 0 : i32
    %c0_i32_1 = arith.constant 0 : i32
    return %c0_i32, %c0_i32_0 : i32, i32
  }
  func.func @transform_8(%arg0: i32) -> (i32, i32) {
    %c0_i32 = arith.constant 0 : i32
    %c0_i32_0 = arith.constant 0 : i32
    %c0_i32_1 = arith.constant 0 : i32
    return %c0_i32, %c0_i32_0 : i32, i32
  }
  func.func @transform_9(%arg0: i32) -> (i32, i32) {
    %c0_i32 = arith.constant 0 : i32
    %c0_i32_0 = arith.constant 0 : i32
    %c0_i32_1 = arith.constant 0 : i32
    return %c0_i32, %c0_i32_0 : i32, i32
  }
  func.func @transform_10(%arg0: i32) -> (i32, i32) {
    %c0_i32 = arith.constant 0 : i32
    %c0_i32_0 = arith.constant 0 : i32
    %c0_i32_1 = arith.constant 0 : i32
    return %c0_i32, %c0_i32_0 : i32, i32
  }
  func.func @transform_11(%arg0: i32) -> (i32, i32) {
    %c0_i32 = arith.constant 0 : i32
    %c0_i32_0 = arith.constant 0 : i32
    %c0_i32_1 = arith.constant 0 : i32
    return %c0_i32, %c0_i32_0 : i32, i32
  }
  func.func @transform_12(%arg0: i32) -> (i32, i32) {
    %c0_i32 = arith.constant 0 : i32
    %c0_i32_0 = arith.constant 0 : i32
    %c0_i32_1 = arith.constant 0 : i32
    return %c0_i32, %c0_i32_0 : i32, i32
  }
  func.func @transform_13(%arg0: i32) -> (i32, i32, i32) {
    %c0_i32 = arith.constant 0 : i32
    %c0_i32_0 = arith.constant 0 : i32
    %c0_i32_1 = arith.constant 0 : i32
    return %arg0, %c0_i32, %c0_i32_0 : i32, i32, i32
  }
}

</mosaic_0001>

<llo_original>
// kernel: temporal_pattern_attention.1
$region0: #{temporal_pattern_attention.1}
  #allocation0 [shape = 'u32[]', space=smem, size = 0x4, offset = 0x4, fixed_abs, tag = 'smem constant byte address 0x4 - core index']
  #allocation1 [shape = 'u32[144,128]{1,0:T(1,128)}', space=vmem, size = 0x12000, scoped, tag = 'internal scratch']
  %s0 = inlined_call_operand.vmem [shape: f32[2,2,512], index: 0, kind: input, shape index: {}]
  %s1 = inlined_call_operand.vmem [shape: f32[2,2,32], index: 1, kind: input, shape index: {}]
  %s2 = inlined_call_operand.vmem [shape: f32[512,1024], index: 2, kind: input, shape index: {}]
  %s3 = inlined_call_operand.vmem [shape: f32[1,1024], index: 3, kind: input, shape index: {}]
  %s4 = inlined_call_operand.vmem [shape: f32[32,32], index: 4, kind: input, shape index: {}]
  %s5 = inlined_call_operand.vmem [shape: f32[1,32], index: 5, kind: input, shape index: {}]
  %s6 = inlined_call_operand.vmem [shape: f32[32,1024], index: 6, kind: input, shape index: {}]
  %s7 = inlined_call_operand.vmem [shape: f32[1024,32], index: 7, kind: input, shape index: {}]
  %s8 = inlined_call_operand.vmem [shape: f32[32,1024], index: 8, kind: input, shape index: {}]
  %s9 = inlined_call_operand.vmem [shape: f32[1024,32], index: 9, kind: input, shape index: {}]
  %s10 = inlined_call_operand.vmem [shape: f32[32,32], index: 10, kind: input, shape index: {}]
  %s11 = inlined_call_operand.vmem [shape: f32[32,32], index: 11, kind: input, shape index: {}]
  %s12 = inlined_call_operand.vmem [shape: f32[1,32], index: 12, kind: input, shape index: {}]
  %s13 = inlined_call_operand.hbm [shape: f32[2,2,32], index: 13, kind: output, shape index: {}]
  %s14 = sld [smem:[#allocation0]]
  $region85: #{temporal_pattern_attention.1} parent=0
    _
  %s16 = ssub.s32 1, %s14
  %s17 = scalar_select 0, %s16, %s14
  $region1: #{temporal_pattern_attention.1} parent=0
    #allocation2 [shape = 'u8[2048]{0}', space=vmem, size = 0x800, scoped, tag = 'output window, operand 0']
    #allocation3 [shape = 's32[2]{0}', space=sflag, size = 0x8, scoped, tag = 'scoped memory for temporal_pattern_attention.1']
    %18 = vsyncpa [#allocation3], 0
    %s19 = scalar_lea.sflag [#allocation3], 1
    %20 = vsyncpa %s19, 0
    loop: start=0, step=1, limit=4
    $region2: #{temporal_pattern_attention.1} parent=1 // loop_pre_header
      _
    $region3: #{temporal_pattern_attention.1} parent=1 // loop_header
      %s22 = sphi 0, %s26
      %p23 = scmp.ge.s32.totalorder %s22, 4
      %s32 = sphi 0, %s34
      %s35 = sphi 0, %s32
      %s36 = sphi 0, %s35
      %s52 = sphi 0, %s36
      %s58 = sphi 0, %s60
      %s61 = sphi 0, %s58
      %s62 = sphi 0, %s61
      %s78 = sphi 0, %s62
      %s82 = sphi 0, %s82
      %s84 = sphi 0, %s82
      %s85 = sphi 0, %s84
      %s99 = sphi 0, %s85
      %s103 = sphi 0, %s103
      %s105 = sphi 0, %s103
      %s106 = sphi 0, %s105
      %s120 = sphi 0, %s106
      %s124 = sphi 0, %s124
      %s126 = sphi 0, %s124
      %s127 = sphi 0, %s126
      %s141 = sphi 0, %s127
      %s145 = sphi 0, %s145
      %s147 = sphi 0, %s145
      %s148 = sphi 0, %s147
      %s162 = sphi 0, %s148
      %s166 = sphi 0, %s166
      %s168 = sphi 0, %s166
      %s169 = sphi 0, %s168
      %s183 = sphi 0, %s169
      %s187 = sphi 0, %s187
      %s189 = sphi 0, %s187
      %s190 = sphi 0, %s189
      %s204 = sphi 0, %s190
      %s208 = sphi 0, %s208
      %s210 = sphi 0, %s208
      %s211 = sphi 0, %s210
      %s225 = sphi 0, %s211
      %s229 = sphi 0, %s229
      %s231 = sphi 0, %s229
      %s232 = sphi 0, %s231
      %s246 = sphi 0, %s232
      %s250 = sphi 0, %s250
      %s252 = sphi 0, %s250
      %s253 = sphi 0, %s252
      %s267 = sphi 0, %s253
      %s271 = sphi 0, %s271
      %s273 = sphi 0, %s271
      %s274 = sphi 0, %s273
      %s288 = sphi 0, %s274
      %s292 = sphi 0, %s292
      %s294 = sphi 0, %s292
      %s295 = sphi 0, %s294
      %s309 = sphi 0, %s295
      %s315 = sphi 0, %s317
      %s318 = sphi 0, %s315
      %s319 = sphi 0, %s318
      %s335 = sphi 0, %s319
    $region4: #{temporal_pattern_attention.1} parent=1 // loop_header_branch
      %25 = sbr.rel (%p23) target = $region8
    $region5: #{temporal_pattern_attention.1} parent=1 // loop_body
      %s27 = ssub.s32 %s22, 1
      %s28 = ssub.s32 %s22, 2
      %s29 = sadd.s32 %s22, 1
      %s30 = ssub.s32 %s22, %s29
      %p31 = scmp.eq.s32.totalorder %s30, 0
      %s33 = sadd.s32 %s32, 1
      %s34 = scalar_select %p31, %s32, %s33
      %p37 = pneg %p31
      %p38 = scmp.eq.s32.totalorder %s22, 1
      %p39 = por %p37, %p38
      %p40 = scmp.ne.s32.totalorder %s32, %s35
      %p41 = scmp.eq.s32.totalorder %s22, 0
      %p42 = por %p40, %p41
      %p43 = scmp.ne.s32.totalorder %s32, %s35
      %p44 = scmp.eq.s32.totalorder %s27, 1
      %p45 = por %p43, %p44
      %p46 = scmp.ne.s32.totalorder %s35, %s36
      %p47 = scmp.eq.s32.totalorder %s27, 0
      %p48 = por %p46, %p47
      %p49 = scmp.ne.s32.totalorder %s35, %s36
      %p50 = scmp.eq.s32.totalorder %s28, 1
      %p51 = por %p49, %p50
      %p53 = scmp.ne.s32.totalorder %s36, %s52
      %p54 = scmp.eq.s32.totalorder %s28, 0
      %p55 = por %p53, %p54
      %s56 = ssub.s32 %s22, %s29
      %p57 = scmp.eq.s32.totalorder %s56, 0
      %s59 = sadd.s32 %s58, 1
      %s60 = scalar_select %p57, %s58, %s59
      %p63 = pneg %p57
      %p64 = scmp.eq.s32.totalorder %s22, 1
      %p65 = por %p63, %p64
      %p66 = scmp.ne.s32.totalorder %s58, %s61
      %p67 = scmp.eq.s32.totalorder %s22, 0
      %p68 = por %p66, %p67
      %p69 = scmp.ne.s32.totalorder %s58, %s61
      %p70 = scmp.eq.s32.totalorder %s27, 1
      %p71 = por %p69, %p70
      %p72 = scmp.ne.s32.totalorder %s61, %s62
      %p73 = scmp.eq.s32.totalorder %s27, 0
      %p74 = por %p72, %p73
      %p75 = scmp.ne.s32.totalorder %s61, %s62
      %p76 = scmp.eq.s32.totalorder %s28, 1
      %p77 = por %p75, %p76
      %p79 = scmp.ne.s32.totalorder %s62, %s78
      %p80 = scmp.eq.s32.totalorder %s28, 0
      %p81 = por %p79, %p80
      %s83 = sadd.s32 %s82, 1
      %p86 = scmp.eq.s32.totalorder %s22, 1
      %p87 = scmp.ne.s32.totalorder %s82, %s84
      %p88 = scmp.eq.s32.totalorder %s22, 0
      %p89 = por %p87, %p88
      %p90 = scmp.ne.s32.totalorder %s82, %s84
      %p91 = scmp.eq.s32.totalorder %s27, 1
      %p92 = por %p90, %p91
      %p93 = scmp.ne.s32.totalorder %s84, %s85
      %p94 = scmp.eq.s32.totalorder %s27, 0
      %p95 = por %p93, %p94
      %p96 = scmp.ne.s32.totalorder %s84, %s85
      %p97 = scmp.eq.s32.totalorder %s28, 1
      %p98 = por %p96, %p97
      %p100 = scmp.ne.s32.totalorder %s85, %s99
      %p101 = scmp.eq.s32.totalorder %s28, 0
      %p102 = por %p100, %p101
      %s104 = sadd.s32 %s103, 1
      %p107 = scmp.eq.s32.totalorder %s22, 1
      %p108 = scmp.ne.s32.totalorder %s103, %s105
      %p109 = scmp.eq.s32.totalorder %s22, 0
      %p110 = por %p108, %p109
      %p111 = scmp.ne.s32.totalorder %s103, %s105
      %p112 = scmp.eq.s32.totalorder %s27, 1
      %p113 = por %p111, %p112
      %p114 = scmp.ne.s32.totalorder %s105, %s106
      %p115 = scmp.eq.s32.totalorder %s27, 0
      %p116 = por %p114, %p115
      %p117 = scmp.ne.s32.totalorder %s105, %s106
      %p118 = scmp.eq.s32.totalorder %s28, 1
      %p119 = por %p117, %p118
      %p121 = scmp.ne.s32.totalorder %s106, %s120
      %p122 = scmp.eq.s32.totalorder %s28, 0
      %p123 = por %p121, %p122
      %s125 = sadd.s32 %s124, 1
      %p128 = scmp.eq.s32.totalorder %s22, 1
      %p129 = scmp.ne.s32.totalorder %s124, %s126
      %p130 = scmp.eq.s32.totalorder %s22, 0
      %p131 = por %p129, %p130
      %p132 = scmp.ne.s32.totalorder %s124, %s126
      %p133 = scmp.eq.s32.totalorder %s27, 1
      %p134 = por %p132, %p133
      %p135 = scmp.ne.s32.totalorder %s126, %s127
      %p136 = scmp.eq.s32.totalorder %s27, 0
      %p137 = por %p135, %p136
      %p138 = scmp.ne.s32.totalorder %s126, %s127
      %p139 = scmp.eq.s32.totalorder %s28, 1
      %p140 = por %p138, %p139
      %p142 = scmp.ne.s32.totalorder %s127, %s141
      %p143 = scmp.eq.s32.totalorder %s28, 0
      %p144 = por %p142, %p143
      %s146 = sadd.s32 %s145, 1
      %p149 = scmp.eq.s32.totalorder %s22, 1
      %p150 = scmp.ne.s32.totalorder %s145, %s147
      %p151 = scmp.eq.s32.totalorder %s22, 0
      %p152 = por %p150, %p151
      %p153 = scmp.ne.s32.totalorder %s145, %s147
      %p154 = scmp.eq.s32.totalorder %s27, 1
      %p155 = por %p153, %p154
      %p156 = scmp.ne.s32.totalorder %s147, %s148
      %p157 = scmp.eq.s32.totalorder %s27, 0
      %p158 = por %p156, %p157
      %p159 = scmp.ne.s32.totalorder %s147, %s148
      %p160 = scmp.eq.s32.totalorder %s28, 1
      %p161 = por %p159, %p160
      %p163 = scmp.ne.s32.totalorder %s148, %s162
      %p164 = scmp.eq.s32.totalorder %s28, 0
      %p165 = por %p163, %p164
      %s167 = sadd.s32 %s166, 1
      %p170 = scmp.eq.s32.totalorder %s22, 1
      %p171 = scmp.ne.s32.totalorder %s166, %s168
      %p172 = scmp.eq.s32.totalorder %s22, 0
      %p173 = por %p171, %p172
      %p174 = scmp.ne.s32.totalorder %s166, %s168
      %p175 = scmp.eq.s32.totalorder %s27, 1
      %p176 = por %p174, %p175
      %p177 = scmp.ne.s32.totalorder %s168, %s169
      %p178 = scmp.eq.s32.totalorder %s27, 0
      %p179 = por %p177, %p178
      %p180 = scmp.ne.s32.totalorder %s168, %s169
      %p181 = scmp.eq.s32.totalorder %s28, 1
      %p182 = por %p180, %p181
      %p184 = scmp.ne.s32.totalorder %s169, %s183
      %p185 = scmp.eq.s32.totalorder %s28, 0
      %p186 = por %p184, %p185
      %s188 = sadd.s32 %s187, 1
      %p191 = scmp.eq.s32.totalorder %s22, 1
      %p192 = scmp.ne.s32.totalorder %s187, %s189
      %p193 = scmp.eq.s32.totalorder %s22, 0
      %p194 = por %p192, %p193
      %p195 = scmp.ne.s32.totalorder %s187, %s189
      %p196 = scmp.eq.s32.totalorder %s27, 1
      %p197 = por %p195, %p196
      %p198 = scmp.ne.s32.totalorder %s189, %s190
      %p199 = scmp.eq.s32.totalorder %s27, 0
      %p200 = por %p198, %p199
      %p201 = scmp.ne.s32.totalorder %s189, %s190
      %p202 = scmp.eq.s32.totalorder %s28, 1
      %p203 = por %p201, %p202
      %p205 = scmp.ne.s32.totalorder %s190, %s204
      %p206 = scmp.eq.s32.totalorder %s28, 0
      %p207 = por %p205, %p206
      %s209 = sadd.s32 %s208, 1
      %p212 = scmp.eq.s32.totalorder %s22, 1
      %p213 = scmp.ne.s32.totalorder %s208, %s210
      %p214 = scmp.eq.s32.totalorder %s22, 0
      %p215 = por %p213, %p214
      %p216 = scmp.ne.s32.totalorder %s208, %s210
      %p217 = scmp.eq.s32.totalorder %s27, 1
      %p218 = por %p216, %p217
      %p219 = scmp.ne.s32.totalorder %s210, %s211
      %p220 = scmp.eq.s32.totalorder %s27, 0
      %p221 = por %p219, %p220
      %p222 = scmp.ne.s32.totalorder %s210, %s211
      %p223 = scmp.eq.s32.totalorder %s28, 1
      %p224 = por %p222, %p223
      %p226 = scmp.ne.s32.totalorder %s211, %s225
      %p227 = scmp.eq.s32.totalorder %s28, 0
      %p228 = por %p226, %p227
      %s230 = sadd.s32 %s229, 1
      %p233 = scmp.eq.s32.totalorder %s22, 1
      %p234 = scmp.ne.s32.totalorder %s229, %s231
      %p235 = scmp.eq.s32.totalorder %s22, 0
      %p236 = por %p234, %p235
      %p237 = scmp.ne.s32.totalorder %s229, %s231
      %p238 = scmp.eq.s32.totalorder %s27, 1
      %p239 = por %p237, %p238
      %p240 = scmp.ne.s32.totalorder %s231, %s232
      %p241 = scmp.eq.s32.totalorder %s27, 0
      %p242 = por %p240, %p241
      %p243 = scmp.ne.s32.totalorder %s231, %s232
      %p244 = scmp.eq.s32.totalorder %s28, 1
      %p245 = por %p243, %p244
      %p247 = scmp.ne.s32.totalorder %s232, %s246
      %p248 = scmp.eq.s32.totalorder %s28, 0
      %p249 = por %p247, %p248
      %s251 = sadd.s32 %s250, 1
      %p254 = scmp.eq.s32.totalorder %s22, 1
      %p255 = scmp.ne.s32.totalorder %s250, %s252
      %p256 = scmp.eq.s32.totalorder %s22, 0
      %p257 = por %p255, %p256
      %p258 = scmp.ne.s32.totalorder %s250, %s252
      %p259 = scmp.eq.s32.totalorder %s27, 1
      %p260 = por %p258, %p259
      %p261 = scmp.ne.s32.totalorder %s252, %s253
      %p262 = scmp.eq.s32.totalorder %s27, 0
      %p263 = por %p261, %p262
      %p264 = scmp.ne.s32.totalorder %s252, %s253
      %p265 = scmp.eq.s32.totalorder %s28, 1
      %p266 = por %p264, %p265
      %p268 = scmp.ne.s32.totalorder %s253, %s267
      %p269 = scmp.eq.s32.totalorder %s28, 0
      %p270 = por %p268, %p269
      %s272 = sadd.s32 %s271, 1
      %p275 = scmp.eq.s32.totalorder %s22, 1
      %p276 = scmp.ne.s32.totalorder %s271, %s273
      %p277 = scmp.eq.s32.totalorder %s22, 0
      %p278 = por %p276, %p277
      %p279 = scmp.ne.s32.totalorder %s271, %s273
      %p280 = scmp.eq.s32.totalorder %s27, 1
      %p281 = por %p279, %p280
      %p282 = scmp.ne.s32.totalorder %s273, %s274
      %p283 = scmp.eq.s32.totalorder %s27, 0
      %p284 = por %p282, %p283
      %p285 = scmp.ne.s32.totalorder %s273, %s274
      %p286 = scmp.eq.s32.totalorder %s28, 1
      %p287 = por %p285, %p286
      %p289 = scmp.ne.s32.totalorder %s274, %s288
      %p290 = scmp.eq.s32.totalorder %s28, 0
      %p291 = por %p289, %p290
      %s293 = sadd.s32 %s292, 1
      %p296 = scmp.eq.s32.totalorder %s22, 1
      %p297 = scmp.ne.s32.totalorder %s292, %s294
      %p298 = scmp.eq.s32.totalorder %s22, 0
      %p299 = por %p297, %p298
      %p300 = scmp.ne.s32.totalorder %s292, %s294
      %p301 = scmp.eq.s32.totalorder %s27, 1
      %p302 = por %p300, %p301
      %p303 = scmp.ne.s32.totalorder %s294, %s295
      %p304 = scmp.eq.s32.totalorder %s27, 0
      %p305 = por %p303, %p304
      %p306 = scmp.ne.s32.totalorder %s294, %s295
      %p307 = scmp.eq.s32.totalorder %s28, 1
      %p308 = por %p306, %p307
      %p310 = scmp.ne.s32.totalorder %s295, %s309
      %p311 = scmp.eq.s32.totalorder %s28, 0
      %p312 = por %p310, %p311
      %s313 = ssub.s32 %s22, %s29
      %p314 = scmp.eq.s32.totalorder %s313, 0
      %s316 = sadd.s32 %s315, 1
      %s317 = scalar_select %p314, %s315, %s316
      %p320 = pneg %p314
      %p321 = scmp.eq.s32.totalorder %s22, 1
      %p322 = por %p320, %p321
      %p323 = scmp.ne.s32.totalorder %s315, %s318
      %p324 = scmp.eq.s32.totalorder %s22, 0
      %p325 = por %p323, %p324
      %p326 = scmp.ne.s32.totalorder %s315, %s318
      %p327 = scmp.eq.s32.totalorder %s27, 1
      %p328 = por %p326, %p327
      %p329 = scmp.ne.s32.totalorder %s318, %s319
      %p330 = scmp.eq.s32.totalorder %s27, 0
      %p331 = por %p329, %p330
      %p332 = scmp.ne.s32.totalorder %s318, %s319
      %p333 = scmp.eq.s32.totalorder %s28, 1
      %p334 = por %p332, %p333
      %p336 = scmp.ne.s32.totalorder %s319, %s335
      %p337 = scmp.eq.s32.totalorder %s28, 0
      %p338 = por %p336, %p337
      %p339 = scmp.le.s32.totalorder 1, %s22
      %p340 = scmp.lt.s32.totalorder %s22, 3
      %p341 = pnand %p339, %p340
      %p342 = pneg %p341
      // Predicated region
      $region9: #{temporal_pattern_attention.1} parent=5 // pred_check
        _
      $region10: #{temporal_pattern_attention.1} parent=5 // pred_check_branch
        %344 = sbr.rel (%p341) target = $region12
      $region11: #{temporal_pattern_attention.1} parent=5 // pred_region
        %s345 = ssub.s32 %s22, 1
        // Predicated region
        $region13: #{temporal_pattern_attention.1} parent=11 // pred_check
          %p346 = pneg %p95
        $region14: #{temporal_pattern_attention.1} parent=11 // pred_check_branch
          %348 = sbr.rel (%p346) target = $region16
        $region15: #{temporal_pattern_attention.1} parent=11 // pred_region
          _
        $region16: #{temporal_pattern_attention.1} parent=11 // pred_fallthru
          _
        // Predicated region
        $region17: #{temporal_pattern_attention.1} parent=11 // pred_check
          %p349 = pneg %p116
        $region18: #{temporal_pattern_attention.1} parent=11 // pred_check_branch
          %351 = sbr.rel (%p349) target = $region20
        $region19: #{temporal_pattern_attention.1} parent=11 // pred_region
          _
        $region20: #{temporal_pattern_attention.1} parent=11 // pred_fallthru
          _
        // Predicated region
        $region21: #{temporal_pattern_attention.1} parent=11 // pred_check
          %p352 = pneg %p137
        $region22: #{temporal_pattern_attention.1} parent=11 // pred_check_branch
          %354 = sbr.rel (%p352) target = $region24
        $region23: #{temporal_pattern_attention.1} parent=11 // pred_region
          _
        $region24: #{temporal_pattern_attention.1} parent=11 // pred_fallthru
          _
        // Predicated region
        $region25: #{temporal_pattern_attention.1} parent=11 // pred_check
          %p355 = pneg %p158
        $region26: #{temporal_pattern_attention.1} parent=11 // pred_check_branch
          %357 = sbr.rel (%p355) target = $region28
        $region27: #{temporal_pattern_attention.1} parent=11 // pred_region
          _
        $region28: #{temporal_pattern_attention.1} parent=11 // pred_fallthru
          _
        // Predicated region
        $region29: #{temporal_pattern_attention.1} parent=11 // pred_check
          %p358 = pneg %p179
        $region30: #{temporal_pattern_attention.1} parent=11 // pred_check_branch
          %360 = sbr.rel (%p358) target = $region32
        $region31: #{temporal_pattern_attention.1} parent=11 // pred_region
          _
        $region32: #{temporal_pattern_attention.1} parent=11 // pred_fallthru
          _
        // Predicated region
        $region33: #{temporal_pattern_attention.1} parent=11 // pred_check
          %p361 = pneg %p200
        $region34: #{temporal_pattern_attention.1} parent=11 // pred_check_branch
          %363 = sbr.rel (%p361) target = $region36
        $region35: #{temporal_pattern_attention.1} parent=11 // pred_region
          _
        $region36: #{temporal_pattern_attention.1} parent=11 // pred_fallthru
          _
        // Predicated region
        $region37: #{temporal_pattern_attention.1} parent=11 // pred_check
          %p364 = pneg %p221
        $region38: #{temporal_pattern_attention.1} parent=11 // pred_check_branch
          %366 = sbr.rel (%p364) target = $region40
        $region39: #{temporal_pattern_attention.1} parent=11 // pred_region
          _
        $region40: #{temporal_pattern_attention.1} parent=11 // pred_fallthru
          _
        // Predicated region
        $region41: #{temporal_pattern_attention.1} parent=11 // pred_check
          %p367 = pneg %p242
        $region42: #{temporal_pattern_attention.1} parent=11 // pred_check_branch
          %369 = sbr.rel (%p367) target = $region44
        $region43: #{temporal_pattern_attention.1} parent=11 // pred_region
          _
        $region44: #{temporal_pattern_attention.1} parent=11 // pred_fallthru
          _
        // Predicated region
        $region45: #{temporal_pattern_attention.1} parent=11 // pred_check
          %p370 = pneg %p263
        $region46: #{temporal_pattern_attention.1} parent=11 // pred_check_branch
          %372 = sbr.rel (%p370) target = $region48
        $region47: #{temporal_pattern_attention.1} parent=11 // pred_region
          _
        $region48: #{temporal_pattern_attention.1} parent=11 // pred_fallthru
          _
        // Predicated region
        $region49: #{temporal_pattern_attention.1} parent=11 // pred_check
          %p373 = pneg %p284
        $region50: #{temporal_pattern_attention.1} parent=11 // pred_check_branch
          %375 = sbr.rel (%p373) target = $region52
        $region51: #{temporal_pattern_attention.1} parent=11 // pred_region
          _
        $region52: #{temporal_pattern_attention.1} parent=11 // pred_fallthru
          _
        // Predicated region
        $region53: #{temporal_pattern_attention.1} parent=11 // pred_check
          %p376 = pneg %p305
        $region54: #{temporal_pattern_attention.1} parent=11 // pred_check_branch
          %378 = sbr.rel (%p376) target = $region56
        $region55: #{temporal_pattern_attention.1} parent=11 // pred_region
          _
        $region56: #{temporal_pattern_attention.1} parent=11 // pred_fallthru
          _
      $region12: #{temporal_pattern_attention.1} parent=5 // pred_fallthru
        _
      %p379 = scmp.lt.s32.totalorder %s22, 2
      // Predicated region
      $region57: #{temporal_pattern_attention.1} parent=5 // pred_check
        %p380 = pneg %p379
      $region58: #{temporal_pattern_attention.1} parent=5 // pred_check_branch
        %382 = sbr.rel (%p380) target = $region60
      $region59: #{temporal_pattern_attention.1} parent=5 // pred_region
        // Predicated region
        $region61: #{temporal_pattern_attention.1} parent=59 // pred_check
          %p383 = pneg %p42
        $region62: #{temporal_pattern_attention.1} parent=59 // pred_check_branch
          %385 = sbr.rel (%p383) target = $region64
        $region63: #{temporal_pattern_attention.1} parent=59 // pred_region
          %p386 = scmp.lt.s32.totalorder %s22, 1
          %s387 = scalar_select %p386, %s22, 1
          %s388 = smul.addr %s387, 4
          %s389 = smul.addr %s388, 2
          %s390 = scalar_lea.vmem %s0, %s389
        $region64: #{temporal_pattern_attention.1} parent=59 // pred_fallthru
          _
        // Predicated region
        $region65: #{temporal_pattern_attention.1} parent=59 // pred_check
          %p391 = pneg %p68
        $region66: #{temporal_pattern_attention.1} parent=59 // pred_check_branch
          %393 = sbr.rel (%p391) target = $region68
        $region67: #{temporal_pattern_attention.1} parent=59 // pred_region
          %p394 = scmp.lt.s32.totalorder %s22, 1
          %s395 = scalar_select %p394, %s22, 1
          %s396 = smul.addr %s395, 2
          %s397 = scalar_lea.vmem %s1, %s396
        $region68: #{temporal_pattern_attention.1} parent=59 // pred_fallthru
          _
      $region60: #{temporal_pattern_attention.1} parent=5 // pred_fallthru
        _
      %p398 = scmp.le.s32.totalorder 1, %s22
      %p399 = scmp.lt.s32.totalorder %s22, 3
      %p400 = pnand %p398, %p399
      %p401 = pneg %p400
      // Predicated region
      $region69: #{temporal_pattern_attention.1} parent=5 // pred_check
        _
      $region70: #{temporal_pattern_attention.1} parent=5 // pred_check_branch
        %403 = sbr.rel (%p400) target = $region72
      $region71: #{temporal_pattern_attention.1} parent=5 // pred_region
        %s404 = ssub.s32 %s22, 1
        %p405 = scmp.lt.s32.totalorder %s27, 1
        %s406 = scalar_select %p405, %s27, 1
        %s407 = smul.addr %s406, 4
        %s408 = smul.addr %s407, 2
        %s409 = scalar_lea.vmem %s0, %s408
        %p410 = pneg %p48
        %p411 = pneg %p45
        %p412 = scmp.lt.s32.totalorder %s27, 1
        %s413 = scalar_select %p412, %s27, 1
        %s414 = smul.addr %s413, 2
        %s415 = scalar_lea.vmem %s1, %s414
        %p416 = pneg %p74
        %p417 = pneg %p71
        %p418 = pneg %p95
        %p419 = pneg %p92
        %p420 = pneg %p116
        %p421 = pneg %p113
        %p422 = pneg %p137
        %p423 = pneg %p134
        %p424 = pneg %p158
        %p425 = pneg %p155
        %p426 = pneg %p179
        %p427 = pneg %p176
        %p428 = pneg %p200
        %p429 = pneg %p197
        %p430 = pneg %p221
        %p431 = pneg %p218
        %p432 = pneg %p242
        %p433 = pneg %p239
        %p434 = pneg %p263
        %p435 = pneg %p260
        %p436 = pneg %p284
        %p437 = pneg %p281
        %p438 = pneg %p305
        %p439 = pneg %p302
        %p440 = pneg %p331
        %p441 = pneg %p328
        %s442 = sand.u32 %s318, 1
        %s443 = scalar_lea.sflag [#allocation3], %s442
        %s444 = sand.u32 %s318, 1
        %s445 = smul.addr %s444, 2
        %s446 = scalar_lea.vmem [#allocation2], %s445
        %p447 = scmp.lt.s32.totalorder %s27, 1
        %s448 = scalar_select %p447, %s27, 1
        %s449 = smul.addr %s448, 4
        %s450 = smul.addr %s449, 2
        %s451 = scalar_lea.vmem %s0, %s450
        %p452 = scmp.lt.s32.totalorder %s27, 1
        %s453 = scalar_select %p452, %s27, 1
        %s454 = smul.addr %s453, 2
        %s455 = scalar_lea.vmem %s1, %s454
        %v456 = vld [vmem:[%s451] sm:$0xff]
        %v457 = vld [vmem:[%s455] sm:$0x3]
        %v458 = vld [vmem:[%s4] sm:$0xff]
        %v459 = vld [vmem:[%s4 + $0x8] sm:$0xff]
        %v460 = vld [vmem:[%s4 + $0x10] sm:$0xff]
        %v461 = vld [vmem:[%s4 + $0x18] sm:$0xff]
        %v462 = vld [vmem:[%s5] sm:$0x1]
        %v464 = vlaneseq
        %v465 = vshrl.u32 %v464, 7
        %v466 = vsub.s32 0, %v465
        %v467 = vrot.slane %v462, %v466
        %vm469 = vcmask 261120
        %v471 = vsel %vm469, %v457, 0
        %473 = vmatprep.subr.mxu0 0.0
        %474 = vmatpush1.msra.mxu0 %v458
        %475 = vmatprep.subr.mxu0 0.0
        %476 = vmatpush1.msra.mxu0 %v459
        %477 = vmatprep.subr.mxu0 0.0
        %478 = vmatpush1.msra.mxu0 %v460
        %479 = vmatprep.subr.mxu0 0.0
        %480 = vmatpush1.msra.mxu0 %v461
        %481 = vmatprep.subr.mxu0 0.0
        %482 = vmatpush1.msra.mxu0 0.0
        %483 = vmatprep.subr.mxu0 0.0
        %484 = vmatpush1.msra.mxu0 0.0
        %485 = vmatprep.subr.mxu0 0.0
        %486 = vmatpush1.msra.mxu0 0.0
        %487 = vmatprep.subr.mxu0 0.0
        %488 = vmatpush1.msra.mxu0 0.0
        %489 = vmatprep.subr.mxu0 0.0
        %490 = vmatpush1.msra.mxu0 0.0
        %491 = vmatprep.subr.mxu0 0.0
        %492 = vmatpush1.msra.mxu0 0.0
        %493 = vmatprep.subr.mxu0 0.0
        %494 = vmatpush1.msra.mxu0 0.0
        %495 = vmatprep.subr.mxu0 0.0
        %496 = vmatpush1.msra.mxu0 0.0
        %497 = vmatprep.subr.mxu0 0.0
        %498 = vmatpush1.msra.mxu0 0.0
        %499 = vmatprep.subr.mxu0 0.0
        %500 = vmatpush1.msra.mxu0 0.0
        %501 = vmatprep.subr.mxu0 0.0
        %502 = vmatpush1.msra.mxu0 0.0
        %503 = vmatprep.subr.mxu0 0.0
        %504 = vmatpush1.msra.mxu0 0.0
        %505 = vmatprep.subr.mxu0 0.0
        %506 = vmatpush1.msra.mxu0 0.0
        %507 = vmatprep.subr.mxu0 0.0
        %508 = vmatpush1.msra.mxu0 0.0
        %509 = vmatprep.subr.mxu0 0.0
        %510 = vmatpush1.msra.mxu0 0.0
        %511 = vmatprep.subr.mxu0 0.0
        %512 = vmatpush1.msra.mxu0 0.0
        %513 = vmatprep.subr.mxu0 0.0
        %514 = vmatpush1.msra.mxu0 0.0
        %515 = vmatprep.subr.mxu0 0.0
        %516 = vmatpush1.msra.mxu0 0.0
        %517 = vmatprep.subr.mxu0 0.0
        %518 = vmatpush1.msra.mxu0 0.0
        %519 = vmatprep.subr.mxu0 0.0
        %520 = vmatpush1.msra.mxu0 0.0
        %521 = vmatprep.subr.mxu0 0.0
        %522 = vmatpush1.msra.mxu0 0.0
        %523 = vmatprep.subr.mxu0 0.0
        %524 = vmatpush1.msra.mxu0 0.0
        %525 = vmatprep.subr.mxu0 0.0
        %526 = vmatpush1.msra.mxu0 0.0
        %527 = vmatprep.subr.mxu0 0.0
        %528 = vmatpush1.msra.mxu0 0.0
        %529 = vmatprep.subr.mxu0 0.0
        %530 = vmatpush1.msra.mxu0 0.0
        %531 = vmatprep.subr.mxu0 0.0
        %532 = vmatpush1.msra.mxu0 0.0
        %533 = vmatprep.subr.mxu0 0.0
        %534 = vmatpush1.msra.mxu0 0.0
        %535 = vmatprep.subr.mxu0 0.0
        %536 = vmatpush1.msra.mxu0 0.0
        %537 = vmatprep.mubr.f32.mxu0 0.0
        %538 = vmatmul.mubr.f32.gmra.mrb[0].mxu0 %v471
        %v539 = vpop.f32.mrb[0].mxu0
        %v540 = vadd.f32 %v467, %v539
        %v541 = vpop.f32.mrb[0].mxu0
        %542 = vdwg.mxu0
        %v543 = vld [vmem:[%s2] sm:$0xff]
        %v544 = vld [vmem:[%s2 + $0x8] sm:$0xff]
        %v545 = vld [vmem:[%s2 + $0x10] sm:$0xff]
        %v546 = vld [vmem:[%s2 + $0x18] sm:$0xff]
        %v547 = vld [vmem:[%s2 + $0x20] sm:$0xff]
        %v548 = vld [vmem:[%s2 + $0x28] sm:$0xff]
        %v549 = vld [vmem:[%s2 + $0x30] sm:$0xff]
        %v550 = vld [vmem:[%s2 + $0x38] sm:$0xff]
        %v551 = vld [vmem:[%s2 + $0x40] sm:$0xff]
        %v552 = vld [vmem:[%s2 + $0x48] sm:$0xff]
        %v553 = vld [vmem:[%s2 + $0x50] sm:$0xff]
        %v554 = vld [vmem:[%s2 + $0x58] sm:$0xff]
        %v555 = vld [vmem:[%s2 + $0x60] sm:$0xff]
        %v556 = vld [vmem:[%s2 + $0x68] sm:$0xff]
        %v557 = vld [vmem:[%s2 + $0x70] sm:$0xff]
        %v558 = vld [vmem:[%s2 + $0x78] sm:$0xff]
        %v559 = vld [vmem:[%s2 + $0x80] sm:$0xff]
        %v560 = vld [vmem:[%s2 + $0x88] sm:$0xff]
        %v561 = vld [vmem:[%s2 + $0x90] sm:$0xff]
        %v562 = vld [vmem:[%s2 + $0x98] sm:$0xff]
        %v563 = vld [vmem:[%s2 + $0xa0] sm:$0xff]
        %v564 = vld [vmem:[%s2 + $0xa8] sm:$0xff]
        %v565 = vld [vmem:[%s2 + $0xb0] sm:$0xff]
        %v566 = vld [vmem:[%s2 + $0xb8] sm:$0xff]
        %v567 = vld [vmem:[%s2 + $0xc0] sm:$0xff]
        %v568 = vld [vmem:[%s2 + $0xc8] sm:$0xff]
        %v569 = vld [vmem:[%s2 + $0xd0] sm:$0xff]
        %v570 = vld [vmem:[%s2 + $0xd8] sm:$0xff]
        %v571 = vld [vmem:[%s2 + $0xe0] sm:$0xff]
        %v572 = vld [vmem:[%s2 + $0xe8] sm:$0xff]
        %v573 = vld [vmem:[%s2 + $0xf0] sm:$0xff]
        %v574 = vld [vmem:[%s2 + $0xf8] sm:$0xff]
        %v575 = vld [vmem:[%s2 + $0x100] sm:$0xff]
        %v576 = vld [vmem:[%s2 + $0x108] sm:$0xff]
        %v577 = vld [vmem:[%s2 + $0x110] sm:$0xff]
        %v578 = vld [vmem:[%s2 + $0x118] sm:$0xff]
        %v579 = vld [vmem:[%s2 + $0x120] sm:$0xff]
        %v580 = vld [vmem:[%s2 + $0x128] sm:$0xff]
        %v581 = vld [vmem:[%s2 + $0x130] sm:$0xff]
        %v582 = vld [vmem:[%s2 + $0x138] sm:$0xff]
        %v583 = vld [vmem:[%s2 + $0x140] sm:$0xff]
        %v584 = vld [vmem:[%s2 + $0x148] sm:$0xff]
        %v585 = vld [vmem:[%s2 + $0x150] sm:$0xff]
        %v586 = vld [vmem:[%s2 + $0x158] sm:$0xff]
        %v587 = vld [vmem:[%s2 + $0x160] sm:$0xff]
        %v588 = vld [vmem:[%s2 + $0x168] sm:$0xff]
        %v589 = vld [vmem:[%s2 + $0x170] sm:$0xff]
        %v590 = vld [vmem:[%s2 + $0x178] sm:$0xff]
        %v591 = vld [vmem:[%s2 + $0x180] sm:$0xff]
        %v592 = vld [vmem:[%s2 + $0x188] sm:$0xff]
        %v593 = vld [vmem:[%s2 + $0x190] sm:$0xff]
        %v594 = vld [vmem:[%s2 + $0x198] sm:$0xff]
        %v595 = vld [vmem:[%s2 + $0x1a0] sm:$0xff]
        %v596 = vld [vmem:[%s2 + $0x1a8] sm:$0xff]
        %v597 = vld [vmem:[%s2 + $0x1b0] sm:$0xff]
        %v598 = vld [vmem:[%s2 + $0x1b8] sm:$0xff]
        %v599 = vld [vmem:[%s2 + $0x1c0] sm:$0xff]
        %v600 = vld [vmem:[%s2 + $0x1c8] sm:$0xff]
        %v601 = vld [vmem:[%s2 + $0x1d0] sm:$0xff]
        %v602 = vld [vmem:[%s2 + $0x1d8] sm:$0xff]
        %v603 = vld [vmem:[%s2 + $0x1e0] sm:$0xff]
        %v604 = vld [vmem:[%s2 + $0x1e8] sm:$0xff]
        %v605 = vld [vmem:[%s2 + $0x1f0] sm:$0xff]
        %v606 = vld [vmem:[%s2 + $0x1f8] sm:$0xff]
        %v607 = vld [vmem:[%s2 + $0x200] sm:$0xff]
        %v608 = vld [vmem:[%s2 + $0x208] sm:$0xff]
        %v609 = vld [vmem:[%s2 + $0x210] sm:$0xff]
        %v610 = vld [vmem:[%s2 + $0x218] sm:$0xff]
        %v611 = vld [vmem:[%s2 + $0x220] sm:$0xff]
        %v612 = vld [vmem:[%s2 + $0x228] sm:$0xff]
        %v613 = vld [vmem:[%s2 + $0x230] sm:$0xff]
        %v614 = vld [vmem:[%s2 + $0x238] sm:$0xff]
        %v615 = vld [vmem:[%s2 + $0x240] sm:$0xff]
        %v616 = vld [vmem:[%s2 + $0x248] sm:$0xff]
        %v617 = vld [vmem:[%s2 + $0x250] sm:$0xff]
        %v618 = vld [vmem:[%s2 + $0x258] sm:$0xff]
        %v619 = vld [vmem:[%s2 + $0x260] sm:$0xff]
        %v620 = vld [vmem:[%s2 + $0x268] sm:$0xff]
        %v621 = vld [vmem:[%s2 + $0x270] sm:$0xff]
        %v622 = vld [vmem:[%s2 + $0x278] sm:$0xff]
        %v623 = vld [vmem:[%s2 + $0x280] sm:$0xff]
        %v624 = vld [vmem:[%s2 + $0x288] sm:$0xff]
        %v625 = vld [vmem:[%s2 + $0x290] sm:$0xff]
        %v626 = vld [vmem:[%s2 + $0x298] sm:$0xff]
        %v627 = vld [vmem:[%s2 + $0x2a0] sm:$0xff]
        %v628 = vld [vmem:[%s2 + $0x2a8] sm:$0xff]
        %v629 = vld [vmem:[%s2 + $0x2b0] sm:$0xff]
        %v630 = vld [vmem:[%s2 + $0x2b8] sm:$0xff]
        %v631 = vld [vmem:[%s2 + $0x2c0] sm:$0xff]
        %v632 = vld [vmem:[%s2 + $0x2c8] sm:$0xff]
        %v633 = vld [vmem:[%s2 + $0x2d0] sm:$0xff]
        %v634 = vld [vmem:[%s2 + $0x2d8] sm:$0xff]
        %v635 = vld [vmem:[%s2 + $0x2e0] sm:$0xff]
        %v636 = vld [vmem:[%s2 + $0x2e8] sm:$0xff]
        %v637 = vld [vmem:[%s2 + $0x2f0] sm:$0xff]
        %v638 = vld [vmem:[%s2 + $0x2f8] sm:$0xff]
        %v639 = vld [vmem:[%s2 + $0x300] sm:$0xff]
        %v640 = vld [vmem:[%s2 + $0x308] sm:$0xff]
        %v641 = vld [vmem:[%s2 + $0x310] sm:$0xff]
        %v642 = vld [vmem:[%s2 + $0x318] sm:$0xff]
        %v643 = vld [vmem:[%s2 + $0x320] sm:$0xff]
        %v644 = vld [vmem:[%s2 + $0x328] sm:$0xff]
        %v645 = vld [vmem:[%s2 + $0x330] sm:$0xff]
        %v646 = vld [vmem:[%s2 + $0x338] sm:$0xff]
        %v647 = vld [vmem:[%s2 + $0x340] sm:$0xff]
        %v648 = vld [vmem:[%s2 + $0x348] sm:$0xff]
        %v649 = vld [vmem:[%s2 + $0x350] sm:$0xff]
        %v650 = vld [vmem:[%s2 + $0x358] sm:$0xff]
        %v651 = vld [vmem:[%s2 + $0x360] sm:$0xff]
        %v652 = vld [vmem:[%s2 + $0x368] sm:$0xff]
        %v653 = vld [vmem:[%s2 + $0x370] sm:$0xff]
        %v654 = vld [vmem:[%s2 + $0x378] sm:$0xff]
        %v655 = vld [vmem:[%s2 + $0x380] sm:$0xff]
        %v656 = vld [vmem:[%s2 + $0x388] sm:$0xff]
        %v657 = vld [vmem:[%s2 + $0x390] sm:$0xff]
        %v658 = vld [vmem:[%s2 + $0x398] sm:$0xff]
        %v659 = vld [vmem:[%s2 + $0x3a0] sm:$0xff]
        %v660 = vld [vmem:[%s2 + $0x3a8] sm:$0xff]
        %v661 = vld [vmem:[%s2 + $0x3b0] sm:$0xff]
        %v662 = vld [vmem:[%s2 + $0x3b8] sm:$0xff]
        %v663 = vld [vmem:[%s2 + $0x3c0] sm:$0xff]
        %v664 = vld [vmem:[%s2 + $0x3c8] sm:$0xff]
        %v665 = vld [vmem:[%s2 + $0x3d0] sm:$0xff]
        %v666 = vld [vmem:[%s2 + $0x3d8] sm:$0xff]
        %v667 = vld [vmem:[%s2 + $0x3e0] sm:$0xff]
        %v668 = vld [vmem:[%s2 + $0x3e8] sm:$0xff]
        %v669 = vld [vmem:[%s2 + $0x3f0] sm:$0xff]
        %v670 = vld [vmem:[%s2 + $0x3f8] sm:$0xff]
        %v671 = vld [vmem:[%s2 + $0x400] sm:$0xff]
        %v672 = vld [vmem:[%s2 + $0x408] sm:$0xff]
        %v673 = vld [vmem:[%s2 + $0x410] sm:$0xff]
        %v674 = vld [vmem:[%s2 + $0x418] sm:$0xff]
        %v675 = vld [vmem:[%s2 + $0x420] sm:$0xff]
        %v676 = vld [vmem:[%s2 + $0x428] sm:$0xff]
        %v677 = vld [vmem:[%s2 + $0x430] sm:$0xff]
        %v678 = vld [vmem:[%s2 + $0x438] sm:$0xff]
        %v679 = vld [vmem:[%s2 + $0x440] sm:$0xff]
        %v680 = vld [vmem:[%s2 + $0x448] sm:$0xff]
        %v681 = vld [vmem:[%s2 + $0x450] sm:$0xff]
        %v682 = vld [vmem:[%s2 + $0x458] sm:$0xff]
        %v683 = vld [vmem:[%s2 + $0x460] sm:$0xff]
        %v684 = vld [vmem:[%s2 + $0x468] sm:$0xff]
        %v685 = vld [vmem:[%s2 + $0x470] sm:$0xff]
        %v686 = vld [vmem:[%s2 + $0x478] sm:$0xff]
        %v687 = vld [vmem:[%s2 + $0x480] sm:$0xff]
        %v688 = vld [vmem:[%s2 + $0x488] sm:$0xff]
        %v689 = vld [vmem:[%s2 + $0x490] sm:$0xff]
        %v690 = vld [vmem:[%s2 + $0x498] sm:$0xff]
        %v691 = vld [vmem:[%s2 + $0x4a0] sm:$0xff]
        %v692 = vld [vmem:[%s2 + $0x4a8] sm:$0xff]
        %v693 = vld [vmem:[%s2 + $0x4b0] sm:$0xff]
        %v694 = vld [vmem:[%s2 + $0x4b8] sm:$0xff]
        %v695 = vld [vmem:[%s2 + $0x4c0] sm:$0xff]
        %v696 = vld [vmem:[%s2 + $0x4c8] sm:$0xff]
        %v697 = vld [vmem:[%s2 + $0x4d0] sm:$0xff]
        %v698 = vld [vmem:[%s2 + $0x4d8] sm:$0xff]
        %v699 = vld [vmem:[%s2 + $0x4e0] sm:$0xff]
        %v700 = vld [vmem:[%s2 + $0x4e8] sm:$0xff]
        %v701 = vld [vmem:[%s2 + $0x4f0] sm:$0xff]
        %v702 = vld [vmem:[%s2 + $0x4f8] sm:$0xff]
        %v703 = vld [vmem:[%s2 + $0x500] sm:$0xff]
        %v704 = vld [vmem:[%s2 + $0x508] sm:$0xff]
        %v705 = vld [vmem:[%s2 + $0x510] sm:$0xff]
        %v706 = vld [vmem:[%s2 + $0x518] sm:$0xff]
        %v707 = vld [vmem:[%s2 + $0x520] sm:$0xff]
        %v708 = vld [vmem:[%s2 + $0x528] sm:$0xff]
        %v709 = vld [vmem:[%s2 + $0x530] sm:$0xff]
        %v710 = vld [vmem:[%s2 + $0x538] sm:$0xff]
        %v711 = vld [vmem:[%s2 + $0x540] sm:$0xff]
        %v712 = vld [vmem:[%s2 + $0x548] sm:$0xff]
        %v713 = vld [vmem:[%s2 + $0x550] sm:$0xff]
        %v714 = vld [vmem:[%s2 + $0x558] sm:$0xff]
        %v715 = vld [vmem:[%s2 + $0x560] sm:$0xff]
        %v716 = vld [vmem:[%s2 + $0x568] sm:$0xff]
        %v717 = vld [vmem:[%s2 + $0x570] sm:$0xff]
        %v718 = vld [vmem:[%s2 + $0x578] sm:$0xff]
        %v719 = vld [vmem:[%s2 + $0x580] sm:$0xff]
        %v720 = vld [vmem:[%s2 + $0x588] sm:$0xff]
        %v721 = vld [vmem:[%s2 + $0x590] sm:$0xff]
        %v722 = vld [vmem:[%s2 + $0x598] sm:$0xff]
        %v723 = vld [vmem:[%s2 + $0x5a0] sm:$0xff]
        %v724 = vld [vmem:[%s2 + $0x5a8] sm:$0xff]
        %v725 = vld [vmem:[%s2 + $0x5b0] sm:$0xff]
        %v726 = vld [vmem:[%s2 + $0x5b8] sm:$0xff]
        %v727 = vld [vmem:[%s2 + $0x5c0] sm:$0xff]
        %v728 = vld [vmem:[%s2 + $0x5c8] sm:$0xff]
        %v729 = vld [vmem:[%s2 + $0x5d0] sm:$0xff]
        %v730 = vld [vmem:[%s2 + $0x5d8] sm:$0xff]
        %v731 = vld [vmem:[%s2 + $0x5e0] sm:$0xff]
        %v732 = vld [vmem:[%s2 + $0x5e8] sm:$0xff]
        %v733 = vld [vmem:[%s2 + $0x5f0] sm:$0xff]
        %v734 = vld [vmem:[%s2 + $0x5f8] sm:$0xff]
        %v735 = vld [vmem:[%s2 + $0x600] sm:$0xff]
        %v736 = vld [vmem:[%s2 + $0x608] sm:$0xff]
        %v737 = vld [vmem:[%s2 + $0x610] sm:$0xff]
        %v738 = vld [vmem:[%s2 + $0x618] sm:$0xff]
        %v739 = vld [vmem:[%s2 + $0x620] sm:$0xff]
        %v740 = vld [vmem:[%s2 + $0x628] sm:$0xff]
        %v741 = vld [vmem:[%s2 + $0x630] sm:$0xff]
        %v742 = vld [vmem:[%s2 + $0x638] sm:$0xff]
        %v743 = vld [vmem:[%s2 + $0x640] sm:$0xff]
        %v744 = vld [vmem:[%s2 + $0x648] sm:$0xff]
        %v745 = vld [vmem:[%s2 + $0x650] sm:$0xff]
        %v746 = vld [vmem:[%s2 + $0x658] sm:$0xff]
        %v747 = vld [vmem:[%s2 + $0x660] sm:$0xff]
        %v748 = vld [vmem:[%s2 + $0x668] sm:$0xff]
        %v749 = vld [vmem:[%s2 + $0x670] sm:$0xff]
        %v750 = vld [vmem:[%s2 + $0x678] sm:$0xff]
        %v751 = vld [vmem:[%s2 + $0x680] sm:$0xff]
        %v752 = vld [vmem:[%s2 + $0x688] sm:$0xff]
        %v753 = vld [vmem:[%s2 + $0x690] sm:$0xff]
        %v754 = vld [vmem:[%s2 + $0x698] sm:$0xff]
        %v755 = vld [vmem:[%s2 + $0x6a0] sm:$0xff]
        %v756 = vld [vmem:[%s2 + $0x6a8] sm:$0xff]
        %v757 = vld [vmem:[%s2 + $0x6b0] sm:$0xff]
        %v758 = vld [vmem:[%s2 + $0x6b8] sm:$0xff]
        %v759 = vld [vmem:[%s2 + $0x6c0] sm:$0xff]
        %v760 = vld [vmem:[%s2 + $0x6c8] sm:$0xff]
        %v761 = vld [vmem:[%s2 + $0x6d0] sm:$0xff]
        %v762 = vld [vmem:[%s2 + $0x6d8] sm:$0xff]
        %v763 = vld [vmem:[%s2 + $0x6e0] sm:$0xff]
        %v764 = vld [vmem:[%s2 + $0x6e8] sm:$0xff]
        %v765 = vld [vmem:[%s2 + $0x6f0] sm:$0xff]
        %v766 = vld [vmem:[%s2 + $0x6f8] sm:$0xff]
        %v767 = vld [vmem:[%s2 + $0x700] sm:$0xff]
        %v768 = vld [vmem:[%s2 + $0x708] sm:$0xff]
        %v769 = vld [vmem:[%s2 + $0x710] sm:$0xff]
        %v770 = vld [vmem:[%s2 + $0x718] sm:$0xff]
        %v771 = vld [vmem:[%s2 + $0x720] sm:$0xff]
        %v772 = vld [vmem:[%s2 + $0x728] sm:$0xff]
        %v773 = vld [vmem:[%s2 + $0x730] sm:$0xff]
        %v774 = vld [vmem:[%s2 + $0x738] sm:$0xff]
        %v775 = vld [vmem:[%s2 + $0x740] sm:$0xff]
        %v776 = vld [vmem:[%s2 + $0x748] sm:$0xff]
        %v777 = vld [vmem:[%s2 + $0x750] sm:$0xff]
        %v778 = vld [vmem:[%s2 + $0x758] sm:$0xff]
        %v779 = vld [vmem:[%s2 + $0x760] sm:$0xff]
        %v780 = vld [vmem:[%s2 + $0x768] sm:$0xff]
        %v781 = vld [vmem:[%s2 + $0x770] sm:$0xff]
        %v782 = vld [vmem:[%s2 + $0x778] sm:$0xff]
        %v783 = vld [vmem:[%s2 + $0x780] sm:$0xff]
        %v784 = vld [vmem:[%s2 + $0x788] sm:$0xff]
        %v785 = vld [vmem:[%s2 + $0x790] sm:$0xff]
        %v786 = vld [vmem:[%s2 + $0x798] sm:$0xff]
        %v787 = vld [vmem:[%s2 + $0x7a0] sm:$0xff]
        %v788 = vld [vmem:[%s2 + $0x7a8] sm:$0xff]
        %v789 = vld [vmem:[%s2 + $0x7b0] sm:$0xff]
        %v790 = vld [vmem:[%s2 + $0x7b8] sm:$0xff]
        %v791 = vld [vmem:[%s2 + $0x7c0] sm:$0xff]
        %v792 = vld [vmem:[%s2 + $0x7c8] sm:$0xff]
        %v793 = vld [vmem:[%s2 + $0x7d0] sm:$0xff]
        %v794 = vld [vmem:[%s2 + $0x7d8] sm:$0xff]
        %v795 = vld [vmem:[%s2 + $0x7e0] sm:$0xff]
        %v796 = vld [vmem:[%s2 + $0x7e8] sm:$0xff]
        %v797 = vld [vmem:[%s2 + $0x7f0] sm:$0xff]
        %v798 = vld [vmem:[%s2 + $0x7f8] sm:$0xff]
        %v799 = vld [vmem:[%s2 + $0x800] sm:$0xff]
        %v800 = vld [vmem:[%s2 + $0x808] sm:$0xff]
        %v801 = vld [vmem:[%s2 + $0x810] sm:$0xff]
        %v802 = vld [vmem:[%s2 + $0x818] sm:$0xff]
        %v803 = vld [vmem:[%s2 + $0x820] sm:$0xff]
        %v804 = vld [vmem:[%s2 + $0x828] sm:$0xff]
        %v805 = vld [vmem:[%s2 + $0x830] sm:$0xff]
        %v806 = vld [vmem:[%s2 + $0x838] sm:$0xff]
        %v807 = vld [vmem:[%s2 + $0x840] sm:$0xff]
        %v808 = vld [vmem:[%s2 + $0x848] sm:$0xff]
        %v809 = vld [vmem:[%s2 + $0x850] sm:$0xff]
        %v810 = vld [vmem:[%s2 + $0x858] sm:$0xff]
        %v811 = vld [vmem:[%s2 + $0x860] sm:$0xff]
        %v812 = vld [vmem:[%s2 + $0x868] sm:$0xff]
        %v813 = vld [vmem:[%s2 + $0x870] sm:$0xff]
        %v814 = vld [vmem:[%s2 + $0x878] sm:$0xff]
        %v815 = vld [vmem:[%s2 + $0x880] sm:$0xff]
        %v816 = vld [vmem:[%s2 + $0x888] sm:$0xff]
        %v817 = vld [vmem:[%s2 + $0x890] sm:$0xff]
        %v818 = vld [vmem:[%s2 + $0x898] sm:$0xff]
        %v819 = vld [vmem:[%s2 + $0x8a0] sm:$0xff]
        %v820 = vld [vmem:[%s2 + $0x8a8] sm:$0xff]
        %v821 = vld [vmem:[%s2 + $0x8b0] sm:$0xff]
        %v822 = vld [vmem:[%s2 + $0x8b8] sm:$0xff]
        %v823 = vld [vmem:[%s2 + $0x8c0] sm:$0xff]
        %v824 = vld [vmem:[%s2 + $0x8c8] sm:$0xff]
        %v825 = vld [vmem:[%s2 + $0x8d0] sm:$0xff]
        %v826 = vld [vmem:[%s2 + $0x8d8] sm:$0xff]
        %v827 = vld [vmem:[%s2 + $0x8e0] sm:$0xff]
        %v828 = vld [vmem:[%s2 + $0x8e8] sm:$0xff]
        %v829 = vld [vmem:[%s2 + $0x8f0] sm:$0xff]
        %v830 = vld [vmem:[%s2 + $0x8f8] sm:$0xff]
        %v831 = vld [vmem:[%s2 + $0x900] sm:$0xff]
        %v832 = vld [vmem:[%s2 + $0x908] sm:$0xff]
        %v833 = vld [vmem:[%s2 + $0x910] sm:$0xff]
        %v834 = vld [vmem:[%s2 + $0x918] sm:$0xff]
        %v835 = vld [vmem:[%s2 + $0x920] sm:$0xff]
        %v836 = vld [vmem:[%s2 + $0x928] sm:$0xff]
        %v837 = vld [vmem:[%s2 + $0x930] sm:$0xff]
        %v838 = vld [vmem:[%s2 + $0x938] sm:$0xff]
        %v839 = vld [vmem:[%s2 + $0x940] sm:$0xff]
        %v840 = vld [vmem:[%s2 + $0x948] sm:$0xff]
        %v841 = vld [vmem:[%s2 + $0x950] sm:$0xff]
        %v842 = vld [vmem:[%s2 + $0x958] sm:$0xff]
        %v843 = vld [vmem:[%s2 + $0x960] sm:$0xff]
        %v844 = vld [vmem:[%s2 + $0x968] sm:$0xff]
        %v845 = vld [vmem:[%s2 + $0x970] sm:$0xff]
        %v846 = vld [vmem:[%s2 + $0x978] sm:$0xff]
        %v847 = vld [vmem:[%s2 + $0x980] sm:$0xff]
        %v848 = vld [vmem:[%s2 + $0x988] sm:$0xff]
        %v849 = vld [vmem:[%s2 + $0x990] sm:$0xff]
        %v850 = vld [vmem:[%s2 + $0x998] sm:$0xff]
        %v851 = vld [vmem:[%s2 + $0x9a0] sm:$0xff]
        %v852 = vld [vmem:[%s2 + $0x9a8] sm:$0xff]
        %v853 = vld [vmem:[%s2 + $0x9b0] sm:$0xff]
        %v854 = vld [vmem:[%s2 + $0x9b8] sm:$0xff]
        %v855 = vld [vmem:[%s2 + $0x9c0] sm:$0xff]
        %v856 = vld [vmem:[%s2 + $0x9c8] sm:$0xff]
        %v857 = vld [vmem:[%s2 + $0x9d0] sm:$0xff]
        %v858 = vld [vmem:[%s2 + $0x9d8] sm:$0xff]
        %v859 = vld [vmem:[%s2 + $0x9e0] sm:$0xff]
        %v860 = vld [vmem:[%s2 + $0x9e8] sm:$0xff]
        %v861 = vld [vmem:[%s2 + $0x9f0] sm:$0xff]
        %v862 = vld [vmem:[%s2 + $0x9f8] sm:$0xff]
        %v863 = vld [vmem:[%s2 + $0xa00] sm:$0xff]
        %v864 = vld [vmem:[%s2 + $0xa08] sm:$0xff]
        %v865 = vld [vmem:[%s2 + $0xa10] sm:$0xff]
        %v866 = vld [vmem:[%s2 + $0xa18] sm:$0xff]
        %v867 = vld [vmem:[%s2 + $0xa20] sm:$0xff]
        %v868 = vld [vmem:[%s2 + $0xa28] sm:$0xff]
        %v869 = vld [vmem:[%s2 + $0xa30] sm:$0xff]
        %v870 = vld [vmem:[%s2 + $0xa38] sm:$0xff]
        %v871 = vld [vmem:[%s2 + $0xa40] sm:$0xff]
        %v872 = vld [vmem:[%s2 + $0xa48] sm:$0xff]
        %v873 = vld [vmem:[%s2 + $0xa50] sm:$0xff]
        %v874 = vld [vmem:[%s2 + $0xa58] sm:$0xff]
        %v875 = vld [vmem:[%s2 + $0xa60] sm:$0xff]
        %v876 = vld [vmem:[%s2 + $0xa68] sm:$0xff]
        %v877 = vld [vmem:[%s2 + $0xa70] sm:$0xff]
        %v878 = vld [vmem:[%s2 + $0xa78] sm:$0xff]
        %v879 = vld [vmem:[%s2 + $0xa80] sm:$0xff]
        %v880 = vld [vmem:[%s2 + $0xa88] sm:$0xff]
        %v881 = vld [vmem:[%s2 + $0xa90] sm:$0xff]
        %v882 = vld [vmem:[%s2 + $0xa98] sm:$0xff]
        %v883 = vld [vmem:[%s2 + $0xaa0] sm:$0xff]
        %v884 = vld [vmem:[%s2 + $0xaa8] sm:$0xff]
        %v885 = vld [vmem:[%s2 + $0xab0] sm:$0xff]
        %v886 = vld [vmem:[%s2 + $0xab8] sm:$0xff]
        %v887 = vld [vmem:[%s2 + $0xac0] sm:$0xff]
        %v888 = vld [vmem:[%s2 + $0xac8] sm:$0xff]
        %v889 = vld [vmem:[%s2 + $0xad0] sm:$0xff]
        %v890 = vld [vmem:[%s2 + $0xad8] sm:$0xff]
        %v891 = vld [vmem:[%s2 + $0xae0] sm:$0xff]
        %v892 = vld [vmem:[%s2 + $0xae8] sm:$0xff]
        %v893 = vld [vmem:[%s2 + $0xaf0] sm:$0xff]
        %v894 = vld [vmem:[%s2 + $0xaf8] sm:$0xff]
        %v895 = vld [vmem:[%s2 + $0xb00] sm:$0xff]
        %v896 = vld [vmem:[%s2 + $0xb08] sm:$0xff]
        %v897 = vld [vmem:[%s2 + $0xb10] sm:$0xff]
        %v898 = vld [vmem:[%s2 + $0xb18] sm:$0xff]
        %v899 = vld [vmem:[%s2 + $0xb20] sm:$0xff]
        %v900 = vld [vmem:[%s2 + $0xb28] sm:$0xff]
        %v901 = vld [vmem:[%s2 + $0xb30] sm:$0xff]
        %v902 = vld [vmem:[%s2 + $0xb38] sm:$0xff]
        %v903 = vld [vmem:[%s2 + $0xb40] sm:$0xff]
        %v904 = vld [vmem:[%s2 + $0xb48] sm:$0xff]
        %v905 = vld [vmem:[%s2 + $0xb50] sm:$0xff]
        %v906 = vld [vmem:[%s2 + $0xb58] sm:$0xff]
        %v907 = vld [vmem:[%s2 + $0xb60] sm:$0xff]
        %v908 = vld [vmem:[%s2 + $0xb68] sm:$0xff]
        %v909 = vld [vmem:[%s2 + $0xb70] sm:$0xff]
        %v910 = vld [vmem:[%s2 + $0xb78] sm:$0xff]
        %v911 = vld [vmem:[%s2 + $0xb80] sm:$0xff]
        %v912 = vld [vmem:[%s2 + $0xb88] sm:$0xff]
        %v913 = vld [vmem:[%s2 + $0xb90] sm:$0xff]
        %v914 = vld [vmem:[%s2 + $0xb98] sm:$0xff]
        %v915 = vld [vmem:[%s2 + $0xba0] sm:$0xff]
        %v916 = vld [vmem:[%s2 + $0xba8] sm:$0xff]
        %v917 = vld [vmem:[%s2 + $0xbb0] sm:$0xff]
        %v918 = vld [vmem:[%s2 + $0xbb8] sm:$0xff]
        %v919 = vld [vmem:[%s2 + $0xbc0] sm:$0xff]
        %v920 = vld [vmem:[%s2 + $0xbc8] sm:$0xff]
        %v921 = vld [vmem:[%s2 + $0xbd0] sm:$0xff]
        %v922 = vld [vmem:[%s2 + $0xbd8] sm:$0xff]
        %v923 = vld [vmem:[%s2 + $0xbe0] sm:$0xff]
        %v924 = vld [vmem:[%s2 + $0xbe8] sm:$0xff]
        %v925 = vld [vmem:[%s2 + $0xbf0] sm:$0xff]
        %v926 = vld [vmem:[%s2 + $0xbf8] sm:$0xff]
        %v927 = vld [vmem:[%s2 + $0xc00] sm:$0xff]
        %v928 = vld [vmem:[%s2 + $0xc08] sm:$0xff]
        %v929 = vld [vmem:[%s2 + $0xc10] sm:$0xff]
        %v930 = vld [vmem:[%s2 + $0xc18] sm:$0xff]
        %v931 = vld [vmem:[%s2 + $0xc20] sm:$0xff]
        %v932 = vld [vmem:[%s2 + $0xc28] sm:$0xff]
        %v933 = vld [vmem:[%s2 + $0xc30] sm:$0xff]
        %v934 = vld [vmem:[%s2 + $0xc38] sm:$0xff]
        %v935 = vld [vmem:[%s2 + $0xc40] sm:$0xff]
        %v936 = vld [vmem:[%s2 + $0xc48] sm:$0xff]
        %v937 = vld [vmem:[%s2 + $0xc50] sm:$0xff]
        %v938 = vld [vmem:[%s2 + $0xc58] sm:$0xff]
        %v939 = vld [vmem:[%s2 + $0xc60] sm:$0xff]
        %v940 = vld [vmem:[%s2 + $0xc68] sm:$0xff]
        %v941 = vld [vmem:[%s2 + $0xc70] sm:$0xff]
        %v942 = vld [vmem:[%s2 + $0xc78] sm:$0xff]
        %v943 = vld [vmem:[%s2 + $0xc80] sm:$0xff]
        %v944 = vld [vmem:[%s2 + $0xc88] sm:$0xff]
        %v945 = vld [vmem:[%s2 + $0xc90] sm:$0xff]
        %v946 = vld [vmem:[%s2 + $0xc98] sm:$0xff]
        %v947 = vld [vmem:[%s2 + $0xca0] sm:$0xff]
        %v948 = vld [vmem:[%s2 + $0xca8] sm:$0xff]
        %v949 = vld [vmem:[%s2 + $0xcb0] sm:$0xff]
        %v950 = vld [vmem:[%s2 + $0xcb8] sm:$0xff]
        %v951 = vld [vmem:[%s2 + $0xcc0] sm:$0xff]
        %v952 = vld [vmem:[%s2 + $0xcc8] sm:$0xff]
        %v953 = vld [vmem:[%s2 + $0xcd0] sm:$0xff]
        %v954 = vld [vmem:[%s2 + $0xcd8] sm:$0xff]
        %v955 = vld [vmem:[%s2 + $0xce0] sm:$0xff]
        %v956 = vld [vmem:[%s2 + $0xce8] sm:$0xff]
        %v957 = vld [vmem:[%s2 + $0xcf0] sm:$0xff]
        %v958 = vld [vmem:[%s2 + $0xcf8] sm:$0xff]
        %v959 = vld [vmem:[%s2 + $0xd00] sm:$0xff]
        %v960 = vld [vmem:[%s2 + $0xd08] sm:$0xff]
        %v961 = vld [vmem:[%s2 + $0xd10] sm:$0xff]
        %v962 = vld [vmem:[%s2 + $0xd18] sm:$0xff]
        %v963 = vld [vmem:[%s2 + $0xd20] sm:$0xff]
        %v964 = vld [vmem:[%s2 + $0xd28] sm:$0xff]
        %v965 = vld [vmem:[%s2 + $0xd30] sm:$0xff]
        %v966 = vld [vmem:[%s2 + $0xd38] sm:$0xff]
        %v967 = vld [vmem:[%s2 + $0xd40] sm:$0xff]
        %v968 = vld [vmem:[%s2 + $0xd48] sm:$0xff]
        %v969 = vld [vmem:[%s2 + $0xd50] sm:$0xff]
        %v970 = vld [vmem:[%s2 + $0xd58] sm:$0xff]
        %v971 = vld [vmem:[%s2 + $0xd60] sm:$0xff]
        %v972 = vld [vmem:[%s2 + $0xd68] sm:$0xff]
        %v973 = vld [vmem:[%s2 + $0xd70] sm:$0xff]
        %v974 = vld [vmem:[%s2 + $0xd78] sm:$0xff]
        %v975 = vld [vmem:[%s2 + $0xd80] sm:$0xff]
        %v976 = vld [vmem:[%s2 + $0xd88] sm:$0xff]
        %v977 = vld [vmem:[%s2 + $0xd90] sm:$0xff]
        %v978 = vld [vmem:[%s2 + $0xd98] sm:$0xff]
        %v979 = vld [vmem:[%s2 + $0xda0] sm:$0xff]
        %v980 = vld [vmem:[%s2 + $0xda8] sm:$0xff]
        %v981 = vld [vmem:[%s2 + $0xdb0] sm:$0xff]
        %v982 = vld [vmem:[%s2 + $0xdb8] sm:$0xff]
        %v983 = vld [vmem:[%s2 + $0xdc0] sm:$0xff]
        %v984 = vld [vmem:[%s2 + $0xdc8] sm:$0xff]
        %v985 = vld [vmem:[%s2 + $0xdd0] sm:$0xff]
        %v986 = vld [vmem:[%s2 + $0xdd8] sm:$0xff]
        %v987 = vld [vmem:[%s2 + $0xde0] sm:$0xff]
        %v988 = vld [vmem:[%s2 + $0xde8] sm:$0xff]
        %v989 = vld [vmem:[%s2 + $0xdf0] sm:$0xff]
        %v990 = vld [vmem:[%s2 + $0xdf8] sm:$0xff]
        %v991 = vld [vmem:[%s2 + $0xe00] sm:$0xff]
        %v992 = vld [vmem:[%s2 + $0xe08] sm:$0xff]
        %v993 = vld [vmem:[%s2 + $0xe10] sm:$0xff]
        %v994 = vld [vmem:[%s2 + $0xe18] sm:$0xff]
        %v995 = vld [vmem:[%s2 + $0xe20] sm:$0xff]
        %v996 = vld [vmem:[%s2 + $0xe28] sm:$0xff]
        %v997 = vld [vmem:[%s2 + $0xe30] sm:$0xff]
        %v998 = vld [vmem:[%s2 + $0xe38] sm:$0xff]
        %v999 = vld [vmem:[%s2 + $0xe40] sm:$0xff]
        %v1000 = vld [vmem:[%s2 + $0xe48] sm:$0xff]
        %v1001 = vld [vmem:[%s2 + $0xe50] sm:$0xff]
        %v1002 = vld [vmem:[%s2 + $0xe58] sm:$0xff]
        %v1003 = vld [vmem:[%s2 + $0xe60] sm:$0xff]
        %v1004 = vld [vmem:[%s2 + $0xe68] sm:$0xff]
        %v1005 = vld [vmem:[%s2 + $0xe70] sm:$0xff]
        %v1006 = vld [vmem:[%s2 + $0xe78] sm:$0xff]
        %v1007 = vld [vmem:[%s2 + $0xe80] sm:$0xff]
        %v1008 = vld [vmem:[%s2 + $0xe88] sm:$0xff]
        %v1009 = vld [vmem:[%s2 + $0xe90] sm:$0xff]
        %v1010 = vld [vmem:[%s2 + $0xe98] sm:$0xff]
        %v1011 = vld [vmem:[%s2 + $0xea0] sm:$0xff]
        %v1012 = vld [vmem:[%s2 + $0xea8] sm:$0xff]
        %v1013 = vld [vmem:[%s2 + $0xeb0] sm:$0xff]
        %v1014 = vld [vmem:[%s2 + $0xeb8] sm:$0xff]
        %v1015 = vld [vmem:[%s2 + $0xec0] sm:$0xff]
        %v1016 = vld [vmem:[%s2 + $0xec8] sm:$0xff]
        %v1017 = vld [vmem:[%s2 + $0xed0] sm:$0xff]
        %v1018 = vld [vmem:[%s2 + $0xed8] sm:$0xff]
        %v1019 = vld [vmem:[%s2 + $0xee0] sm:$0xff]
        %v1020 = vld [vmem:[%s2 + $0xee8] sm:$0xff]
        %v1021 = vld [vmem:[%s2 + $0xef0] sm:$0xff]
        %v1022 = vld [vmem:[%s2 + $0xef8] sm:$0xff]
        %v1023 = vld [vmem:[%s2 + $0xf00] sm:$0xff]
        %v1024 = vld [vmem:[%s2 + $0xf08] sm:$0xff]
        %v1025 = vld [vmem:[%s2 + $0xf10] sm:$0xff]
        %v1026 = vld [vmem:[%s2 + $0xf18] sm:$0xff]
        %v1027 = vld [vmem:[%s2 + $0xf20] sm:$0xff]
        %v1028 = vld [vmem:[%s2 + $0xf28] sm:$0xff]
        %v1029 = vld [vmem:[%s2 + $0xf30] sm:$0xff]
        %v1030 = vld [vmem:[%s2 + $0xf38] sm:$0xff]
        %v1031 = vld [vmem:[%s2 + $0xf40] sm:$0xff]
        %v1032 = vld [vmem:[%s2 + $0xf48] sm:$0xff]
        %v1033 = vld [vmem:[%s2 + $0xf50] sm:$0xff]
        %v1034 = vld [vmem:[%s2 + $0xf58] sm:$0xff]
        %v1035 = vld [vmem:[%s2 + $0xf60] sm:$0xff]
        %v1036 = vld [vmem:[%s2 + $0xf68] sm:$0xff]
        %v1037 = vld [vmem:[%s2 + $0xf70] sm:$0xff]
        %v1038 = vld [vmem:[%s2 + $0xf78] sm:$0xff]
        %v1039 = vld [vmem:[%s2 + $0xf80] sm:$0xff]
        %v1040 = vld [vmem:[%s2 + $0xf88] sm:$0xff]
        %v1041 = vld [vmem:[%s2 + $0xf90] sm:$0xff]
        %v1042 = vld [vmem:[%s2 + $0xf98] sm:$0xff]
        %v1043 = vld [vmem:[%s2 + $0xfa0] sm:$0xff]
        %v1044 = vld [vmem:[%s2 + $0xfa8] sm:$0xff]
        %v1045 = vld [vmem:[%s2 + $0xfb0] sm:$0xff]
        %v1046 = vld [vmem:[%s2 + $0xfb8] sm:$0xff]
        %v1047 = vld [vmem:[%s2 + $0xfc0] sm:$0xff]
        %v1048 = vld [vmem:[%s2 + $0xfc8] sm:$0xff]
        %v1049 = vld [vmem:[%s2 + $0xfd0] sm:$0xff]
        %v1050 = vld [vmem:[%s2 + $0xfd8] sm:$0xff]
        %v1051 = vld [vmem:[%s2 + $0xfe0] sm:$0xff]
        %v1052 = vld [vmem:[%s2 + $0xfe8] sm:$0xff]
        %v1053 = vld [vmem:[%s2 + $0xff0] sm:$0xff]
        %v1054 = vld [vmem:[%s2 + $0xff8] sm:$0xff]
        %v1055 = vld [vmem:[%s3] sm:$0xff]
        %v1057 = vlaneseq
        %v1058 = vshrl.u32 %v1057, 7
        %v1059 = vsub.s32 0, %v1058
        %v1060 = vrot.slane %v1055, %v1059
        %v1061 = vlaneseq
        %v1062 = vshrl.u32 %v1061, 7
        %v1063 = vsub.s32 1, %v1062
        %v1064 = vrot.slane %v1055, %v1063
        %v1065 = vlaneseq
        %v1066 = vshrl.u32 %v1065, 7
        %v1067 = vsub.s32 2, %v1066
        %v1068 = vrot.slane %v1055, %v1067
        %v1069 = vlaneseq
        %v1070 = vshrl.u32 %v1069, 7
        %v1071 = vsub.s32 3, %v1070
        %v1072 = vrot.slane %v1055, %v1071
        %v1073 = vlaneseq
        %v1074 = vshrl.u32 %v1073, 7
        %v1075 = vsub.s32 4, %v1074
        %v1076 = vrot.slane %v1055, %v1075
        %v1077 = vlaneseq
        %v1078 = vshrl.u32 %v1077, 7
        %v1079 = vsub.s32 5, %v1078
        %v1080 = vrot.slane %v1055, %v1079
        %v1081 = vlaneseq
        %v1082 = vshrl.u32 %v1081, 7
        %v1083 = vsub.s32 6, %v1082
        %v1084 = vrot.slane %v1055, %v1083
        %v1085 = vlaneseq
        %v1086 = vshrl.u32 %v1085, 7
        %v1087 = vsub.s32 7, %v1086
        %v1088 = vrot.slane %v1055, %v1087
        %v1098 = vcombine.high %v456, %v456
        %v1100 = vunpack.c.l.s4 1983009808
        %v1101 = vunpack.c.0.s8 %v1100
        %v1102 = vlaneseq
        %v1103 = vshrl.u32 %v1102, 7
        %v1104 = vsub.s32 %v1101, %v1103
        %v1105 = vrot.slane %v456, %v1104
        %v1107 = vunpack.c.l.s4 1983009808
        %v1108 = vunpack.c.0.s8 %v1107
        %v1109 = vlaneseq
        %v1110 = vshrl.u32 %v1109, 7
        %v1111 = vsub.s32 %v1108, %v1110
        %v1112 = vrot.slane %v1098, %v1111
        %v1113 = vcombine.high %v1105, %v1105
        %v1114 = vcombine.high %v1112, %v1112
        %1119 = vmatprep.subr.mxu0 %v544
        %1120 = vmatpush1.msra.mxu0 %v543
        %1121 = vmatprep.subr.mxu0 %v552
        %1122 = vmatpush1.msra.mxu0 %v551
        %1123 = vmatprep.subr.mxu0 %v560
        %1124 = vmatpush1.msra.mxu0 %v559
        %1125 = vmatprep.subr.mxu0 %v568
        %1126 = vmatpush1.msra.mxu0 %v567
        %1127 = vmatprep.subr.mxu0 %v576
        %1128 = vmatpush1.msra.mxu0 %v575
        %1129 = vmatprep.subr.mxu0 %v584
        %1130 = vmatpush1.msra.mxu0 %v583
        %1131 = vmatprep.subr.mxu0 %v592
        %1132 = vmatpush1.msra.mxu0 %v591
        %1133 = vmatprep.subr.mxu0 %v600
        %1134 = vmatpush1.msra.mxu0 %v599
        %1135 = vmatprep.subr.mxu0 %v608
        %1136 = vmatpush1.msra.mxu0 %v607
        %1137 = vmatprep.subr.mxu0 %v616
        %1138 = vmatpush1.msra.mxu0 %v615
        %1139 = vmatprep.subr.mxu0 %v624
        %1140 = vmatpush1.msra.mxu0 %v623
        %1141 = vmatprep.subr.mxu0 %v632
        %1142 = vmatpush1.msra.mxu0 %v631
        %1143 = vmatprep.subr.mxu0 %v640
        %1144 = vmatpush1.msra.mxu0 %v639
        %1145 = vmatprep.subr.mxu0 %v648
        %1146 = vmatpush1.msra.mxu0 %v647
        %1147 = vmatprep.subr.mxu0 %v656
        %1148 = vmatpush1.msra.mxu0 %v655
        %1149 = vmatprep.subr.mxu0 %v664
        %1150 = vmatpush1.msra.mxu0 %v663
        %1151 = vmatprep.subr.mxu0 %v672
        %1152 = vmatpush1.msra.mxu0 %v671
        %1153 = vmatprep.subr.mxu0 %v680
        %1154 = vmatpush1.msra.mxu0 %v679
        %1155 = vmatprep.subr.mxu0 %v688
        %1156 = vmatpush1.msra.mxu0 %v687
        %1157 = vmatprep.subr.mxu0 %v696
        %1158 = vmatpush1.msra.mxu0 %v695
        %1159 = vmatprep.subr.mxu0 %v704
        %1160 = vmatpush1.msra.mxu0 %v703
        %1161 = vmatprep.subr.mxu0 %v712
        %1162 = vmatpush1.msra.mxu0 %v711
        %1163 = vmatprep.subr.mxu0 %v720
        %1164 = vmatpush1.msra.mxu0 %v719
        %1165 = vmatprep.subr.mxu0 %v728
        %1166 = vmatpush1.msra.mxu0 %v727
        %1167 = vmatprep.subr.mxu0 %v736
        %1168 = vmatpush1.msra.mxu0 %v735
        %1169 = vmatprep.subr.mxu0 %v744
        %1170 = vmatpush1.msra.mxu0 %v743
        %1171 = vmatprep.subr.mxu0 %v752
        %1172 = vmatpush1.msra.mxu0 %v751
        %1173 = vmatprep.subr.mxu0 %v760
        %1174 = vmatpush1.msra.mxu0 %v759
        %1175 = vmatprep.subr.mxu0 %v768
        %1176 = vmatpush1.msra.mxu0 %v767
        %1177 = vmatprep.subr.mxu0 %v776
        %1178 = vmatpush1.msra.mxu0 %v775
        %1179 = vmatprep.subr.mxu0 %v784
        %1180 = vmatpush1.msra.mxu0 %v783
        %1181 = vmatprep.subr.mxu0 %v792
        %1182 = vmatpush1.msra.mxu0 %v791
        %1183 = vmatprep.mubr.f32.mxu0 %v1113
        %1184 = vmatmul.mubr.f32.gmra.mrb[0].mxu0 %v1105
        %v1185 = vpop.f32.mrb[0].mxu0
        %v1186 = vadd.f32 %v1060, %v1185
        %v1187 = vpop.f32.mrb[0].mxu0
        %v1188 = vadd.f32 %v1064, %v1187
        %1189 = vdwg.mxu0
        %1190 = vmatprep.subr.mxu0 %v800
        %1191 = vmatpush1.msra.mxu0 %v799
        %1192 = vmatprep.subr.mxu0 %v808
        %1193 = vmatpush1.msra.mxu0 %v807
        %1194 = vmatprep.subr.mxu0 %v816
        %1195 = vmatpush1.msra.mxu0 %v815
        %1196 = vmatprep.subr.mxu0 %v824
        %1197 = vmatpush1.msra.mxu0 %v823
        %1198 = vmatprep.subr.mxu0 %v832
        %1199 = vmatpush1.msra.mxu0 %v831
        %1200 = vmatprep.subr.mxu0 %v840
        %1201 = vmatpush1.msra.mxu0 %v839
        %1202 = vmatprep.subr.mxu0 %v848
        %1203 = vmatpush1.msra.mxu0 %v847
        %1204 = vmatprep.subr.mxu0 %v856
        %1205 = vmatpush1.msra.mxu0 %v855
        %1206 = vmatprep.subr.mxu0 %v864
        %1207 = vmatpush1.msra.mxu0 %v863
        %1208 = vmatprep.subr.mxu0 %v872
        %1209 = vmatpush1.msra.mxu0 %v871
        %1210 = vmatprep.subr.mxu0 %v880
        %1211 = vmatpush1.msra.mxu0 %v879
        %1212 = vmatprep.subr.mxu0 %v888
        %1213 = vmatpush1.msra.mxu0 %v887
        %1214 = vmatprep.subr.mxu0 %v896
        %1215 = vmatpush1.msra.mxu0 %v895
        %1216 = vmatprep.subr.mxu0 %v904
        %1217 = vmatpush1.msra.mxu0 %v903
        %1218 = vmatprep.subr.mxu0 %v912
        %1219 = vmatpush1.msra.mxu0 %v911
        %1220 = vmatprep.subr.mxu0 %v920
        %1221 = vmatpush1.msra.mxu0 %v919
        %1222 = vmatprep.subr.mxu0 %v928
        %1223 = vmatpush1.msra.mxu0 %v927
        %1224 = vmatprep.subr.mxu0 %v936
        %1225 = vmatpush1.msra.mxu0 %v935
        %1226 = vmatprep.subr.mxu0 %v944
        %1227 = vmatpush1.msra.mxu0 %v943
        %1228 = vmatprep.subr.mxu0 %v952
        %1229 = vmatpush1.msra.mxu0 %v951
        %1230 = vmatprep.subr.mxu0 %v960
        %1231 = vmatpush1.msra.mxu0 %v959
        %1232 = vmatprep.subr.mxu0 %v968
        %1233 = vmatpush1.msra.mxu0 %v967
        %1234 = vmatprep.subr.mxu0 %v976
        %1235 = vmatpush1.msra.mxu0 %v975
        %1236 = vmatprep.subr.mxu0 %v984
        %1237 = vmatpush1.msra.mxu0 %v983
        %1238 = vmatprep.subr.mxu0 %v992
        %1239 = vmatpush1.msra.mxu0 %v991
        %1240 = vmatprep.subr.mxu0 %v1000
        %1241 = vmatpush1.msra.mxu0 %v999
        %1242 = vmatprep.subr.mxu0 %v1008
        %1243 = vmatpush1.msra.mxu0 %v1007
        %1244 = vmatprep.subr.mxu0 %v1016
        %1245 = vmatpush1.msra.mxu0 %v1015
        %1246 = vmatprep.subr.mxu0 %v1024
        %1247 = vmatpush1.msra.mxu0 %v1023
        %1248 = vmatprep.subr.mxu0 %v1032
        %1249 = vmatpush1.msra.mxu0 %v1031
        %1250 = vmatprep.subr.mxu0 %v1040
        %1251 = vmatpush1.msra.mxu0 %v1039
        %1252 = vmatprep.subr.mxu0 %v1048
        %1253 = vmatpush1.msra.mxu0 %v1047
        %1254 = vmatprep.mubr.f32.mxu0 %v1114
        %1255 = vmatmul.mubr.f32.gmra.mrb[0].mxu0 %v1112
        %v1256 = vpop.f32.mrb[0].mxu0
        %v1257 = vadd.f32 %v1186, %v1256
        %v1258 = vpop.f32.mrb[0].mxu0
        %v1259 = vadd.f32 %v1188, %v1258
        %1260 = vdwg.mxu0
        %1261 = vmatprep.subr.mxu0 %v546
        %1262 = vmatpush1.msra.mxu0 %v545
        %1263 = vmatprep.subr.mxu0 %v554
        %1264 = vmatpush1.msra.mxu0 %v553
        %1265 = vmatprep.subr.mxu0 %v562
        %1266 = vmatpush1.msra.mxu0 %v561
        %1267 = vmatprep.subr.mxu0 %v570
        %1268 = vmatpush1.msra.mxu0 %v569
        %1269 = vmatprep.subr.mxu0 %v578
        %1270 = vmatpush1.msra.mxu0 %v577
        %1271 = vmatprep.subr.mxu0 %v586
        %1272 = vmatpush1.msra.mxu0 %v585
        %1273 = vmatprep.subr.mxu0 %v594
        %1274 = vmatpush1.msra.mxu0 %v593
        %1275 = vmatprep.subr.mxu0 %v602
        %1276 = vmatpush1.msra.mxu0 %v601
        %1277 = vmatprep.subr.mxu0 %v610
        %1278 = vmatpush1.msra.mxu0 %v609
        %1279 = vmatprep.subr.mxu0 %v618
        %1280 = vmatpush1.msra.mxu0 %v617
        %1281 = vmatprep.subr.mxu0 %v626
        %1282 = vmatpush1.msra.mxu0 %v625
        %1283 = vmatprep.subr.mxu0 %v634
        %1284 = vmatpush1.msra.mxu0 %v633
        %1285 = vmatprep.subr.mxu0 %v642
        %1286 = vmatpush1.msra.mxu0 %v641
        %1287 = vmatprep.subr.mxu0 %v650
        %1288 = vmatpush1.msra.mxu0 %v649
        %1289 = vmatprep.subr.mxu0 %v658
        %1290 = vmatpush1.msra.mxu0 %v657
        %1291 = vmatprep.subr.mxu0 %v666
        %1292 = vmatpush1.msra.mxu0 %v665
        %1293 = vmatprep.subr.mxu0 %v674
        %1294 = vmatpush1.msra.mxu0 %v673
        %1295 = vmatprep.subr.mxu0 %v682
        %1296 = vmatpush1.msra.mxu0 %v681
        %1297 = vmatprep.subr.mxu0 %v690
        %1298 = vmatpush1.msra.mxu0 %v689
        %1299 = vmatprep.subr.mxu0 %v698
        %1300 = vmatpush1.msra.mxu0 %v697
        %1301 = vmatprep.subr.mxu0 %v706
        %1302 = vmatpush1.msra.mxu0 %v705
        %1303 = vmatprep.subr.mxu0 %v714
        %1304 = vmatpush1.msra.mxu0 %v713
        %1305 = vmatprep.subr.mxu0 %v722
        %1306 = vmatpush1.msra.mxu0 %v721
        %1307 = vmatprep.subr.mxu0 %v730
        %1308 = vmatpush1.msra.mxu0 %v729
        %1309 = vmatprep.subr.mxu0 %v738
        %1310 = vmatpush1.msra.mxu0 %v737
        %1311 = vmatprep.subr.mxu0 %v746
        %1312 = vmatpush1.msra.mxu0 %v745
        %1313 = vmatprep.subr.mxu0 %v754
        %1314 = vmatpush1.msra.mxu0 %v753
        %1315 = vmatprep.subr.mxu0 %v762
        %1316 = vmatpush1.msra.mxu0 %v761
        %1317 = vmatprep.subr.mxu0 %v770
        %1318 = vmatpush1.msra.mxu0 %v769
        %1319 = vmatprep.subr.mxu0 %v778
        %1320 = vmatpush1.msra.mxu0 %v777
        %1321 = vmatprep.subr.mxu0 %v786
        %1322 = vmatpush1.msra.mxu0 %v785
        %1323 = vmatprep.subr.mxu0 %v794
        %1324 = vmatpush1.msra.mxu0 %v793
        %1325 = vmatprep.mubr.f32.mxu0 %v1113
        %1326 = vmatmul.mubr.f32.gmra.mrb[0].mxu0 %v1105
        %v1327 = vpop.f32.mrb[0].mxu0
        %v1328 = vadd.f32 %v1068, %v1327
        %v1329 = vpop.f32.mrb[0].mxu0
        %v1330 = vadd.f32 %v1072, %v1329
        %1331 = vdwg.mxu0
        %1332 = vmatprep.subr.mxu0 %v802
        %1333 = vmatpush1.msra.mxu0 %v801
        %1334 = vmatprep.subr.mxu0 %v810
        %1335 = vmatpush1.msra.mxu0 %v809
        %1336 = vmatprep.subr.mxu0 %v818
        %1337 = vmatpush1.msra.mxu0 %v817
        %1338 = vmatprep.subr.mxu0 %v826
        %1339 = vmatpush1.msra.mxu0 %v825
        %1340 = vmatprep.subr.mxu0 %v834
        %1341 = vmatpush1.msra.mxu0 %v833
        %1342 = vmatprep.subr.mxu0 %v842
        %1343 = vmatpush1.msra.mxu0 %v841
        %1344 = vmatprep.subr.mxu0 %v850
        %1345 = vmatpush1.msra.mxu0 %v849
        %1346 = vmatprep.subr.mxu0 %v858
        %1347 = vmatpush1.msra.mxu0 %v857
        %1348 = vmatprep.subr.mxu0 %v866
        %1349 = vmatpush1.msra.mxu0 %v865
        %1350 = vmatprep.subr.mxu0 %v874
        %1351 = vmatpush1.msra.mxu0 %v873
        %1352 = vmatprep.subr.mxu0 %v882
        %1353 = vmatpush1.msra.mxu0 %v881
        %1354 = vmatprep.subr.mxu0 %v890
        %1355 = vmatpush1.msra.mxu0 %v889
        %1356 = vmatprep.subr.mxu0 %v898
        %1357 = vmatpush1.msra.mxu0 %v897
        %1358 = vmatprep.subr.mxu0 %v906
        %1359 = vmatpush1.msra.mxu0 %v905
        %1360 = vmatprep.subr.mxu0 %v914
        %1361 = vmatpush1.msra.mxu0 %v913
        %1362 = vmatprep.subr.mxu0 %v922
        %1363 = vmatpush1.msra.mxu0 %v921
        %1364 = vmatprep.subr.mxu0 %v930
        %1365 = vmatpush1.msra.mxu0 %v929
        %1366 = vmatprep.subr.mxu0 %v938
        %1367 = vmatpush1.msra.mxu0 %v937
        %1368 = vmatprep.subr.mxu0 %v946
        %1369 = vmatpush1.msra.mxu0 %v945
        %1370 = vmatprep.subr.mxu0 %v954
        %1371 = vmatpush1.msra.mxu0 %v953
        %1372 = vmatprep.subr.mxu0 %v962
        %1373 = vmatpush1.msra.mxu0 %v961
        %1374 = vmatprep.subr.mxu0 %v970
        %1375 = vmatpush1.msra.mxu0 %v969
        %1376 = vmatprep.subr.mxu0 %v978
        %1377 = vmatpush1.msra.mxu0 %v977
        %1378 = vmatprep.subr.mxu0 %v986
        %1379 = vmatpush1.msra.mxu0 %v985
        %1380 = vmatprep.subr.mxu0 %v994
        %1381 = vmatpush1.msra.mxu0 %v993
        %1382 = vmatprep.subr.mxu0 %v1002
        %1383 = vmatpush1.msra.mxu0 %v1001
        %1384 = vmatprep.subr.mxu0 %v1010
        %1385 = vmatpush1.msra.mxu0 %v1009
        %1386 = vmatprep.subr.mxu0 %v1018
        %1387 = vmatpush1.msra.mxu0 %v1017
        %1388 = vmatprep.subr.mxu0 %v1026
        %1389 = vmatpush1.msra.mxu0 %v1025
        %1390 = vmatprep.subr.mxu0 %v1034
        %1391 = vmatpush1.msra.mxu0 %v1033
        %1392 = vmatprep.subr.mxu0 %v1042
        %1393 = vmatpush1.msra.mxu0 %v1041
        %1394 = vmatprep.subr.mxu0 %v1050
        %1395 = vmatpush1.msra.mxu0 %v1049
        %1396 = vmatprep.mubr.f32.mxu0 %v1114
        %1397 = vmatmul.mubr.f32.gmra.mrb[0].mxu0 %v1112
        %v1398 = vpop.f32.mrb[0].mxu0
        %v1399 = vadd.f32 %v1328, %v1398
        %v1400 = vpop.f32.mrb[0].mxu0
        %v1401 = vadd.f32 %v1330, %v1400
        %1402 = vdwg.mxu0
        %1403 = vmatprep.subr.mxu0 %v548
        %1404 = vmatpush1.msra.mxu0 %v547
        %1405 = vmatprep.subr.mxu0 %v556
        %1406 = vmatpush1.msra.mxu0 %v555
        %1407 = vmatprep.subr.mxu0 %v564
        %1408 = vmatpush1.msra.mxu0 %v563
        %1409 = vmatprep.subr.mxu0 %v572
        %1410 = vmatpush1.msra.mxu0 %v571
        %1411 = vmatprep.subr.mxu0 %v580
        %1412 = vmatpush1.msra.mxu0 %v579
        %1413 = vmatprep.subr.mxu0 %v588
        %1414 = vmatpush1.msra.mxu0 %v587
        %1415 = vmatprep.subr.mxu0 %v596
        %1416 = vmatpush1.msra.mxu0 %v595
        %1417 = vmatprep.subr.mxu0 %v604
        %1418 = vmatpush1.msra.mxu0 %v603
        %1419 = vmatprep.subr.mxu0 %v612
        %1420 = vmatpush1.msra.mxu0 %v611
        %1421 = vmatprep.subr.mxu0 %v620
        %1422 = vmatpush1.msra.mxu0 %v619
        %1423 = vmatprep.subr.mxu0 %v628
        %1424 = vmatpush1.msra.mxu0 %v627
        %1425 = vmatprep.subr.mxu0 %v636
        %1426 = vmatpush1.msra.mxu0 %v635
        %1427 = vmatprep.subr.mxu0 %v644
        %1428 = vmatpush1.msra.mxu0 %v643
        %1429 = vmatprep.subr.mxu0 %v652
        %1430 = vmatpush1.msra.mxu0 %v651
        %1431 = vmatprep.subr.mxu0 %v660
        %1432 = vmatpush1.msra.mxu0 %v659
        %1433 = vmatprep.subr.mxu0 %v668
        %1434 = vmatpush1.msra.mxu0 %v667
        %1435 = vmatprep.subr.mxu0 %v676
        %1436 = vmatpush1.msra.mxu0 %v675
        %1437 = vmatprep.subr.mxu0 %v684
        %1438 = vmatpush1.msra.mxu0 %v683
        %1439 = vmatprep.subr.mxu0 %v692
        %1440 = vmatpush1.msra.mxu0 %v691
        %1441 = vmatprep.subr.mxu0 %v700
        %1442 = vmatpush1.msra.mxu0 %v699
        %1443 = vmatprep.subr.mxu0 %v708
        %1444 = vmatpush1.msra.mxu0 %v707
        %1445 = vmatprep.subr.mxu0 %v716
        %1446 = vmatpush1.msra.mxu0 %v715
        %1447 = vmatprep.subr.mxu0 %v724
        %1448 = vmatpush1.msra.mxu0 %v723
        %1449 = vmatprep.subr.mxu0 %v732
        %1450 = vmatpush1.msra.mxu0 %v731
        %1451 = vmatprep.subr.mxu0 %v740
        %1452 = vmatpush1.msra.mxu0 %v739
        %1453 = vmatprep.subr.mxu0 %v748
        %1454 = vmatpush1.msra.mxu0 %v747
        %1455 = vmatprep.subr.mxu0 %v756
        %1456 = vmatpush1.msra.mxu0 %v755
        %1457 = vmatprep.subr.mxu0 %v764
        %1458 = vmatpush1.msra.mxu0 %v763
        %1459 = vmatprep.subr.mxu0 %v772
        %1460 = vmatpush1.msra.mxu0 %v771
        %1461 = vmatprep.subr.mxu0 %v780
        %1462 = vmatpush1.msra.mxu0 %v779
        %1463 = vmatprep.subr.mxu0 %v788
        %1464 = vmatpush1.msra.mxu0 %v787
        %1465 = vmatprep.subr.mxu0 %v796
        %1466 = vmatpush1.msra.mxu0 %v795
        %1467 = vmatprep.mubr.f32.mxu0 %v1113
        %1468 = vmatmul.mubr.f32.gmra.mrb[0].mxu0 %v1105
        %v1469 = vpop.f32.mrb[0].mxu0
        %v1470 = vadd.f32 %v1076, %v1469
        %v1471 = vpop.f32.mrb[0].mxu0
        %v1472 = vadd.f32 %v1080, %v1471
        %1473 = vdwg.mxu0
        %1474 = vmatprep.subr.mxu0 %v804
        %1475 = vmatpush1.msra.mxu0 %v803
        %1476 = vmatprep.subr.mxu0 %v812
        %1477 = vmatpush1.msra.mxu0 %v811
        %1478 = vmatprep.subr.mxu0 %v820
        %1479 = vmatpush1.msra.mxu0 %v819
        %1480 = vmatprep.subr.mxu0 %v828
        %1481 = vmatpush1.msra.mxu0 %v827
        %1482 = vmatprep.subr.mxu0 %v836
        %1483 = vmatpush1.msra.mxu0 %v835
        %1484 = vmatprep.subr.mxu0 %v844
        %1485 = vmatpush1.msra.mxu0 %v843
        %1486 = vmatprep.subr.mxu0 %v852
        %1487 = vmatpush1.msra.mxu0 %v851
        %1488 = vmatprep.subr.mxu0 %v860
        %1489 = vmatpush1.msra.mxu0 %v859
        %1490 = vmatprep.subr.mxu0 %v868
        %1491 = vmatpush1.msra.mxu0 %v867
        %1492 = vmatprep.subr.mxu0 %v876
        %1493 = vmatpush1.msra.mxu0 %v875
        %1494 = vmatprep.subr.mxu0 %v884
        %1495 = vmatpush1.msra.mxu0 %v883
        %1496 = vmatprep.subr.mxu0 %v892
        %1497 = vmatpush1.msra.mxu0 %v891
        %1498 = vmatprep.subr.mxu0 %v900
        %1499 = vmatpush1.msra.mxu0 %v899
        %1500 = vmatprep.subr.mxu0 %v908
        %1501 = vmatpush1.msra.mxu0 %v907
        %1502 = vmatprep.subr.mxu0 %v916
        %1503 = vmatpush1.msra.mxu0 %v915
        %1504 = vmatprep.subr.mxu0 %v924
        %1505 = vmatpush1.msra.mxu0 %v923
        %1506 = vmatprep.subr.mxu0 %v932
        %1507 = vmatpush1.msra.mxu0 %v931
        %1508 = vmatprep.subr.mxu0 %v940
        %1509 = vmatpush1.msra.mxu0 %v939
        %1510 = vmatprep.subr.mxu0 %v948
        %1511 = vmatpush1.msra.mxu0 %v947
        %1512 = vmatprep.subr.mxu0 %v956
        %1513 = vmatpush1.msra.mxu0 %v955
        %1514 = vmatprep.subr.mxu0 %v964
        %1515 = vmatpush1.msra.mxu0 %v963
        %1516 = vmatprep.subr.mxu0 %v972
        %1517 = vmatpush1.msra.mxu0 %v971
        %1518 = vmatprep.subr.mxu0 %v980
        %1519 = vmatpush1.msra.mxu0 %v979
        %1520 = vmatprep.subr.mxu0 %v988
        %1521 = vmatpush1.msra.mxu0 %v987
        %1522 = vmatprep.subr.mxu0 %v996
        %1523 = vmatpush1.msra.mxu0 %v995
        %1524 = vmatprep.subr.mxu0 %v1004
        %1525 = vmatpush1.msra.mxu0 %v1003
        %1526 = vmatprep.subr.mxu0 %v1012
        %1527 = vmatpush1.msra.mxu0 %v1011
        %1528 = vmatprep.subr.mxu0 %v1020
        %1529 = vmatpush1.msra.mxu0 %v1019
        %1530 = vmatprep.subr.mxu0 %v1028
        %1531 = vmatpush1.msra.mxu0 %v1027
        %1532 = vmatprep.subr.mxu0 %v1036
        %1533 = vmatpush1.msra.mxu0 %v1035
        %1534 = vmatprep.subr.mxu0 %v1044
        %1535 = vmatpush1.msra.mxu0 %v1043
        %1536 = vmatprep.subr.mxu0 %v1052
        %1537 = vmatpush1.msra.mxu0 %v1051
        %1538 = vmatprep.mubr.f32.mxu0 %v1114
        %1539 = vmatmul.mubr.f32.gmra.mrb[0].mxu0 %v1112
        %v1540 = vpop.f32.mrb[0].mxu0
        %v1541 = vadd.f32 %v1470, %v1540
        %v1542 = vpop.f32.mrb[0].mxu0
        %v1543 = vadd.f32 %v1472, %v1542
        %1544 = vdwg.mxu0
        %1545 = vmatprep.subr.mxu0 %v550
        %1546 = vmatpush1.msra.mxu0 %v549
        %1547 = vmatprep.subr.mxu0 %v558
        %1548 = vmatpush1.msra.mxu0 %v557
        %1549 = vmatprep.subr.mxu0 %v566
        %1550 = vmatpush1.msra.mxu0 %v565
        %1551 = vmatprep.subr.mxu0 %v574
        %1552 = vmatpush1.msra.mxu0 %v573
        %1553 = vmatprep.subr.mxu0 %v582
        %1554 = vmatpush1.msra.mxu0 %v581
        %1555 = vmatprep.subr.mxu0 %v590
        %1556 = vmatpush1.msra.mxu0 %v589
        %1557 = vmatprep.subr.mxu0 %v598
        %1558 = vmatpush1.msra.mxu0 %v597
        %1559 = vmatprep.subr.mxu0 %v606
        %1560 = vmatpush1.msra.mxu0 %v605
        %1561 = vmatprep.subr.mxu0 %v614
        %1562 = vmatpush1.msra.mxu0 %v613
        %1563 = vmatprep.subr.mxu0 %v622
        %1564 = vmatpush1.msra.mxu0 %v621
        %1565 = vmatprep.subr.mxu0 %v630
        %1566 = vmatpush1.msra.mxu0 %v629
        %1567 = vmatprep.subr.mxu0 %v638
        %1568 = vmatpush1.msra.mxu0 %v637
        %1569 = vmatprep.subr.mxu0 %v646
        %1570 = vmatpush1.msra.mxu0 %v645
        %1571 = vmatprep.subr.mxu0 %v654
        %1572 = vmatpush1.msra.mxu0 %v653
        %1573 = vmatprep.subr.mxu0 %v662
        %1574 = vmatpush1.msra.mxu0 %v661
        %1575 = vmatprep.subr.mxu0 %v670
        %1576 = vmatpush1.msra.mxu0 %v669
        %1577 = vmatprep.subr.mxu0 %v678
        %1578 = vmatpush1.msra.mxu0 %v677
        %1579 = vmatprep.subr.mxu0 %v686
        %1580 = vmatpush1.msra.mxu0 %v685
        %1581 = vmatprep.subr.mxu0 %v694
        %1582 = vmatpush1.msra.mxu0 %v693
        %1583 = vmatprep.subr.mxu0 %v702
        %1584 = vmatpush1.msra.mxu0 %v701
        %1585 = vmatprep.subr.mxu0 %v710
        %1586 = vmatpush1.msra.mxu0 %v709
        %1587 = vmatprep.subr.mxu0 %v718
        %1588 = vmatpush1.msra.mxu0 %v717
        %1589 = vmatprep.subr.mxu0 %v726
        %1590 = vmatpush1.msra.mxu0 %v725
        %1591 = vmatprep.subr.mxu0 %v734
        %1592 = vmatpush1.msra.mxu0 %v733
        %1593 = vmatprep.subr.mxu0 %v742
        %1594 = vmatpush1.msra.mxu0 %v741
        %1595 = vmatprep.subr.mxu0 %v750
        %1596 = vmatpush1.msra.mxu0 %v749
        %1597 = vmatprep.subr.mxu0 %v758
        %1598 = vmatpush1.msra.mxu0 %v757
        %1599 = vmatprep.subr.mxu0 %v766
        %1600 = vmatpush1.msra.mxu0 %v765
        %1601 = vmatprep.subr.mxu0 %v774
        %1602 = vmatpush1.msra.mxu0 %v773
        %1603 = vmatprep.subr.mxu0 %v782
        %1604 = vmatpush1.msra.mxu0 %v781
        %1605 = vmatprep.subr.mxu0 %v790
        %1606 = vmatpush1.msra.mxu0 %v789
        %1607 = vmatprep.subr.mxu0 %v798
        %1608 = vmatpush1.msra.mxu0 %v797
        %1609 = vmatprep.mubr.f32.mxu0 %v1113
        %1610 = vmatmul.mubr.f32.gmra.mrb[0].mxu0 %v1105
        %v1611 = vpop.f32.mrb[0].mxu0
        %v1612 = vadd.f32 %v1084, %v1611
        %v1613 = vpop.f32.mrb[0].mxu0
        %v1614 = vadd.f32 %v1088, %v1613
        %1615 = vdwg.mxu0
        %1616 = vmatprep.subr.mxu0 %v806
        %1617 = vmatpush1.msra.mxu0 %v805
        %1618 = vmatprep.subr.mxu0 %v814
        %1619 = vmatpush1.msra.mxu0 %v813
        %1620 = vmatprep.subr.mxu0 %v822
        %1621 = vmatpush1.msra.mxu0 %v821
        %1622 = vmatprep.subr.mxu0 %v830
        %1623 = vmatpush1.msra.mxu0 %v829
        %1624 = vmatprep.subr.mxu0 %v838
        %1625 = vmatpush1.msra.mxu0 %v837
        %1626 = vmatprep.subr.mxu0 %v846
        %1627 = vmatpush1.msra.mxu0 %v845
        %1628 = vmatprep.subr.mxu0 %v854
        %1629 = vmatpush1.msra.mxu0 %v853
        %1630 = vmatprep.subr.mxu0 %v862
        %1631 = vmatpush1.msra.mxu0 %v861
        %1632 = vmatprep.subr.mxu0 %v870
        %1633 = vmatpush1.msra.mxu0 %v869
        %1634 = vmatprep.subr.mxu0 %v878
        %1635 = vmatpush1.msra.mxu0 %v877
        %1636 = vmatprep.subr.mxu0 %v886
        %1637 = vmatpush1.msra.mxu0 %v885
        %1638 = vmatprep.subr.mxu0 %v894
        %1639 = vmatpush1.msra.mxu0 %v893
        %1640 = vmatprep.subr.mxu0 %v902
        %1641 = vmatpush1.msra.mxu0 %v901
        %1642 = vmatprep.subr.mxu0 %v910
        %1643 = vmatpush1.msra.mxu0 %v909
        %1644 = vmatprep.subr.mxu0 %v918
        %1645 = vmatpush1.msra.mxu0 %v917
        %1646 = vmatprep.subr.mxu0 %v926
        %1647 = vmatpush1.msra.mxu0 %v925
        %1648 = vmatprep.subr.mxu0 %v934
        %1649 = vmatpush1.msra.mxu0 %v933
        %1650 = vmatprep.subr.mxu0 %v942
        %1651 = vmatpush1.msra.mxu0 %v941
        %1652 = vmatprep.subr.mxu0 %v950
        %1653 = vmatpush1.msra.mxu0 %v949
        %1654 = vmatprep.subr.mxu0 %v958
        %1655 = vmatpush1.msra.mxu0 %v957
        %1656 = vmatprep.subr.mxu0 %v966
        %1657 = vmatpush1.msra.mxu0 %v965
        %1658 = vmatprep.subr.mxu0 %v974
        %1659 = vmatpush1.msra.mxu0 %v973
        %1660 = vmatprep.subr.mxu0 %v982
        %1661 = vmatpush1.msra.mxu0 %v981
        %1662 = vmatprep.subr.mxu0 %v990
        %1663 = vmatpush1.msra.mxu0 %v989
        %1664 = vmatprep.subr.mxu0 %v998
        %1665 = vmatpush1.msra.mxu0 %v997
        %1666 = vmatprep.subr.mxu0 %v1006
        %1667 = vmatpush1.msra.mxu0 %v1005
        %1668 = vmatprep.subr.mxu0 %v1014
        %1669 = vmatpush1.msra.mxu0 %v1013
        %1670 = vmatprep.subr.mxu0 %v1022
        %1671 = vmatpush1.msra.mxu0 %v1021
        %1672 = vmatprep.subr.mxu0 %v1030
        %1673 = vmatpush1.msra.mxu0 %v1029
        %1674 = vmatprep.subr.mxu0 %v1038
        %1675 = vmatpush1.msra.mxu0 %v1037
        %1676 = vmatprep.subr.mxu0 %v1046
        %1677 = vmatpush1.msra.mxu0 %v1045
        %1678 = vmatprep.subr.mxu0 %v1054
        %1679 = vmatpush1.msra.mxu0 %v1053
        %1680 = vmatprep.mubr.f32.mxu0 %v1114
        %1681 = vmatmul.mubr.f32.gmra.mrb[0].mxu0 %v1112
        %v1682 = vpop.f32.mrb[0].mxu0
        %v1683 = vadd.f32 %v1612, %v1682
        %v1684 = vpop.f32.mrb[0].mxu0
        %v1685 = vadd.f32 %v1614, %v1684
        %1686 = vdwg.mxu0
        %v1687 = vmax.f32 %v1257, 0.0
        %v1688 = vmax.f32 %v1259, 0.0
        %v1689 = vmax.f32 %v1399, 0.0
        %v1690 = vmax.f32 %v1401, 0.0
        %v1691 = vmax.f32 %v1541, 0.0
        %v1692 = vmax.f32 %v1543, 0.0
        %v1693 = vmax.f32 %v1683, 0.0
        %v1694 = vmax.f32 %v1685, 0.0
        %v1695 = vld [vmem:[%s6] sm:$0xff]
        %v1696 = vld [vmem:[%s6 + $0x8] sm:$0xff]
        %v1697 = vld [vmem:[%s6 + $0x10] sm:$0xff]
        %v1698 = vld [vmem:[%s6 + $0x18] sm:$0xff]
        %v1699 = vld [vmem:[%s6 + $0x20] sm:$0xff]
        %v1700 = vld [vmem:[%s6 + $0x28] sm:$0xff]
        %v1701 = vld [vmem:[%s6 + $0x30] sm:$0xff]
        %v1702 = vld [vmem:[%s6 + $0x38] sm:$0xff]
        %v1703 = vld [vmem:[%s6 + $0x40] sm:$0xff]
        %v1704 = vld [vmem:[%s6 + $0x48] sm:$0xff]
        %v1705 = vld [vmem:[%s6 + $0x50] sm:$0xff]
        %v1706 = vld [vmem:[%s6 + $0x58] sm:$0xff]
        %v1707 = vld [vmem:[%s6 + $0x60] sm:$0xff]
        %v1708 = vld [vmem:[%s6 + $0x68] sm:$0xff]
        %v1709 = vld [vmem:[%s6 + $0x70] sm:$0xff]
        %v1710 = vld [vmem:[%s6 + $0x78] sm:$0xff]
        %v1711 = vld [vmem:[%s6 + $0x80] sm:$0xff]
        %v1712 = vld [vmem:[%s6 + $0x88] sm:$0xff]
        %v1713 = vld [vmem:[%s6 + $0x90] sm:$0xff]
        %v1714 = vld [vmem:[%s6 + $0x98] sm:$0xff]
        %v1715 = vld [vmem:[%s6 + $0xa0] sm:$0xff]
        %v1716 = vld [vmem:[%s6 + $0xa8] sm:$0xff]
        %v1717 = vld [vmem:[%s6 + $0xb0] sm:$0xff]
        %v1718 = vld [vmem:[%s6 + $0xb8] sm:$0xff]
        %v1719 = vld [vmem:[%s6 + $0xc0] sm:$0xff]
        %v1720 = vld [vmem:[%s6 + $0xc8] sm:$0xff]
        %v1721 = vld [vmem:[%s6 + $0xd0] sm:$0xff]
        %v1722 = vld [vmem:[%s6 + $0xd8] sm:$0xff]
        %v1723 = vld [vmem:[%s6 + $0xe0] sm:$0xff]
        %v1724 = vld [vmem:[%s6 + $0xe8] sm:$0xff]
        %v1725 = vld [vmem:[%s6 + $0xf0] sm:$0xff]
        %v1726 = vld [vmem:[%s6 + $0xf8] sm:$0xff]
        %v1728 = vsel %vm469, %v540, 0
        %1730 = vmatprep.subr.mxu0 %v1696
        %1731 = vmatpush1.msra.mxu0 %v1695
        %1732 = vmatprep.subr.mxu0 %v1704
        %1733 = vmatpush1.msra.mxu0 %v1703
        %1734 = vmatprep.subr.mxu0 %v1712
        %1735 = vmatpush1.msra.mxu0 %v1711
        %1736 = vmatprep.subr.mxu0 %v1720
        %1737 = vmatpush1.msra.mxu0 %v1719
        %1738 = vmatprep.subr.mxu0 0.0
        %1739 = vmatpush1.msra.mxu0 0.0
        %1740 = vmatprep.subr.mxu0 0.0
        %1741 = vmatpush1.msra.mxu0 0.0
        %1742 = vmatprep.subr.mxu0 0.0
        %1743 = vmatpush1.msra.mxu0 0.0
        %1744 = vmatprep.subr.mxu0 0.0
        %1745 = vmatpush1.msra.mxu0 0.0
        %1746 = vmatprep.subr.mxu0 0.0
        %1747 = vmatpush1.msra.mxu0 0.0
        %1748 = vmatprep.subr.mxu0 0.0
        %1749 = vmatpush1.msra.mxu0 0.0
        %1750 = vmatprep.subr.mxu0 0.0
        %1751 = vmatpush1.msra.mxu0 0.0
        %1752 = vmatprep.subr.mxu0 0.0
        %1753 = vmatpush1.msra.mxu0 0.0
        %1754 = vmatprep.subr.mxu0 0.0
        %1755 = vmatpush1.msra.mxu0 0.0
        %1756 = vmatprep.subr.mxu0 0.0
        %1757 = vmatpush1.msra.mxu0 0.0
        %1758 = vmatprep.subr.mxu0 0.0
        %1759 = vmatpush1.msra.mxu0 0.0
        %1760 = vmatprep.subr.mxu0 0.0
        %1761 = vmatpush1.msra.mxu0 0.0
        %1762 = vmatprep.subr.mxu0 0.0
        %1763 = vmatpush1.msra.mxu0 0.0
        %1764 = vmatprep.subr.mxu0 0.0
        %1765 = vmatpush1.msra.mxu0 0.0
        %1766 = vmatprep.subr.mxu0 0.0
        %1767 = vmatpush1.msra.mxu0 0.0
        %1768 = vmatprep.subr.mxu0 0.0
        %1769 = vmatpush1.msra.mxu0 0.0
        %1770 = vmatprep.subr.mxu0 0.0
        %1771 = vmatpush1.msra.mxu0 0.0
        %1772 = vmatprep.subr.mxu0 0.0
        %1773 = vmatpush1.msra.mxu0 0.0
        %1774 = vmatprep.subr.mxu0 0.0
        %1775 = vmatpush1.msra.mxu0 0.0
        %1776 = vmatprep.subr.mxu0 0.0
        %1777 = vmatpush1.msra.mxu0 0.0
        %1778 = vmatprep.subr.mxu0 0.0
        %1779 = vmatpush1.msra.mxu0 0.0
        %1780 = vmatprep.subr.mxu0 0.0
        %1781 = vmatpush1.msra.mxu0 0.0
        %1782 = vmatprep.subr.mxu0 0.0
        %1783 = vmatpush1.msra.mxu0 0.0
        %1784 = vmatprep.subr.mxu0 0.0
        %1785 = vmatpush1.msra.mxu0 0.0
        %1786 = vmatprep.subr.mxu0 0.0
        %1787 = vmatpush1.msra.mxu0 0.0
        %1788 = vmatprep.subr.mxu0 0.0
        %1789 = vmatpush1.msra.mxu0 0.0
        %1790 = vmatprep.subr.mxu0 0.0
        %1791 = vmatpush1.msra.mxu0 0.0
        %1792 = vmatprep.subr.mxu0 0.0
        %1793 = vmatpush1.msra.mxu0 0.0
        %1794 = vmatprep.mubr.f32.mxu0 0.0
        %1795 = vmatmul.mubr.f32.gmra.mrb[0].mxu0 %v1728
        %v1796 = vpop.f32.mrb[0].mxu0
        %v1797 = vadd.f32 0.0, %v1796
        %v1798 = vpop.f32.mrb[0].mxu0
        %v1799 = vadd.f32 0.0, %v1798
        %1800 = vdwg.mxu0
        %1801 = vmatprep.subr.mxu0 %v1698
        %1802 = vmatpush1.msra.mxu0 %v1697
        %1803 = vmatprep.subr.mxu0 %v1706
        %1804 = vmatpush1.msra.mxu0 %v1705
        %1805 = vmatprep.subr.mxu0 %v1714
        %1806 = vmatpush1.msra.mxu0 %v1713
        %1807 = vmatprep.subr.mxu0 %v1722
        %1808 = vmatpush1.msra.mxu0 %v1721
        %1809 = vmatprep.subr.mxu0 0.0
        %1810 = vmatpush1.msra.mxu0 0.0
        %1811 = vmatprep.subr.mxu0 0.0
        %1812 = vmatpush1.msra.mxu0 0.0
        %1813 = vmatprep.subr.mxu0 0.0
        %1814 = vmatpush1.msra.mxu0 0.0
        %1815 = vmatprep.subr.mxu0 0.0
        %1816 = vmatpush1.msra.mxu0 0.0
        %1817 = vmatprep.subr.mxu0 0.0
        %1818 = vmatpush1.msra.mxu0 0.0
        %1819 = vmatprep.subr.mxu0 0.0
        %1820 = vmatpush1.msra.mxu0 0.0
        %1821 = vmatprep.subr.mxu0 0.0
        %1822 = vmatpush1.msra.mxu0 0.0
        %1823 = vmatprep.subr.mxu0 0.0
        %1824 = vmatpush1.msra.mxu0 0.0
        %1825 = vmatprep.subr.mxu0 0.0
        %1826 = vmatpush1.msra.mxu0 0.0
        %1827 = vmatprep.subr.mxu0 0.0
        %1828 = vmatpush1.msra.mxu0 0.0
        %1829 = vmatprep.subr.mxu0 0.0
        %1830 = vmatpush1.msra.mxu0 0.0
        %1831 = vmatprep.subr.mxu0 0.0
        %1832 = vmatpush1.msra.mxu0 0.0
        %1833 = vmatprep.subr.mxu0 0.0
        %1834 = vmatpush1.msra.mxu0 0.0
        %1835 = vmatprep.subr.mxu0 0.0
        %1836 = vmatpush1.msra.mxu0 0.0
        %1837 = vmatprep.subr.mxu0 0.0
        %1838 = vmatpush1.msra.mxu0 0.0
        %1839 = vmatprep.subr.mxu0 0.0
        %1840 = vmatpush1.msra.mxu0 0.0
        %1841 = vmatprep.subr.mxu0 0.0
        %1842 = vmatpush1.msra.mxu0 0.0
        %1843 = vmatprep.subr.mxu0 0.0
        %1844 = vmatpush1.msra.mxu0 0.0
        %1845 = vmatprep.subr.mxu0 0.0
        %1846 = vmatpush1.msra.mxu0 0.0
        %1847 = vmatprep.subr.mxu0 0.0
        %1848 = vmatpush1.msra.mxu0 0.0
        %1849 = vmatprep.subr.mxu0 0.0
        %1850 = vmatpush1.msra.mxu0 0.0
        %1851 = vmatprep.subr.mxu0 0.0
        %1852 = vmatpush1.msra.mxu0 0.0
        %1853 = vmatprep.subr.mxu0 0.0
        %1854 = vmatpush1.msra.mxu0 0.0
        %1855 = vmatprep.subr.mxu0 0.0
        %1856 = vmatpush1.msra.mxu0 0.0
        %1857 = vmatprep.subr.mxu0 0.0
        %1858 = vmatpush1.msra.mxu0 0.0
        %1859 = vmatprep.subr.mxu0 0.0
        %1860 = vmatpush1.msra.mxu0 0.0
        %1861 = vmatprep.subr.mxu0 0.0
        %1862 = vmatpush1.msra.mxu0 0.0
        %1863 = vmatprep.subr.mxu0 0.0
        %1864 = vmatpush1.msra.mxu0 0.0
        %1865 = vmatprep.mubr.f32.mxu0 0.0
        %1866 = vmatmul.mubr.f32.gmra.mrb[0].mxu0 %v1728
        %v1867 = vpop.f32.mrb[0].mxu0
        %v1868 = vadd.f32 0.0, %v1867
        %v1869 = vpop.f32.mrb[0].mxu0
        %v1870 = vadd.f32 0.0, %v1869
        %1871 = vdwg.mxu0
        %1872 = vmatprep.subr.mxu0 %v1700
        %1873 = vmatpush1.msra.mxu0 %v1699
        %1874 = vmatprep.subr.mxu0 %v1708
        %1875 = vmatpush1.msra.mxu0 %v1707
        %1876 = vmatprep.subr.mxu0 %v1716
        %1877 = vmatpush1.msra.mxu0 %v1715
        %1878 = vmatprep.subr.mxu0 %v1724
        %1879 = vmatpush1.msra.mxu0 %v1723
        %1880 = vmatprep.subr.mxu0 0.0
        %1881 = vmatpush1.msra.mxu0 0.0
        %1882 = vmatprep.subr.mxu0 0.0
        %1883 = vmatpush1.msra.mxu0 0.0
        %1884 = vmatprep.subr.mxu0 0.0
        %1885 = vmatpush1.msra.mxu0 0.0
        %1886 = vmatprep.subr.mxu0 0.0
        %1887 = vmatpush1.msra.mxu0 0.0
        %1888 = vmatprep.subr.mxu0 0.0
        %1889 = vmatpush1.msra.mxu0 0.0
        %1890 = vmatprep.subr.mxu0 0.0
        %1891 = vmatpush1.msra.mxu0 0.0
        %1892 = vmatprep.subr.mxu0 0.0
        %1893 = vmatpush1.msra.mxu0 0.0
        %1894 = vmatprep.subr.mxu0 0.0
        %1895 = vmatpush1.msra.mxu0 0.0
        %1896 = vmatprep.subr.mxu0 0.0
        %1897 = vmatpush1.msra.mxu0 0.0
        %1898 = vmatprep.subr.mxu0 0.0
        %1899 = vmatpush1.msra.mxu0 0.0
        %1900 = vmatprep.subr.mxu0 0.0
        %1901 = vmatpush1.msra.mxu0 0.0
        %1902 = vmatprep.subr.mxu0 0.0
        %1903 = vmatpush1.msra.mxu0 0.0
        %1904 = vmatprep.subr.mxu0 0.0
        %1905 = vmatpush1.msra.mxu0 0.0
        %1906 = vmatprep.subr.mxu0 0.0
        %1907 = vmatpush1.msra.mxu0 0.0
        %1908 = vmatprep.subr.mxu0 0.0
        %1909 = vmatpush1.msra.mxu0 0.0
        %1910 = vmatprep.subr.mxu0 0.0
        %1911 = vmatpush1.msra.mxu0 0.0
        %1912 = vmatprep.subr.mxu0 0.0
        %1913 = vmatpush1.msra.mxu0 0.0
        %1914 = vmatprep.subr.mxu0 0.0
        %1915 = vmatpush1.msra.mxu0 0.0
        %1916 = vmatprep.subr.mxu0 0.0
        %1917 = vmatpush1.msra.mxu0 0.0
        %1918 = vmatprep.subr.mxu0 0.0
        %1919 = vmatpush1.msra.mxu0 0.0
        %1920 = vmatprep.subr.mxu0 0.0
        %1921 = vmatpush1.msra.mxu0 0.0
        %1922 = vmatprep.subr.mxu0 0.0
        %1923 = vmatpush1.msra.mxu0 0.0
        %1924 = vmatprep.subr.mxu0 0.0
        %1925 = vmatpush1.msra.mxu0 0.0
        %1926 = vmatprep.subr.mxu0 0.0
        %1927 = vmatpush1.msra.mxu0 0.0
        %1928 = vmatprep.subr.mxu0 0.0
        %1929 = vmatpush1.msra.mxu0 0.0
        %1930 = vmatprep.subr.mxu0 0.0
        %1931 = vmatpush1.msra.mxu0 0.0
        %1932 = vmatprep.subr.mxu0 0.0
        %1933 = vmatpush1.msra.mxu0 0.0
        %1934 = vmatprep.subr.mxu0 0.0
        %1935 = vmatpush1.msra.mxu0 0.0
        %1936 = vmatprep.mubr.f32.mxu0 0.0
        %1937 = vmatmul.mubr.f32.gmra.mrb[0].mxu0 %v1728
        %v1938 = vpop.f32.mrb[0].mxu0
        %v1939 = vadd.f32 0.0, %v1938
        %v1940 = vpop.f32.mrb[0].mxu0
        %v1941 = vadd.f32 0.0, %v1940
        %1942 = vdwg.mxu0
        %1943 = vmatprep.subr.mxu0 %v1702
        %1944 = vmatpush1.msra.mxu0 %v1701
        %1945 = vmatprep.subr.mxu0 %v1710
        %1946 = vmatpush1.msra.mxu0 %v1709
        %1947 = vmatprep.subr.mxu0 %v1718
        %1948 = vmatpush1.msra.mxu0 %v1717
        %1949 = vmatprep.subr.mxu0 %v1726
        %1950 = vmatpush1.msra.mxu0 %v1725
        %1951 = vmatprep.subr.mxu0 0.0
        %1952 = vmatpush1.msra.mxu0 0.0
        %1953 = vmatprep.subr.mxu0 0.0
        %1954 = vmatpush1.msra.mxu0 0.0
        %1955 = vmatprep.subr.mxu0 0.0
        %1956 = vmatpush1.msra.mxu0 0.0
        %1957 = vmatprep.subr.mxu0 0.0
        %1958 = vmatpush1.msra.mxu0 0.0
        %1959 = vmatprep.subr.mxu0 0.0
        %1960 = vmatpush1.msra.mxu0 0.0
        %1961 = vmatprep.subr.mxu0 0.0
        %1962 = vmatpush1.msra.mxu0 0.0
        %1963 = vmatprep.subr.mxu0 0.0
        %1964 = vmatpush1.msra.mxu0 0.0
        %1965 = vmatprep.subr.mxu0 0.0
        %1966 = vmatpush1.msra.mxu0 0.0
        %1967 = vmatprep.subr.mxu0 0.0
        %1968 = vmatpush1.msra.mxu0 0.0
        %1969 = vmatprep.subr.mxu0 0.0
        %1970 = vmatpush1.msra.mxu0 0.0
        %1971 = vmatprep.subr.mxu0 0.0
        %1972 = vmatpush1.msra.mxu0 0.0
        %1973 = vmatprep.subr.mxu0 0.0
        %1974 = vmatpush1.msra.mxu0 0.0
        %1975 = vmatprep.subr.mxu0 0.0
        %1976 = vmatpush1.msra.mxu0 0.0
        %1977 = vmatprep.subr.mxu0 0.0
        %1978 = vmatpush1.msra.mxu0 0.0
        %1979 = vmatprep.subr.mxu0 0.0
        %1980 = vmatpush1.msra.mxu0 0.0
        %1981 = vmatprep.subr.mxu0 0.0
        %1982 = vmatpush1.msra.mxu0 0.0
        %1983 = vmatprep.subr.mxu0 0.0
        %1984 = vmatpush1.msra.mxu0 0.0
        %1985 = vmatprep.subr.mxu0 0.0
        %1986 = vmatpush1.msra.mxu0 0.0
        %1987 = vmatprep.subr.mxu0 0.0
        %1988 = vmatpush1.msra.mxu0 0.0
        %1989 = vmatprep.subr.mxu0 0.0
        %1990 = vmatpush1.msra.mxu0 0.0
        %1991 = vmatprep.subr.mxu0 0.0
        %1992 = vmatpush1.msra.mxu0 0.0
        %1993 = vmatprep.subr.mxu0 0.0
        %1994 = vmatpush1.msra.mxu0 0.0
        %1995 = vmatprep.subr.mxu0 0.0
        %1996 = vmatpush1.msra.mxu0 0.0
        %1997 = vmatprep.subr.mxu0 0.0
        %1998 = vmatpush1.msra.mxu0 0.0
        %1999 = vmatprep.subr.mxu0 0.0
        %2000 = vmatpush1.msra.mxu0 0.0
        %2001 = vmatprep.subr.mxu0 0.0
        %2002 = vmatpush1.msra.mxu0 0.0
        %2003 = vmatprep.subr.mxu0 0.0
        %2004 = vmatpush1.msra.mxu0 0.0
        %2005 = vmatprep.subr.mxu0 0.0
        %2006 = vmatpush1.msra.mxu0 0.0
        %2007 = vmatprep.mubr.f32.mxu0 0.0
        %2008 = vmatmul.mubr.f32.gmra.mrb[0].mxu0 %v1728
        %v2009 = vpop.f32.mrb[0].mxu0
        %v2010 = vadd.f32 0.0, %v2009
        %v2011 = vpop.f32.mrb[0].mxu0
        %v2012 = vadd.f32 0.0, %v2011
        %2013 = vdwg.mxu0
        %v2014 = vmul.f32 %v1687, %v1797
        %v2015 = vmul.f32 %v1688, %v1799
        %v2016 = vmul.f32 %v1689, %v1868
        %v2017 = vmul.f32 %v1690, %v1870
        %v2018 = vmul.f32 %v1691, %v1939
        %v2019 = vmul.f32 %v1692, %v1941
        %v2020 = vmul.f32 %v1693, %v2010
        %v2021 = vmul.f32 %v1694, %v2012
        %v2022 = vld [vmem:[%s7] sm:$0xff]
        %v2023 = vld [vmem:[%s7 + $0x8] sm:$0xff]
        %v2024 = vld [vmem:[%s7 + $0x10] sm:$0xff]
        %v2025 = vld [vmem:[%s7 + $0x18] sm:$0xff]
        %v2026 = vld [vmem:[%s7 + $0x20] sm:$0xff]
        %v2027 = vld [vmem:[%s7 + $0x28] sm:$0xff]
        %v2028 = vld [vmem:[%s7 + $0x30] sm:$0xff]
        %v2029 = vld [vmem:[%s7 + $0x38] sm:$0xff]
        %v2030 = vld [vmem:[%s7 + $0x40] sm:$0xff]
        %v2031 = vld [vmem:[%s7 + $0x48] sm:$0xff]
        %v2032 = vld [vmem:[%s7 + $0x50] sm:$0xff]
        %v2033 = vld [vmem:[%s7 + $0x58] sm:$0xff]
        %v2034 = vld [vmem:[%s7 + $0x60] sm:$0xff]
        %v2035 = vld [vmem:[%s7 + $0x68] sm:$0xff]
        %v2036 = vld [vmem:[%s7 + $0x70] sm:$0xff]
        %v2037 = vld [vmem:[%s7 + $0x78] sm:$0xff]
        %v2038 = vld [vmem:[%s7 + $0x80] sm:$0xff]
        %v2039 = vld [vmem:[%s7 + $0x88] sm:$0xff]
        %v2040 = vld [vmem:[%s7 + $0x90] sm:$0xff]
        %v2041 = vld [vmem:[%s7 + $0x98] sm:$0xff]
        %v2042 = vld [vmem:[%s7 + $0xa0] sm:$0xff]
        %v2043 = vld [vmem:[%s7 + $0xa8] sm:$0xff]
        %v2044 = vld [vmem:[%s7 + $0xb0] sm:$0xff]
        %v2045 = vld [vmem:[%s7 + $0xb8] sm:$0xff]
        %v2046 = vld [vmem:[%s7 + $0xc0] sm:$0xff]
        %v2047 = vld [vmem:[%s7 + $0xc8] sm:$0xff]
        %v2048 = vld [vmem:[%s7 + $0xd0] sm:$0xff]
        %v2049 = vld [vmem:[%s7 + $0xd8] sm:$0xff]
        %v2050 = vld [vmem:[%s7 + $0xe0] sm:$0xff]
        %v2051 = vld [vmem:[%s7 + $0xe8] sm:$0xff]
        %v2052 = vld [vmem:[%s7 + $0xf0] sm:$0xff]
        %v2053 = vld [vmem:[%s7 + $0xf8] sm:$0xff]
        %v2054 = vld [vmem:[%s7 + $0x100] sm:$0xff]
        %v2055 = vld [vmem:[%s7 + $0x108] sm:$0xff]
        %v2056 = vld [vmem:[%s7 + $0x110] sm:$0xff]
        %v2057 = vld [vmem:[%s7 + $0x118] sm:$0xff]
        %v2058 = vld [vmem:[%s7 + $0x120] sm:$0xff]
        %v2059 = vld [vmem:[%s7 + $0x128] sm:$0xff]
        %v2060 = vld [vmem:[%s7 + $0x130] sm:$0xff]
        %v2061 = vld [vmem:[%s7 + $0x138] sm:$0xff]
        %v2062 = vld [vmem:[%s7 + $0x140] sm:$0xff]
        %v2063 = vld [vmem:[%s7 + $0x148] sm:$0xff]
        %v2064 = vld [vmem:[%s7 + $0x150] sm:$0xff]
        %v2065 = vld [vmem:[%s7 + $0x158] sm:$0xff]
        %v2066 = vld [vmem:[%s7 + $0x160] sm:$0xff]
        %v2067 = vld [vmem:[%s7 + $0x168] sm:$0xff]
        %v2068 = vld [vmem:[%s7 + $0x170] sm:$0xff]
        %v2069 = vld [vmem:[%s7 + $0x178] sm:$0xff]
        %v2070 = vld [vmem:[%s7 + $0x180] sm:$0xff]
        %v2071 = vld [vmem:[%s7 + $0x188] sm:$0xff]
        %v2072 = vld [vmem:[%s7 + $0x190] sm:$0xff]
        %v2073 = vld [vmem:[%s7 + $0x198] sm:$0xff]
        %v2074 = vld [vmem:[%s7 + $0x1a0] sm:$0xff]
        %v2075 = vld [vmem:[%s7 + $0x1a8] sm:$0xff]
        %v2076 = vld [vmem:[%s7 + $0x1b0] sm:$0xff]
        %v2077 = vld [vmem:[%s7 + $0x1b8] sm:$0xff]
        %v2078 = vld [vmem:[%s7 + $0x1c0] sm:$0xff]
        %v2079 = vld [vmem:[%s7 + $0x1c8] sm:$0xff]
        %v2080 = vld [vmem:[%s7 + $0x1d0] sm:$0xff]
        %v2081 = vld [vmem:[%s7 + $0x1d8] sm:$0xff]
        %v2082 = vld [vmem:[%s7 + $0x1e0] sm:$0xff]
        %v2083 = vld [vmem:[%s7 + $0x1e8] sm:$0xff]
        %v2084 = vld [vmem:[%s7 + $0x1f0] sm:$0xff]
        %v2085 = vld [vmem:[%s7 + $0x1f8] sm:$0xff]
        %v2086 = vld [vmem:[%s7 + $0x200] sm:$0xff]
        %v2087 = vld [vmem:[%s7 + $0x208] sm:$0xff]
        %v2088 = vld [vmem:[%s7 + $0x210] sm:$0xff]
        %v2089 = vld [vmem:[%s7 + $0x218] sm:$0xff]
        %v2090 = vld [vmem:[%s7 + $0x220] sm:$0xff]
        %v2091 = vld [vmem:[%s7 + $0x228] sm:$0xff]
        %v2092 = vld [vmem:[%s7 + $0x230] sm:$0xff]
        %v2093 = vld [vmem:[%s7 + $0x238] sm:$0xff]
        %v2094 = vld [vmem:[%s7 + $0x240] sm:$0xff]
        %v2095 = vld [vmem:[%s7 + $0x248] sm:$0xff]
        %v2096 = vld [vmem:[%s7 + $0x250] sm:$0xff]
        %v2097 = vld [vmem:[%s7 + $0x258] sm:$0xff]
        %v2098 = vld [vmem:[%s7 + $0x260] sm:$0xff]
        %v2099 = vld [vmem:[%s7 + $0x268] sm:$0xff]
        %v2100 = vld [vmem:[%s7 + $0x270] sm:$0xff]
        %v2101 = vld [vmem:[%s7 + $0x278] sm:$0xff]
        %v2102 = vld [vmem:[%s7 + $0x280] sm:$0xff]
        %v2103 = vld [vmem:[%s7 + $0x288] sm:$0xff]
        %v2104 = vld [vmem:[%s7 + $0x290] sm:$0xff]
        %v2105 = vld [vmem:[%s7 + $0x298] sm:$0xff]
        %v2106 = vld [vmem:[%s7 + $0x2a0] sm:$0xff]
        %v2107 = vld [vmem:[%s7 + $0x2a8] sm:$0xff]
        %v2108 = vld [vmem:[%s7 + $0x2b0] sm:$0xff]
        %v2109 = vld [vmem:[%s7 + $0x2b8] sm:$0xff]
        %v2110 = vld [vmem:[%s7 + $0x2c0] sm:$0xff]
        %v2111 = vld [vmem:[%s7 + $0x2c8] sm:$0xff]
        %v2112 = vld [vmem:[%s7 + $0x2d0] sm:$0xff]
        %v2113 = vld [vmem:[%s7 + $0x2d8] sm:$0xff]
        %v2114 = vld [vmem:[%s7 + $0x2e0] sm:$0xff]
        %v2115 = vld [vmem:[%s7 + $0x2e8] sm:$0xff]
        %v2116 = vld [vmem:[%s7 + $0x2f0] sm:$0xff]
        %v2117 = vld [vmem:[%s7 + $0x2f8] sm:$0xff]
        %v2118 = vld [vmem:[%s7 + $0x300] sm:$0xff]
        %v2119 = vld [vmem:[%s7 + $0x308] sm:$0xff]
        %v2120 = vld [vmem:[%s7 + $0x310] sm:$0xff]
        %v2121 = vld [vmem:[%s7 + $0x318] sm:$0xff]
        %v2122 = vld [vmem:[%s7 + $0x320] sm:$0xff]
        %v2123 = vld [vmem:[%s7 + $0x328] sm:$0xff]
        %v2124 = vld [vmem:[%s7 + $0x330] sm:$0xff]
        %v2125 = vld [vmem:[%s7 + $0x338] sm:$0xff]
        %v2126 = vld [vmem:[%s7 + $0x340] sm:$0xff]
        %v2127 = vld [vmem:[%s7 + $0x348] sm:$0xff]
        %v2128 = vld [vmem:[%s7 + $0x350] sm:$0xff]
        %v2129 = vld [vmem:[%s7 + $0x358] sm:$0xff]
        %v2130 = vld [vmem:[%s7 + $0x360] sm:$0xff]
        %v2131 = vld [vmem:[%s7 + $0x368] sm:$0xff]
        %v2132 = vld [vmem:[%s7 + $0x370] sm:$0xff]
        %v2133 = vld [vmem:[%s7 + $0x378] sm:$0xff]
        %v2134 = vld [vmem:[%s7 + $0x380] sm:$0xff]
        %v2135 = vld [vmem:[%s7 + $0x388] sm:$0xff]
        %v2136 = vld [vmem:[%s7 + $0x390] sm:$0xff]
        %v2137 = vld [vmem:[%s7 + $0x398] sm:$0xff]
        %v2138 = vld [vmem:[%s7 + $0x3a0] sm:$0xff]
        %v2139 = vld [vmem:[%s7 + $0x3a8] sm:$0xff]
        %v2140 = vld [vmem:[%s7 + $0x3b0] sm:$0xff]
        %v2141 = vld [vmem:[%s7 + $0x3b8] sm:$0xff]
        %v2142 = vld [vmem:[%s7 + $0x3c0] sm:$0xff]
        %v2143 = vld [vmem:[%s7 + $0x3c8] sm:$0xff]
        %v2144 = vld [vmem:[%s7 + $0x3d0] sm:$0xff]
        %v2145 = vld [vmem:[%s7 + $0x3d8] sm:$0xff]
        %v2146 = vld [vmem:[%s7 + $0x3e0] sm:$0xff]
        %v2147 = vld [vmem:[%s7 + $0x3e8] sm:$0xff]
        %v2148 = vld [vmem:[%s7 + $0x3f0] sm:$0xff]
        %v2149 = vld [vmem:[%s7 + $0x3f8] sm:$0xff]
        %2150 = vmatprep.subr.mxu0 0.0
        %2151 = vmatpush1.msra.mxu0 %v2022
        %2152 = vmatprep.subr.mxu0 0.0
        %2153 = vmatpush1.msra.mxu0 %v2023
        %2154 = vmatprep.subr.mxu0 0.0
        %2155 = vmatpush1.msra.mxu0 %v2024
        %2156 = vmatprep.subr.mxu0 0.0
        %2157 = vmatpush1.msra.mxu0 %v2025
        %2158 = vmatprep.subr.mxu0 0.0
        %2159 = vmatpush1.msra.mxu0 %v2026
        %2160 = vmatprep.subr.mxu0 0.0
        %2161 = vmatpush1.msra.mxu0 %v2027
        %2162 = vmatprep.subr.mxu0 0.0
        %2163 = vmatpush1.msra.mxu0 %v2028
        %2164 = vmatprep.subr.mxu0 0.0
        %2165 = vmatpush1.msra.mxu0 %v2029
        %2166 = vmatprep.subr.mxu0 0.0
        %2167 = vmatpush1.msra.mxu0 %v2030
        %2168 = vmatprep.subr.mxu0 0.0
        %2169 = vmatpush1.msra.mxu0 %v2031
        %2170 = vmatprep.subr.mxu0 0.0
        %2171 = vmatpush1.msra.mxu0 %v2032
        %2172 = vmatprep.subr.mxu0 0.0
        %2173 = vmatpush1.msra.mxu0 %v2033
        %2174 = vmatprep.subr.mxu0 0.0
        %2175 = vmatpush1.msra.mxu0 %v2034
        %2176 = vmatprep.subr.mxu0 0.0
        %2177 = vmatpush1.msra.mxu0 %v2035
        %2178 = vmatprep.subr.mxu0 0.0
        %2179 = vmatpush1.msra.mxu0 %v2036
        %2180 = vmatprep.subr.mxu0 0.0
        %2181 = vmatpush1.msra.mxu0 %v2037
        %2182 = vmatprep.subr.mxu0 0.0
        %2183 = vmatpush1.msra.mxu0 %v2038
        %2184 = vmatprep.subr.mxu0 0.0
        %2185 = vmatpush1.msra.mxu0 %v2039
        %2186 = vmatprep.subr.mxu0 0.0
        %2187 = vmatpush1.msra.mxu0 %v2040
        %2188 = vmatprep.subr.mxu0 0.0
        %2189 = vmatpush1.msra.mxu0 %v2041
        %2190 = vmatprep.subr.mxu0 0.0
        %2191 = vmatpush1.msra.mxu0 %v2042
        %2192 = vmatprep.subr.mxu0 0.0
        %2193 = vmatpush1.msra.mxu0 %v2043
        %2194 = vmatprep.subr.mxu0 0.0
        %2195 = vmatpush1.msra.mxu0 %v2044
        %2196 = vmatprep.subr.mxu0 0.0
        %2197 = vmatpush1.msra.mxu0 %v2045
        %2198 = vmatprep.subr.mxu0 0.0
        %2199 = vmatpush1.msra.mxu0 %v2046
        %2200 = vmatprep.subr.mxu0 0.0
        %2201 = vmatpush1.msra.mxu0 %v2047
        %2202 = vmatprep.subr.mxu0 0.0
        %2203 = vmatpush1.msra.mxu0 %v2048
        %2204 = vmatprep.subr.mxu0 0.0
        %2205 = vmatpush1.msra.mxu0 %v2049
        %2206 = vmatprep.subr.mxu0 0.0
        %2207 = vmatpush1.msra.mxu0 %v2050
        %2208 = vmatprep.subr.mxu0 0.0
        %2209 = vmatpush1.msra.mxu0 %v2051
        %2210 = vmatprep.subr.mxu0 0.0
        %2211 = vmatpush1.msra.mxu0 %v2052
        %2212 = vmatprep.subr.mxu0 0.0
        %2213 = vmatpush1.msra.mxu0 %v2053
        %2214 = vmatprep.mubr.f32.mxu0 %v2015
        %2215 = vmatmul.mubr.f32.gmra.mrb[0].mxu0 %v2014
        %v2216 = vpop.f32.mrb[0].mxu0
        %v2217 = vadd.f32 0.0, %v2216
        %v2218 = vpop.f32.mrb[0].mxu0
        %2219 = vdwg.mxu0
        %2220 = vmatprep.subr.mxu0 0.0
        %2221 = vmatpush1.msra.mxu0 %v2054
        %2222 = vmatprep.subr.mxu0 0.0
        %2223 = vmatpush1.msra.mxu0 %v2055
        %2224 = vmatprep.subr.mxu0 0.0
        %2225 = vmatpush1.msra.mxu0 %v2056
        %2226 = vmatprep.subr.mxu0 0.0
        %2227 = vmatpush1.msra.mxu0 %v2057
        %2228 = vmatprep.subr.mxu0 0.0
        %2229 = vmatpush1.msra.mxu0 %v2058
        %2230 = vmatprep.subr.mxu0 0.0
        %2231 = vmatpush1.msra.mxu0 %v2059
        %2232 = vmatprep.subr.mxu0 0.0
        %2233 = vmatpush1.msra.mxu0 %v2060
        %2234 = vmatprep.subr.mxu0 0.0
        %2235 = vmatpush1.msra.mxu0 %v2061
        %2236 = vmatprep.subr.mxu0 0.0
        %2237 = vmatpush1.msra.mxu0 %v2062
        %2238 = vmatprep.subr.mxu0 0.0
        %2239 = vmatpush1.msra.mxu0 %v2063
        %2240 = vmatprep.subr.mxu0 0.0
        %2241 = vmatpush1.msra.mxu0 %v2064
        %2242 = vmatprep.subr.mxu0 0.0
        %2243 = vmatpush1.msra.mxu0 %v2065
        %2244 = vmatprep.subr.mxu0 0.0
        %2245 = vmatpush1.msra.mxu0 %v2066
        %2246 = vmatprep.subr.mxu0 0.0
        %2247 = vmatpush1.msra.mxu0 %v2067
        %2248 = vmatprep.subr.mxu0 0.0
        %2249 = vmatpush1.msra.mxu0 %v2068
        %2250 = vmatprep.subr.mxu0 0.0
        %2251 = vmatpush1.msra.mxu0 %v2069
        %2252 = vmatprep.subr.mxu0 0.0
        %2253 = vmatpush1.msra.mxu0 %v2070
        %2254 = vmatprep.subr.mxu0 0.0
        %2255 = vmatpush1.msra.mxu0 %v2071
        %2256 = vmatprep.subr.mxu0 0.0
        %2257 = vmatpush1.msra.mxu0 %v2072
        %2258 = vmatprep.subr.mxu0 0.0
        %2259 = vmatpush1.msra.mxu0 %v2073
        %2260 = vmatprep.subr.mxu0 0.0
        %2261 = vmatpush1.msra.mxu0 %v2074
        %2262 = vmatprep.subr.mxu0 0.0
        %2263 = vmatpush1.msra.mxu0 %v2075
        %2264 = vmatprep.subr.mxu0 0.0
        %2265 = vmatpush1.msra.mxu0 %v2076
        %2266 = vmatprep.subr.mxu0 0.0
        %2267 = vmatpush1.msra.mxu0 %v2077
        %2268 = vmatprep.subr.mxu0 0.0
        %2269 = vmatpush1.msra.mxu0 %v2078
        %2270 = vmatprep.subr.mxu0 0.0
        %2271 = vmatpush1.msra.mxu0 %v2079
        %2272 = vmatprep.subr.mxu0 0.0
        %2273 = vmatpush1.msra.mxu0 %v2080
        %2274 = vmatprep.subr.mxu0 0.0
        %2275 = vmatpush1.msra.mxu0 %v2081
        %2276 = vmatprep.subr.mxu0 0.0
        %2277 = vmatpush1.msra.mxu0 %v2082
        %2278 = vmatprep.subr.mxu0 0.0
        %2279 = vmatpush1.msra.mxu0 %v2083
        %2280 = vmatprep.subr.mxu0 0.0
        %2281 = vmatpush1.msra.mxu0 %v2084
        %2282 = vmatprep.subr.mxu0 0.0
        %2283 = vmatpush1.msra.mxu0 %v2085
        %2284 = vmatprep.mubr.f32.mxu0 %v2017
        %2285 = vmatmul.mubr.f32.gmra.mrb[0].mxu0 %v2016
        %v2286 = vpop.f32.mrb[0].mxu0
        %v2287 = vadd.f32 %v2217, %v2286
        %v2288 = vpop.f32.mrb[0].mxu0
        %2289 = vdwg.mxu0
        %2290 = vmatprep.subr.mxu0 0.0
        %2291 = vmatpush1.msra.mxu0 %v2086
        %2292 = vmatprep.subr.mxu0 0.0
        %2293 = vmatpush1.msra.mxu0 %v2087
        %2294 = vmatprep.subr.mxu0 0.0
        %2295 = vmatpush1.msra.mxu0 %v2088
        %2296 = vmatprep.subr.mxu0 0.0
        %2297 = vmatpush1.msra.mxu0 %v2089
        %2298 = vmatprep.subr.mxu0 0.0
        %2299 = vmatpush1.msra.mxu0 %v2090
        %2300 = vmatprep.subr.mxu0 0.0
        %2301 = vmatpush1.msra.mxu0 %v2091
        %2302 = vmatprep.subr.mxu0 0.0
        %2303 = vmatpush1.msra.mxu0 %v2092
        %2304 = vmatprep.subr.mxu0 0.0
        %2305 = vmatpush1.msra.mxu0 %v2093
        %2306 = vmatprep.subr.mxu0 0.0
        %2307 = vmatpush1.msra.mxu0 %v2094
        %2308 = vmatprep.subr.mxu0 0.0
        %2309 = vmatpush1.msra.mxu0 %v2095
        %2310 = vmatprep.subr.mxu0 0.0
        %2311 = vmatpush1.msra.mxu0 %v2096
        %2312 = vmatprep.subr.mxu0 0.0
        %2313 = vmatpush1.msra.mxu0 %v2097
        %2314 = vmatprep.subr.mxu0 0.0
        %2315 = vmatpush1.msra.mxu0 %v2098
        %2316 = vmatprep.subr.mxu0 0.0
        %2317 = vmatpush1.msra.mxu0 %v2099
        %2318 = vmatprep.subr.mxu0 0.0
        %2319 = vmatpush1.msra.mxu0 %v2100
        %2320 = vmatprep.subr.mxu0 0.0
        %2321 = vmatpush1.msra.mxu0 %v2101
        %2322 = vmatprep.subr.mxu0 0.0
        %2323 = vmatpush1.msra.mxu0 %v2102
        %2324 = vmatprep.subr.mxu0 0.0
        %2325 = vmatpush1.msra.mxu0 %v2103
        %2326 = vmatprep.subr.mxu0 0.0
        %2327 = vmatpush1.msra.mxu0 %v2104
        %2328 = vmatprep.subr.mxu0 0.0
        %2329 = vmatpush1.msra.mxu0 %v2105
        %2330 = vmatprep.subr.mxu0 0.0
        %2331 = vmatpush1.msra.mxu0 %v2106
        %2332 = vmatprep.subr.mxu0 0.0
        %2333 = vmatpush1.msra.mxu0 %v2107
        %2334 = vmatprep.subr.mxu0 0.0
        %2335 = vmatpush1.msra.mxu0 %v2108
        %2336 = vmatprep.subr.mxu0 0.0
        %2337 = vmatpush1.msra.mxu0 %v2109
        %2338 = vmatprep.subr.mxu0 0.0
        %2339 = vmatpush1.msra.mxu0 %v2110
        %2340 = vmatprep.subr.mxu0 0.0
        %2341 = vmatpush1.msra.mxu0 %v2111
        %2342 = vmatprep.subr.mxu0 0.0
        %2343 = vmatpush1.msra.mxu0 %v2112
        %2344 = vmatprep.subr.mxu0 0.0
        %2345 = vmatpush1.msra.mxu0 %v2113
        %2346 = vmatprep.subr.mxu0 0.0
        %2347 = vmatpush1.msra.mxu0 %v2114
        %2348 = vmatprep.subr.mxu0 0.0
        %2349 = vmatpush1.msra.mxu0 %v2115
        %2350 = vmatprep.subr.mxu0 0.0
        %2351 = vmatpush1.msra.mxu0 %v2116
        %2352 = vmatprep.subr.mxu0 0.0
        %2353 = vmatpush1.msra.mxu0 %v2117
        %2354 = vmatprep.mubr.f32.mxu0 %v2019
        %2355 = vmatmul.mubr.f32.gmra.mrb[0].mxu0 %v2018
        %v2356 = vpop.f32.mrb[0].mxu0
        %v2357 = vadd.f32 %v2287, %v2356
        %v2358 = vpop.f32.mrb[0].mxu0
        %2359 = vdwg.mxu0
        %2360 = vmatprep.subr.mxu0 0.0
        %2361 = vmatpush1.msra.mxu0 %v2118
        %2362 = vmatprep.subr.mxu0 0.0
        %2363 = vmatpush1.msra.mxu0 %v2119
        %2364 = vmatprep.subr.mxu0 0.0
        %2365 = vmatpush1.msra.mxu0 %v2120
        %2366 = vmatprep.subr.mxu0 0.0
        %2367 = vmatpush1.msra.mxu0 %v2121
        %2368 = vmatprep.subr.mxu0 0.0
        %2369 = vmatpush1.msra.mxu0 %v2122
        %2370 = vmatprep.subr.mxu0 0.0
        %2371 = vmatpush1.msra.mxu0 %v2123
        %2372 = vmatprep.subr.mxu0 0.0
        %2373 = vmatpush1.msra.mxu0 %v2124
        %2374 = vmatprep.subr.mxu0 0.0
        %2375 = vmatpush1.msra.mxu0 %v2125
        %2376 = vmatprep.subr.mxu0 0.0
        %2377 = vmatpush1.msra.mxu0 %v2126
        %2378 = vmatprep.subr.mxu0 0.0
        %2379 = vmatpush1.msra.mxu0 %v2127
        %2380 = vmatprep.subr.mxu0 0.0
        %2381 = vmatpush1.msra.mxu0 %v2128
        %2382 = vmatprep.subr.mxu0 0.0
        %2383 = vmatpush1.msra.mxu0 %v2129
        %2384 = vmatprep.subr.mxu0 0.0
        %2385 = vmatpush1.msra.mxu0 %v2130
        %2386 = vmatprep.subr.mxu0 0.0
        %2387 = vmatpush1.msra.mxu0 %v2131
        %2388 = vmatprep.subr.mxu0 0.0
        %2389 = vmatpush1.msra.mxu0 %v2132
        %2390 = vmatprep.subr.mxu0 0.0
        %2391 = vmatpush1.msra.mxu0 %v2133
        %2392 = vmatprep.subr.mxu0 0.0
        %2393 = vmatpush1.msra.mxu0 %v2134
        %2394 = vmatprep.subr.mxu0 0.0
        %2395 = vmatpush1.msra.mxu0 %v2135
        %2396 = vmatprep.subr.mxu0 0.0
        %2397 = vmatpush1.msra.mxu0 %v2136
        %2398 = vmatprep.subr.mxu0 0.0
        %2399 = vmatpush1.msra.mxu0 %v2137
        %2400 = vmatprep.subr.mxu0 0.0
        %2401 = vmatpush1.msra.mxu0 %v2138
        %2402 = vmatprep.subr.mxu0 0.0
        %2403 = vmatpush1.msra.mxu0 %v2139
        %2404 = vmatprep.subr.mxu0 0.0
        %2405 = vmatpush1.msra.mxu0 %v2140
        %2406 = vmatprep.subr.mxu0 0.0
        %2407 = vmatpush1.msra.mxu0 %v2141
        %2408 = vmatprep.subr.mxu0 0.0
        %2409 = vmatpush1.msra.mxu0 %v2142
        %2410 = vmatprep.subr.mxu0 0.0
        %2411 = vmatpush1.msra.mxu0 %v2143
        %2412 = vmatprep.subr.mxu0 0.0
        %2413 = vmatpush1.msra.mxu0 %v2144
        %2414 = vmatprep.subr.mxu0 0.0
        %2415 = vmatpush1.msra.mxu0 %v2145
        %2416 = vmatprep.subr.mxu0 0.0
        %2417 = vmatpush1.msra.mxu0 %v2146
        %2418 = vmatprep.subr.mxu0 0.0
        %2419 = vmatpush1.msra.mxu0 %v2147
        %2420 = vmatprep.subr.mxu0 0.0
        %2421 = vmatpush1.msra.mxu0 %v2148
        %2422 = vmatprep.subr.mxu0 0.0
        %2423 = vmatpush1.msra.mxu0 %v2149
        %2424 = vmatprep.mubr.f32.mxu0 %v2021
        %2425 = vmatmul.mubr.f32.gmra.mrb[0].mxu0 %v2020
        %v2426 = vpop.f32.mrb[0].mxu0
        %v2427 = vadd.f32 %v2357, %v2426
        %v2428 = vpop.f32.mrb[0].mxu0
        %2429 = vdwg.mxu0
        %v2430 = vsub.f32 0.0, %v2427
        %v2431 = vmul.f32 %v2430, 1.442695
        %v2432 = vpow.pop %v2431
        %v2433 = vadd.f32 %v2432, 1.0
        %v2434 = vrcp.pop %v2433
        %v2435 = vmul.f32 1.0, %v2434
        %v2436 = vld [vmem:[%s8] sm:$0xff]
        %v2437 = vld [vmem:[%s8 + $0x8] sm:$0xff]
        %v2438 = vld [vmem:[%s8 + $0x10] sm:$0xff]
        %v2439 = vld [vmem:[%s8 + $0x18] sm:$0xff]
        %v2440 = vld [vmem:[%s8 + $0x20] sm:$0xff]
        %v2441 = vld [vmem:[%s8 + $0x28] sm:$0xff]
        %v2442 = vld [vmem:[%s8 + $0x30] sm:$0xff]
        %v2443 = vld [vmem:[%s8 + $0x38] sm:$0xff]
        %v2444 = vld [vmem:[%s8 + $0x40] sm:$0xff]
        %v2445 = vld [vmem:[%s8 + $0x48] sm:$0xff]
        %v2446 = vld [vmem:[%s8 + $0x50] sm:$0xff]
        %v2447 = vld [vmem:[%s8 + $0x58] sm:$0xff]
        %v2448 = vld [vmem:[%s8 + $0x60] sm:$0xff]
        %v2449 = vld [vmem:[%s8 + $0x68] sm:$0xff]
        %v2450 = vld [vmem:[%s8 + $0x70] sm:$0xff]
        %v2451 = vld [vmem:[%s8 + $0x78] sm:$0xff]
        %v2452 = vld [vmem:[%s8 + $0x80] sm:$0xff]
        %v2453 = vld [vmem:[%s8 + $0x88] sm:$0xff]
        %v2454 = vld [vmem:[%s8 + $0x90] sm:$0xff]
        %v2455 = vld [vmem:[%s8 + $0x98] sm:$0xff]
        %v2456 = vld [vmem:[%s8 + $0xa0] sm:$0xff]
        %v2457 = vld [vmem:[%s8 + $0xa8] sm:$0xff]
        %v2458 = vld [vmem:[%s8 + $0xb0] sm:$0xff]
        %v2459 = vld [vmem:[%s8 + $0xb8] sm:$0xff]
        %v2460 = vld [vmem:[%s8 + $0xc0] sm:$0xff]
        %v2461 = vld [vmem:[%s8 + $0xc8] sm:$0xff]
        %v2462 = vld [vmem:[%s8 + $0xd0] sm:$0xff]
        %v2463 = vld [vmem:[%s8 + $0xd8] sm:$0xff]
        %v2464 = vld [vmem:[%s8 + $0xe0] sm:$0xff]
        %v2465 = vld [vmem:[%s8 + $0xe8] sm:$0xff]
        %v2466 = vld [vmem:[%s8 + $0xf0] sm:$0xff]
        %v2467 = vld [vmem:[%s8 + $0xf8] sm:$0xff]
        %v2469 = vsel %vm469, %v2435, 0
        %2471 = vmatprep.subr.mxu0 %v2437
        %2472 = vmatpush1.msra.mxu0 %v2436
        %2473 = vmatprep.subr.mxu0 %v2445
        %2474 = vmatpush1.msra.mxu0 %v2444
        %2475 = vmatprep.subr.mxu0 %v2453
        %2476 = vmatpush1.msra.mxu0 %v2452
        %2477 = vmatprep.subr.mxu0 %v2461
        %2478 = vmatpush1.msra.mxu0 %v2460
        %2479 = vmatprep.subr.mxu0 0.0
        %2480 = vmatpush1.msra.mxu0 0.0
        %2481 = vmatprep.subr.mxu0 0.0
        %2482 = vmatpush1.msra.mxu0 0.0
        %2483 = vmatprep.subr.mxu0 0.0
        %2484 = vmatpush1.msra.mxu0 0.0
        %2485 = vmatprep.subr.mxu0 0.0
        %2486 = vmatpush1.msra.mxu0 0.0
        %2487 = vmatprep.subr.mxu0 0.0
        %2488 = vmatpush1.msra.mxu0 0.0
        %2489 = vmatprep.subr.mxu0 0.0
        %2490 = vmatpush1.msra.mxu0 0.0
        %2491 = vmatprep.subr.mxu0 0.0
        %2492 = vmatpush1.msra.mxu0 0.0
        %2493 = vmatprep.subr.mxu0 0.0
        %2494 = vmatpush1.msra.mxu0 0.0
        %2495 = vmatprep.subr.mxu0 0.0
        %2496 = vmatpush1.msra.mxu0 0.0
        %2497 = vmatprep.subr.mxu0 0.0
        %2498 = vmatpush1.msra.mxu0 0.0
        %2499 = vmatprep.subr.mxu0 0.0
        %2500 = vmatpush1.msra.mxu0 0.0
        %2501 = vmatprep.subr.mxu0 0.0
        %2502 = vmatpush1.msra.mxu0 0.0
        %2503 = vmatprep.subr.mxu0 0.0
        %2504 = vmatpush1.msra.mxu0 0.0
        %2505 = vmatprep.subr.mxu0 0.0
        %2506 = vmatpush1.msra.mxu0 0.0
        %2507 = vmatprep.subr.mxu0 0.0
        %2508 = vmatpush1.msra.mxu0 0.0
        %2509 = vmatprep.subr.mxu0 0.0
        %2510 = vmatpush1.msra.mxu0 0.0
        %2511 = vmatprep.subr.mxu0 0.0
        %2512 = vmatpush1.msra.mxu0 0.0
        %2513 = vmatprep.subr.mxu0 0.0
        %2514 = vmatpush1.msra.mxu0 0.0
        %2515 = vmatprep.subr.mxu0 0.0
        %2516 = vmatpush1.msra.mxu0 0.0
        %2517 = vmatprep.subr.mxu0 0.0
        %2518 = vmatpush1.msra.mxu0 0.0
        %2519 = vmatprep.subr.mxu0 0.0
        %2520 = vmatpush1.msra.mxu0 0.0
        %2521 = vmatprep.subr.mxu0 0.0
        %2522 = vmatpush1.msra.mxu0 0.0
        %2523 = vmatprep.subr.mxu0 0.0
        %2524 = vmatpush1.msra.mxu0 0.0
        %2525 = vmatprep.subr.mxu0 0.0
        %2526 = vmatpush1.msra.mxu0 0.0
        %2527 = vmatprep.subr.mxu0 0.0
        %2528 = vmatpush1.msra.mxu0 0.0
        %2529 = vmatprep.subr.mxu0 0.0
        %2530 = vmatpush1.msra.mxu0 0.0
        %2531 = vmatprep.subr.mxu0 0.0
        %2532 = vmatpush1.msra.mxu0 0.0
        %2533 = vmatprep.subr.mxu0 0.0
        %2534 = vmatpush1.msra.mxu0 0.0
        %2535 = vmatprep.mubr.f32.mxu0 0.0
        %2536 = vmatmul.mubr.f32.gmra.mrb[0].mxu0 %v2469
        %v2537 = vpop.f32.mrb[0].mxu0
        %v2538 = vadd.f32 0.0, %v2537
        %v2539 = vpop.f32.mrb[0].mxu0
        %v2540 = vadd.f32 0.0, %v2539
        %2541 = vdwg.mxu0
        %2542 = vmatprep.subr.mxu0 %v2439
        %2543 = vmatpush1.msra.mxu0 %v2438
        %2544 = vmatprep.subr.mxu0 %v2447
        %2545 = vmatpush1.msra.mxu0 %v2446
        %2546 = vmatprep.subr.mxu0 %v2455
        %2547 = vmatpush1.msra.mxu0 %v2454
        %2548 = vmatprep.subr.mxu0 %v2463
        %2549 = vmatpush1.msra.mxu0 %v2462
        %2550 = vmatprep.subr.mxu0 0.0
        %2551 = vmatpush1.msra.mxu0 0.0
        %2552 = vmatprep.subr.mxu0 0.0
        %2553 = vmatpush1.msra.mxu0 0.0
        %2554 = vmatprep.subr.mxu0 0.0
        %2555 = vmatpush1.msra.mxu0 0.0
        %2556 = vmatprep.subr.mxu0 0.0
        %2557 = vmatpush1.msra.mxu0 0.0
        %2558 = vmatprep.subr.mxu0 0.0
        %2559 = vmatpush1.msra.mxu0 0.0
        %2560 = vmatprep.subr.mxu0 0.0
        %2561 = vmatpush1.msra.mxu0 0.0
        %2562 = vmatprep.subr.mxu0 0.0
        %2563 = vmatpush1.msra.mxu0 0.0
        %2564 = vmatprep.subr.mxu0 0.0
        %2565 = vmatpush1.msra.mxu0 0.0
        %2566 = vmatprep.subr.mxu0 0.0
        %2567 = vmatpush1.msra.mxu0 0.0
        %2568 = vmatprep.subr.mxu0 0.0
        %2569 = vmatpush1.msra.mxu0 0.0
        %2570 = vmatprep.subr.mxu0 0.0
        %2571 = vmatpush1.msra.mxu0 0.0
        %2572 = vmatprep.subr.mxu0 0.0
        %2573 = vmatpush1.msra.mxu0 0.0
        %2574 = vmatprep.subr.mxu0 0.0
        %2575 = vmatpush1.msra.mxu0 0.0
        %2576 = vmatprep.subr.mxu0 0.0
        %2577 = vmatpush1.msra.mxu0 0.0
        %2578 = vmatprep.subr.mxu0 0.0
        %2579 = vmatpush1.msra.mxu0 0.0
        %2580 = vmatprep.subr.mxu0 0.0
        %2581 = vmatpush1.msra.mxu0 0.0
        %2582 = vmatprep.subr.mxu0 0.0
        %2583 = vmatpush1.msra.mxu0 0.0
        %2584 = vmatprep.subr.mxu0 0.0
        %2585 = vmatpush1.msra.mxu0 0.0
        %2586 = vmatprep.subr.mxu0 0.0
        %2587 = vmatpush1.msra.mxu0 0.0
        %2588 = vmatprep.subr.mxu0 0.0
        %2589 = vmatpush1.msra.mxu0 0.0
        %2590 = vmatprep.subr.mxu0 0.0
        %2591 = vmatpush1.msra.mxu0 0.0
        %2592 = vmatprep.subr.mxu0 0.0
        %2593 = vmatpush1.msra.mxu0 0.0
        %2594 = vmatprep.subr.mxu0 0.0
        %2595 = vmatpush1.msra.mxu0 0.0
        %2596 = vmatprep.subr.mxu0 0.0
        %2597 = vmatpush1.msra.mxu0 0.0
        %2598 = vmatprep.subr.mxu0 0.0
        %2599 = vmatpush1.msra.mxu0 0.0
        %2600 = vmatprep.subr.mxu0 0.0
        %2601 = vmatpush1.msra.mxu0 0.0
        %2602 = vmatprep.subr.mxu0 0.0
        %2603 = vmatpush1.msra.mxu0 0.0
        %2604 = vmatprep.subr.mxu0 0.0
        %2605 = vmatpush1.msra.mxu0 0.0
        %2606 = vmatprep.mubr.f32.mxu0 0.0
        %2607 = vmatmul.mubr.f32.gmra.mrb[0].mxu0 %v2469
        %v2608 = vpop.f32.mrb[0].mxu0
        %v2609 = vadd.f32 0.0, %v2608
        %v2610 = vpop.f32.mrb[0].mxu0
        %v2611 = vadd.f32 0.0, %v2610
        %2612 = vdwg.mxu0
        %2613 = vmatprep.subr.mxu0 %v2441
        %2614 = vmatpush1.msra.mxu0 %v2440
        %2615 = vmatprep.subr.mxu0 %v2449
        %2616 = vmatpush1.msra.mxu0 %v2448
        %2617 = vmatprep.subr.mxu0 %v2457
        %2618 = vmatpush1.msra.mxu0 %v2456
        %2619 = vmatprep.subr.mxu0 %v2465
        %2620 = vmatpush1.msra.mxu0 %v2464
        %2621 = vmatprep.subr.mxu0 0.0
        %2622 = vmatpush1.msra.mxu0 0.0
        %2623 = vmatprep.subr.mxu0 0.0
        %2624 = vmatpush1.msra.mxu0 0.0
        %2625 = vmatprep.subr.mxu0 0.0
        %2626 = vmatpush1.msra.mxu0 0.0
        %2627 = vmatprep.subr.mxu0 0.0
        %2628 = vmatpush1.msra.mxu0 0.0
        %2629 = vmatprep.subr.mxu0 0.0
        %2630 = vmatpush1.msra.mxu0 0.0
        %2631 = vmatprep.subr.mxu0 0.0
        %2632 = vmatpush1.msra.mxu0 0.0
        %2633 = vmatprep.subr.mxu0 0.0
        %2634 = vmatpush1.msra.mxu0 0.0
        %2635 = vmatprep.subr.mxu0 0.0
        %2636 = vmatpush1.msra.mxu0 0.0
        %2637 = vmatprep.subr.mxu0 0.0
        %2638 = vmatpush1.msra.mxu0 0.0
        %2639 = vmatprep.subr.mxu0 0.0
        %2640 = vmatpush1.msra.mxu0 0.0
        %2641 = vmatprep.subr.mxu0 0.0
        %2642 = vmatpush1.msra.mxu0 0.0
        %2643 = vmatprep.subr.mxu0 0.0
        %2644 = vmatpush1.msra.mxu0 0.0
        %2645 = vmatprep.subr.mxu0 0.0
        %2646 = vmatpush1.msra.mxu0 0.0
        %2647 = vmatprep.subr.mxu0 0.0
        %2648 = vmatpush1.msra.mxu0 0.0
        %2649 = vmatprep.subr.mxu0 0.0
        %2650 = vmatpush1.msra.mxu0 0.0
        %2651 = vmatprep.subr.mxu0 0.0
        %2652 = vmatpush1.msra.mxu0 0.0
        %2653 = vmatprep.subr.mxu0 0.0
        %2654 = vmatpush1.msra.mxu0 0.0
        %2655 = vmatprep.subr.mxu0 0.0
        %2656 = vmatpush1.msra.mxu0 0.0
        %2657 = vmatprep.subr.mxu0 0.0
        %2658 = vmatpush1.msra.mxu0 0.0
        %2659 = vmatprep.subr.mxu0 0.0
        %2660 = vmatpush1.msra.mxu0 0.0
        %2661 = vmatprep.subr.mxu0 0.0
        %2662 = vmatpush1.msra.mxu0 0.0
        %2663 = vmatprep.subr.mxu0 0.0
        %2664 = vmatpush1.msra.mxu0 0.0
        %2665 = vmatprep.subr.mxu0 0.0
        %2666 = vmatpush1.msra.mxu0 0.0
        %2667 = vmatprep.subr.mxu0 0.0
        %2668 = vmatpush1.msra.mxu0 0.0
        %2669 = vmatprep.subr.mxu0 0.0
        %2670 = vmatpush1.msra.mxu0 0.0
        %2671 = vmatprep.subr.mxu0 0.0
        %2672 = vmatpush1.msra.mxu0 0.0
        %2673 = vmatprep.subr.mxu0 0.0
        %2674 = vmatpush1.msra.mxu0 0.0
        %2675 = vmatprep.subr.mxu0 0.0
        %2676 = vmatpush1.msra.mxu0 0.0
        %2677 = vmatprep.mubr.f32.mxu0 0.0
        %2678 = vmatmul.mubr.f32.gmra.mrb[0].mxu0 %v2469
        %v2679 = vpop.f32.mrb[0].mxu0
        %v2680 = vadd.f32 0.0, %v2679
        %v2681 = vpop.f32.mrb[0].mxu0
        %v2682 = vadd.f32 0.0, %v2681
        %2683 = vdwg.mxu0
        %2684 = vmatprep.subr.mxu0 %v2443
        %2685 = vmatpush1.msra.mxu0 %v2442
        %2686 = vmatprep.subr.mxu0 %v2451
        %2687 = vmatpush1.msra.mxu0 %v2450
        %2688 = vmatprep.subr.mxu0 %v2459
        %2689 = vmatpush1.msra.mxu0 %v2458
        %2690 = vmatprep.subr.mxu0 %v2467
        %2691 = vmatpush1.msra.mxu0 %v2466
        %2692 = vmatprep.subr.mxu0 0.0
        %2693 = vmatpush1.msra.mxu0 0.0
        %2694 = vmatprep.subr.mxu0 0.0
        %2695 = vmatpush1.msra.mxu0 0.0
        %2696 = vmatprep.subr.mxu0 0.0
        %2697 = vmatpush1.msra.mxu0 0.0
        %2698 = vmatprep.subr.mxu0 0.0
        %2699 = vmatpush1.msra.mxu0 0.0
        %2700 = vmatprep.subr.mxu0 0.0
        %2701 = vmatpush1.msra.mxu0 0.0
        %2702 = vmatprep.subr.mxu0 0.0
        %2703 = vmatpush1.msra.mxu0 0.0
        %2704 = vmatprep.subr.mxu0 0.0
        %2705 = vmatpush1.msra.mxu0 0.0
        %2706 = vmatprep.subr.mxu0 0.0
        %2707 = vmatpush1.msra.mxu0 0.0
        %2708 = vmatprep.subr.mxu0 0.0
        %2709 = vmatpush1.msra.mxu0 0.0
        %2710 = vmatprep.subr.mxu0 0.0
        %2711 = vmatpush1.msra.mxu0 0.0
        %2712 = vmatprep.subr.mxu0 0.0
        %2713 = vmatpush1.msra.mxu0 0.0
        %2714 = vmatprep.subr.mxu0 0.0
        %2715 = vmatpush1.msra.mxu0 0.0
        %2716 = vmatprep.subr.mxu0 0.0
        %2717 = vmatpush1.msra.mxu0 0.0
        %2718 = vmatprep.subr.mxu0 0.0
        %2719 = vmatpush1.msra.mxu0 0.0
        %2720 = vmatprep.subr.mxu0 0.0
        %2721 = vmatpush1.msra.mxu0 0.0
        %2722 = vmatprep.subr.mxu0 0.0
        %2723 = vmatpush1.msra.mxu0 0.0
        %2724 = vmatprep.subr.mxu0 0.0
        %2725 = vmatpush1.msra.mxu0 0.0
        %2726 = vmatprep.subr.mxu0 0.0
        %2727 = vmatpush1.msra.mxu0 0.0
        %2728 = vmatprep.subr.mxu0 0.0
        %2729 = vmatpush1.msra.mxu0 0.0
        %2730 = vmatprep.subr.mxu0 0.0
        %2731 = vmatpush1.msra.mxu0 0.0
        %2732 = vmatprep.subr.mxu0 0.0
        %2733 = vmatpush1.msra.mxu0 0.0
        %2734 = vmatprep.subr.mxu0 0.0
        %2735 = vmatpush1.msra.mxu0 0.0
        %2736 = vmatprep.subr.mxu0 0.0
        %2737 = vmatpush1.msra.mxu0 0.0
        %2738 = vmatprep.subr.mxu0 0.0
        %2739 = vmatpush1.msra.mxu0 0.0
        %2740 = vmatprep.subr.mxu0 0.0
        %2741 = vmatpush1.msra.mxu0 0.0
        %2742 = vmatprep.subr.mxu0 0.0
        %2743 = vmatpush1.msra.mxu0 0.0
        %2744 = vmatprep.subr.mxu0 0.0
        %2745 = vmatpush1.msra.mxu0 0.0
        %2746 = vmatprep.subr.mxu0 0.0
        %2747 = vmatpush1.msra.mxu0 0.0
        %2748 = vmatprep.mubr.f32.mxu0 0.0
        %2749 = vmatmul.mubr.f32.gmra.mrb[0].mxu0 %v2469
        %v2750 = vpop.f32.mrb[0].mxu0
        %v2751 = vadd.f32 0.0, %v2750
        %v2752 = vpop.f32.mrb[0].mxu0
        %v2753 = vadd.f32 0.0, %v2752
        %2754 = vdwg.mxu0
        %v2755 = vmul.f32 %v1687, %v2538
        %v2756 = vmul.f32 %v1688, %v2540
        %v2757 = vmul.f32 %v1689, %v2609
        %v2758 = vmul.f32 %v1690, %v2611
        %v2759 = vmul.f32 %v1691, %v2680
        %v2760 = vmul.f32 %v1692, %v2682
        %v2761 = vmul.f32 %v1693, %v2751
        %v2762 = vmul.f32 %v1694, %v2753
        %v2763 = vld [vmem:[%s9] sm:$0xff]
        %v2764 = vld [vmem:[%s9 + $0x8] sm:$0xff]
        %v2765 = vld [vmem:[%s9 + $0x10] sm:$0xff]
        %v2766 = vld [vmem:[%s9 + $0x18] sm:$0xff]
        %v2767 = vld [vmem:[%s9 + $0x20] sm:$0xff]
        %v2768 = vld [vmem:[%s9 + $0x28] sm:$0xff]
        %v2769 = vld [vmem:[%s9 + $0x30] sm:$0xff]
        %v2770 = vld [vmem:[%s9 + $0x38] sm:$0xff]
        %v2771 = vld [vmem:[%s9 + $0x40] sm:$0xff]
        %v2772 = vld [vmem:[%s9 + $0x48] sm:$0xff]
        %v2773 = vld [vmem:[%s9 + $0x50] sm:$0xff]
        %v2774 = vld [vmem:[%s9 + $0x58] sm:$0xff]
        %v2775 = vld [vmem:[%s9 + $0x60] sm:$0xff]
        %v2776 = vld [vmem:[%s9 + $0x68] sm:$0xff]
        %v2777 = vld [vmem:[%s9 + $0x70] sm:$0xff]
        %v2778 = vld [vmem:[%s9 + $0x78] sm:$0xff]
        %v2779 = vld [vmem:[%s9 + $0x80] sm:$0xff]
        %v2780 = vld [vmem:[%s9 + $0x88] sm:$0xff]
        %v2781 = vld [vmem:[%s9 + $0x90] sm:$0xff]
        %v2782 = vld [vmem:[%s9 + $0x98] sm:$0xff]
        %v2783 = vld [vmem:[%s9 + $0xa0] sm:$0xff]
        %v2784 = vld [vmem:[%s9 + $0xa8] sm:$0xff]
        %v2785 = vld [vmem:[%s9 + $0xb0] sm:$0xff]
        %v2786 = vld [vmem:[%s9 + $0xb8] sm:$0xff]
        %v2787 = vld [vmem:[%s9 + $0xc0] sm:$0xff]
        %v2788 = vld [vmem:[%s9 + $0xc8] sm:$0xff]
        %v2789 = vld [vmem:[%s9 + $0xd0] sm:$0xff]
        %v2790 = vld [vmem:[%s9 + $0xd8] sm:$0xff]
        %v2791 = vld [vmem:[%s9 + $0xe0] sm:$0xff]
        %v2792 = vld [vmem:[%s9 + $0xe8] sm:$0xff]
        %v2793 = vld [vmem:[%s9 + $0xf0] sm:$0xff]
        %v2794 = vld [vmem:[%s9 + $0xf8] sm:$0xff]
        %v2795 = vld [vmem:[%s9 + $0x100] sm:$0xff]
        %v2796 = vld [vmem:[%s9 + $0x108] sm:$0xff]
        %v2797 = vld [vmem:[%s9 + $0x110] sm:$0xff]
        %v2798 = vld [vmem:[%s9 + $0x118] sm:$0xff]
        %v2799 = vld [vmem:[%s9 + $0x120] sm:$0xff]
        %v2800 = vld [vmem:[%s9 + $0x128] sm:$0xff]
        %v2801 = vld [vmem:[%s9 + $0x130] sm:$0xff]
        %v2802 = vld [vmem:[%s9 + $0x138] sm:$0xff]
        %v2803 = vld [vmem:[%s9 + $0x140] sm:$0xff]
        %v2804 = vld [vmem:[%s9 + $0x148] sm:$0xff]
        %v2805 = vld [vmem:[%s9 + $0x150] sm:$0xff]
        %v2806 = vld [vmem:[%s9 + $0x158] sm:$0xff]
        %v2807 = vld [vmem:[%s9 + $0x160] sm:$0xff]
        %v2808 = vld [vmem:[%s9 + $0x168] sm:$0xff]
        %v2809 = vld [vmem:[%s9 + $0x170] sm:$0xff]
        %v2810 = vld [vmem:[%s9 + $0x178] sm:$0xff]
        %v2811 = vld [vmem:[%s9 + $0x180] sm:$0xff]
        %v2812 = vld [vmem:[%s9 + $0x188] sm:$0xff]
        %v2813 = vld [vmem:[%s9 + $0x190] sm:$0xff]
        %v2814 = vld [vmem:[%s9 + $0x198] sm:$0xff]
        %v2815 = vld [vmem:[%s9 + $0x1a0] sm:$0xff]
        %v2816 = vld [vmem:[%s9 + $0x1a8] sm:$0xff]
        %v2817 = vld [vmem:[%s9 + $0x1b0] sm:$0xff]
        %v2818 = vld [vmem:[%s9 + $0x1b8] sm:$0xff]
        %v2819 = vld [vmem:[%s9 + $0x1c0] sm:$0xff]
        %v2820 = vld [vmem:[%s9 + $0x1c8] sm:$0xff]
        %v2821 = vld [vmem:[%s9 + $0x1d0] sm:$0xff]
        %v2822 = vld [vmem:[%s9 + $0x1d8] sm:$0xff]
        %v2823 = vld [vmem:[%s9 + $0x1e0] sm:$0xff]
        %v2824 = vld [vmem:[%s9 + $0x1e8] sm:$0xff]
        %v2825 = vld [vmem:[%s9 + $0x1f0] sm:$0xff]
        %v2826 = vld [vmem:[%s9 + $0x1f8] sm:$0xff]
        %v2827 = vld [vmem:[%s9 + $0x200] sm:$0xff]
        %v2828 = vld [vmem:[%s9 + $0x208] sm:$0xff]
        %v2829 = vld [vmem:[%s9 + $0x210] sm:$0xff]
        %v2830 = vld [vmem:[%s9 + $0x218] sm:$0xff]
        %v2831 = vld [vmem:[%s9 + $0x220] sm:$0xff]
        %v2832 = vld [vmem:[%s9 + $0x228] sm:$0xff]
        %v2833 = vld [vmem:[%s9 + $0x230] sm:$0xff]
        %v2834 = vld [vmem:[%s9 + $0x238] sm:$0xff]
        %v2835 = vld [vmem:[%s9 + $0x240] sm:$0xff]
        %v2836 = vld [vmem:[%s9 + $0x248] sm:$0xff]
        %v2837 = vld [vmem:[%s9 + $0x250] sm:$0xff]
        %v2838 = vld [vmem:[%s9 + $0x258] sm:$0xff]
        %v2839 = vld [vmem:[%s9 + $0x260] sm:$0xff]
        %v2840 = vld [vmem:[%s9 + $0x268] sm:$0xff]
        %v2841 = vld [vmem:[%s9 + $0x270] sm:$0xff]
        %v2842 = vld [vmem:[%s9 + $0x278] sm:$0xff]
        %v2843 = vld [vmem:[%s9 + $0x280] sm:$0xff]
        %v2844 = vld [vmem:[%s9 + $0x288] sm:$0xff]
        %v2845 = vld [vmem:[%s9 + $0x290] sm:$0xff]
        %v2846 = vld [vmem:[%s9 + $0x298] sm:$0xff]
        %v2847 = vld [vmem:[%s9 + $0x2a0] sm:$0xff]
        %v2848 = vld [vmem:[%s9 + $0x2a8] sm:$0xff]
        %v2849 = vld [vmem:[%s9 + $0x2b0] sm:$0xff]
        %v2850 = vld [vmem:[%s9 + $0x2b8] sm:$0xff]
        %v2851 = vld [vmem:[%s9 + $0x2c0] sm:$0xff]
        %v2852 = vld [vmem:[%s9 + $0x2c8] sm:$0xff]
        %v2853 = vld [vmem:[%s9 + $0x2d0] sm:$0xff]
        %v2854 = vld [vmem:[%s9 + $0x2d8] sm:$0xff]
        %v2855 = vld [vmem:[%s9 + $0x2e0] sm:$0xff]
        %v2856 = vld [vmem:[%s9 + $0x2e8] sm:$0xff]
        %v2857 = vld [vmem:[%s9 + $0x2f0] sm:$0xff]
        %v2858 = vld [vmem:[%s9 + $0x2f8] sm:$0xff]
        %v2859 = vld [vmem:[%s9 + $0x300] sm:$0xff]
        %v2860 = vld [vmem:[%s9 + $0x308] sm:$0xff]
        %v2861 = vld [vmem:[%s9 + $0x310] sm:$0xff]
        %v2862 = vld [vmem:[%s9 + $0x318] sm:$0xff]
        %v2863 = vld [vmem:[%s9 + $0x320] sm:$0xff]
        %v2864 = vld [vmem:[%s9 + $0x328] sm:$0xff]
        %v2865 = vld [vmem:[%s9 + $0x330] sm:$0xff]
        %v2866 = vld [vmem:[%s9 + $0x338] sm:$0xff]
        %v2867 = vld [vmem:[%s9 + $0x340] sm:$0xff]
        %v2868 = vld [vmem:[%s9 + $0x348] sm:$0xff]
        %v2869 = vld [vmem:[%s9 + $0x350] sm:$0xff]
        %v2870 = vld [vmem:[%s9 + $0x358] sm:$0xff]
        %v2871 = vld [vmem:[%s9 + $0x360] sm:$0xff]
        %v2872 = vld [vmem:[%s9 + $0x368] sm:$0xff]
        %v2873 = vld [vmem:[%s9 + $0x370] sm:$0xff]
        %v2874 = vld [vmem:[%s9 + $0x378] sm:$0xff]
        %v2875 = vld [vmem:[%s9 + $0x380] sm:$0xff]
        %v2876 = vld [vmem:[%s9 + $0x388] sm:$0xff]
        %v2877 = vld [vmem:[%s9 + $0x390] sm:$0xff]
        %v2878 = vld [vmem:[%s9 + $0x398] sm:$0xff]
        %v2879 = vld [vmem:[%s9 + $0x3a0] sm:$0xff]
        %v2880 = vld [vmem:[%s9 + $0x3a8] sm:$0xff]
        %v2881 = vld [vmem:[%s9 + $0x3b0] sm:$0xff]
        %v2882 = vld [vmem:[%s9 + $0x3b8] sm:$0xff]
        %v2883 = vld [vmem:[%s9 + $0x3c0] sm:$0xff]
        %v2884 = vld [vmem:[%s9 + $0x3c8] sm:$0xff]
        %v2885 = vld [vmem:[%s9 + $0x3d0] sm:$0xff]
        %v2886 = vld [vmem:[%s9 + $0x3d8] sm:$0xff]
        %v2887 = vld [vmem:[%s9 + $0x3e0] sm:$0xff]
        %v2888 = vld [vmem:[%s9 + $0x3e8] sm:$0xff]
        %v2889 = vld [vmem:[%s9 + $0x3f0] sm:$0xff]
        %v2890 = vld [vmem:[%s9 + $0x3f8] sm:$0xff]
        %2891 = vmatprep.subr.mxu0 0.0
        %2892 = vmatpush1.msra.mxu0 %v2763
        %2893 = vmatprep.subr.mxu0 0.0
        %2894 = vmatpush1.msra.mxu0 %v2764
        %2895 = vmatprep.subr.mxu0 0.0
        %2896 = vmatpush1.msra.mxu0 %v2765
        %2897 = vmatprep.subr.mxu0 0.0
        %2898 = vmatpush1.msra.mxu0 %v2766
        %2899 = vmatprep.subr.mxu0 0.0
        %2900 = vmatpush1.msra.mxu0 %v2767
        %2901 = vmatprep.subr.mxu0 0.0
        %2902 = vmatpush1.msra.mxu0 %v2768
        %2903 = vmatprep.subr.mxu0 0.0
        %2904 = vmatpush1.msra.mxu0 %v2769
        %2905 = vmatprep.subr.mxu0 0.0
        %2906 = vmatpush1.msra.mxu0 %v2770
        %2907 = vmatprep.subr.mxu0 0.0
        %2908 = vmatpush1.msra.mxu0 %v2771
        %2909 = vmatprep.subr.mxu0 0.0
        %2910 = vmatpush1.msra.mxu0 %v2772
        %2911 = vmatprep.subr.mxu0 0.0
        %2912 = vmatpush1.msra.mxu0 %v2773
        %2913 = vmatprep.subr.mxu0 0.0
        %2914 = vmatpush1.msra.mxu0 %v2774
        %2915 = vmatprep.subr.mxu0 0.0
        %2916 = vmatpush1.msra.mxu0 %v2775
        %2917 = vmatprep.subr.mxu0 0.0
        %2918 = vmatpush1.msra.mxu0 %v2776
        %2919 = vmatprep.subr.mxu0 0.0
        %2920 = vmatpush1.msra.mxu0 %v2777
        %2921 = vmatprep.subr.mxu0 0.0
        %2922 = vmatpush1.msra.mxu0 %v2778
        %2923 = vmatprep.subr.mxu0 0.0
        %2924 = vmatpush1.msra.mxu0 %v2779
        %2925 = vmatprep.subr.mxu0 0.0
        %2926 = vmatpush1.msra.mxu0 %v2780
        %2927 = vmatprep.subr.mxu0 0.0
        %2928 = vmatpush1.msra.mxu0 %v2781
        %2929 = vmatprep.subr.mxu0 0.0
        %2930 = vmatpush1.msra.mxu0 %v2782
        %2931 = vmatprep.subr.mxu0 0.0
        %2932 = vmatpush1.msra.mxu0 %v2783
        %2933 = vmatprep.subr.mxu0 0.0
        %2934 = vmatpush1.msra.mxu0 %v2784
        %2935 = vmatprep.subr.mxu0 0.0
        %2936 = vmatpush1.msra.mxu0 %v2785
        %2937 = vmatprep.subr.mxu0 0.0
        %2938 = vmatpush1.msra.mxu0 %v2786
        %2939 = vmatprep.subr.mxu0 0.0
        %2940 = vmatpush1.msra.mxu0 %v2787
        %2941 = vmatprep.subr.mxu0 0.0
        %2942 = vmatpush1.msra.mxu0 %v2788
        %2943 = vmatprep.subr.mxu0 0.0
        %2944 = vmatpush1.msra.mxu0 %v2789
        %2945 = vmatprep.subr.mxu0 0.0
        %2946 = vmatpush1.msra.mxu0 %v2790
        %2947 = vmatprep.subr.mxu0 0.0
        %2948 = vmatpush1.msra.mxu0 %v2791
        %2949 = vmatprep.subr.mxu0 0.0
        %2950 = vmatpush1.msra.mxu0 %v2792
        %2951 = vmatprep.subr.mxu0 0.0
        %2952 = vmatpush1.msra.mxu0 %v2793
        %2953 = vmatprep.subr.mxu0 0.0
        %2954 = vmatpush1.msra.mxu0 %v2794
        %2955 = vmatprep.mubr.f32.mxu0 %v2756
        %2956 = vmatmul.mubr.f32.gmra.mrb[0].mxu0 %v2755
        %v2957 = vpop.f32.mrb[0].mxu0
        %v2958 = vadd.f32 0.0, %v2957
        %v2959 = vpop.f32.mrb[0].mxu0
        %2960 = vdwg.mxu0
        %2961 = vmatprep.subr.mxu0 0.0
        %2962 = vmatpush1.msra.mxu0 %v2795
        %2963 = vmatprep.subr.mxu0 0.0
        %2964 = vmatpush1.msra.mxu0 %v2796
        %2965 = vmatprep.subr.mxu0 0.0
        %2966 = vmatpush1.msra.mxu0 %v2797
        %2967 = vmatprep.subr.mxu0 0.0
        %2968 = vmatpush1.msra.mxu0 %v2798
        %2969 = vmatprep.subr.mxu0 0.0
        %2970 = vmatpush1.msra.mxu0 %v2799
        %2971 = vmatprep.subr.mxu0 0.0
        %2972 = vmatpush1.msra.mxu0 %v2800
        %2973 = vmatprep.subr.mxu0 0.0
        %2974 = vmatpush1.msra.mxu0 %v2801
        %2975 = vmatprep.subr.mxu0 0.0
        %2976 = vmatpush1.msra.mxu0 %v2802
        %2977 = vmatprep.subr.mxu0 0.0
        %2978 = vmatpush1.msra.mxu0 %v2803
        %2979 = vmatprep.subr.mxu0 0.0
        %2980 = vmatpush1.msra.mxu0 %v2804
        %2981 = vmatprep.subr.mxu0 0.0
        %2982 = vmatpush1.msra.mxu0 %v2805
        %2983 = vmatprep.subr.mxu0 0.0
        %2984 = vmatpush1.msra.mxu0 %v2806
        %2985 = vmatprep.subr.mxu0 0.0
        %2986 = vmatpush1.msra.mxu0 %v2807
        %2987 = vmatprep.subr.mxu0 0.0
        %2988 = vmatpush1.msra.mxu0 %v2808
        %2989 = vmatprep.subr.mxu0 0.0
        %2990 = vmatpush1.msra.mxu0 %v2809
        %2991 = vmatprep.subr.mxu0 0.0
        %2992 = vmatpush1.msra.mxu0 %v2810
        %2993 = vmatprep.subr.mxu0 0.0
        %2994 = vmatpush1.msra.mxu0 %v2811
        %2995 = vmatprep.subr.mxu0 0.0
        %2996 = vmatpush1.msra.mxu0 %v2812
        %2997 = vmatprep.subr.mxu0 0.0
        %2998 = vmatpush1.msra.mxu0 %v2813
        %2999 = vmatprep.subr.mxu0 0.0
        %3000 = vmatpush1.msra.mxu0 %v2814
        %3001 = vmatprep.subr.mxu0 0.0
        %3002 = vmatpush1.msra.mxu0 %v2815
        %3003 = vmatprep.subr.mxu0 0.0
        %3004 = vmatpush1.msra.mxu0 %v2816
        %3005 = vmatprep.subr.mxu0 0.0
        %3006 = vmatpush1.msra.mxu0 %v2817
        %3007 = vmatprep.subr.mxu0 0.0
        %3008 = vmatpush1.msra.mxu0 %v2818
        %3009 = vmatprep.subr.mxu0 0.0
        %3010 = vmatpush1.msra.mxu0 %v2819
        %3011 = vmatprep.subr.mxu0 0.0
        %3012 = vmatpush1.msra.mxu0 %v2820
        %3013 = vmatprep.subr.mxu0 0.0
        %3014 = vmatpush1.msra.mxu0 %v2821
        %3015 = vmatprep.subr.mxu0 0.0
        %3016 = vmatpush1.msra.mxu0 %v2822
        %3017 = vmatprep.subr.mxu0 0.0
        %3018 = vmatpush1.msra.mxu0 %v2823
        %3019 = vmatprep.subr.mxu0 0.0
        %3020 = vmatpush1.msra.mxu0 %v2824
        %3021 = vmatprep.subr.mxu0 0.0
        %3022 = vmatpush1.msra.mxu0 %v2825
        %3023 = vmatprep.subr.mxu0 0.0
        %3024 = vmatpush1.msra.mxu0 %v2826
        %3025 = vmatprep.mubr.f32.mxu0 %v2758
        %3026 = vmatmul.mubr.f32.gmra.mrb[0].mxu0 %v2757
        %v3027 = vpop.f32.mrb[0].mxu0
        %v3028 = vadd.f32 %v2958, %v3027
        %v3029 = vpop.f32.mrb[0].mxu0
        %3030 = vdwg.mxu0
        %3031 = vmatprep.subr.mxu0 0.0
        %3032 = vmatpush1.msra.mxu0 %v2827
        %3033 = vmatprep.subr.mxu0 0.0
        %3034 = vmatpush1.msra.mxu0 %v2828
        %3035 = vmatprep.subr.mxu0 0.0
        %3036 = vmatpush1.msra.mxu0 %v2829
        %3037 = vmatprep.subr.mxu0 0.0
        %3038 = vmatpush1.msra.mxu0 %v2830
        %3039 = vmatprep.subr.mxu0 0.0
        %3040 = vmatpush1.msra.mxu0 %v2831
        %3041 = vmatprep.subr.mxu0 0.0
        %3042 = vmatpush1.msra.mxu0 %v2832
        %3043 = vmatprep.subr.mxu0 0.0
        %3044 = vmatpush1.msra.mxu0 %v2833
        %3045 = vmatprep.subr.mxu0 0.0
        %3046 = vmatpush1.msra.mxu0 %v2834
        %3047 = vmatprep.subr.mxu0 0.0
        %3048 = vmatpush1.msra.mxu0 %v2835
        %3049 = vmatprep.subr.mxu0 0.0
        %3050 = vmatpush1.msra.mxu0 %v2836
        %3051 = vmatprep.subr.mxu0 0.0
        %3052 = vmatpush1.msra.mxu0 %v2837
        %3053 = vmatprep.subr.mxu0 0.0
        %3054 = vmatpush1.msra.mxu0 %v2838
        %3055 = vmatprep.subr.mxu0 0.0
        %3056 = vmatpush1.msra.mxu0 %v2839
        %3057 = vmatprep.subr.mxu0 0.0
        %3058 = vmatpush1.msra.mxu0 %v2840
        %3059 = vmatprep.subr.mxu0 0.0
        %3060 = vmatpush1.msra.mxu0 %v2841
        %3061 = vmatprep.subr.mxu0 0.0
        %3062 = vmatpush1.msra.mxu0 %v2842
        %3063 = vmatprep.subr.mxu0 0.0
        %3064 = vmatpush1.msra.mxu0 %v2843
        %3065 = vmatprep.subr.mxu0 0.0
        %3066 = vmatpush1.msra.mxu0 %v2844
        %3067 = vmatprep.subr.mxu0 0.0
        %3068 = vmatpush1.msra.mxu0 %v2845
        %3069 = vmatprep.subr.mxu0 0.0
        %3070 = vmatpush1.msra.mxu0 %v2846
        %3071 = vmatprep.subr.mxu0 0.0
        %3072 = vmatpush1.msra.mxu0 %v2847
        %3073 = vmatprep.subr.mxu0 0.0
        %3074 = vmatpush1.msra.mxu0 %v2848
        %3075 = vmatprep.subr.mxu0 0.0
        %3076 = vmatpush1.msra.mxu0 %v2849
        %3077 = vmatprep.subr.mxu0 0.0
        %3078 = vmatpush1.msra.mxu0 %v2850
        %3079 = vmatprep.subr.mxu0 0.0
        %3080 = vmatpush1.msra.mxu0 %v2851
        %3081 = vmatprep.subr.mxu0 0.0
        %3082 = vmatpush1.msra.mxu0 %v2852
        %3083 = vmatprep.subr.mxu0 0.0
        %3084 = vmatpush1.msra.mxu0 %v2853
        %3085 = vmatprep.subr.mxu0 0.0
        %3086 = vmatpush1.msra.mxu0 %v2854
        %3087 = vmatprep.subr.mxu0 0.0
        %3088 = vmatpush1.msra.mxu0 %v2855
        %3089 = vmatprep.subr.mxu0 0.0
        %3090 = vmatpush1.msra.mxu0 %v2856
        %3091 = vmatprep.subr.mxu0 0.0
        %3092 = vmatpush1.msra.mxu0 %v2857
        %3093 = vmatprep.subr.mxu0 0.0
        %3094 = vmatpush1.msra.mxu0 %v2858
        %3095 = vmatprep.mubr.f32.mxu0 %v2760
        %3096 = vmatmul.mubr.f32.gmra.mrb[0].mxu0 %v2759
        %v3097 = vpop.f32.mrb[0].mxu0
        %v3098 = vadd.f32 %v3028, %v3097
        %v3099 = vpop.f32.mrb[0].mxu0
        %3100 = vdwg.mxu0
        %3101 = vmatprep.subr.mxu0 0.0
        %3102 = vmatpush1.msra.mxu0 %v2859
        %3103 = vmatprep.subr.mxu0 0.0
        %3104 = vmatpush1.msra.mxu0 %v2860
        %3105 = vmatprep.subr.mxu0 0.0
        %3106 = vmatpush1.msra.mxu0 %v2861
        %3107 = vmatprep.subr.mxu0 0.0
        %3108 = vmatpush1.msra.mxu0 %v2862
        %3109 = vmatprep.subr.mxu0 0.0
        %3110 = vmatpush1.msra.mxu0 %v2863
        %3111 = vmatprep.subr.mxu0 0.0
        %3112 = vmatpush1.msra.mxu0 %v2864
        %3113 = vmatprep.subr.mxu0 0.0
        %3114 = vmatpush1.msra.mxu0 %v2865
        %3115 = vmatprep.subr.mxu0 0.0
        %3116 = vmatpush1.msra.mxu0 %v2866
        %3117 = vmatprep.subr.mxu0 0.0
        %3118 = vmatpush1.msra.mxu0 %v2867
        %3119 = vmatprep.subr.mxu0 0.0
        %3120 = vmatpush1.msra.mxu0 %v2868
        %3121 = vmatprep.subr.mxu0 0.0
        %3122 = vmatpush1.msra.mxu0 %v2869
        %3123 = vmatprep.subr.mxu0 0.0
        %3124 = vmatpush1.msra.mxu0 %v2870
        %3125 = vmatprep.subr.mxu0 0.0
        %3126 = vmatpush1.msra.mxu0 %v2871
        %3127 = vmatprep.subr.mxu0 0.0
        %3128 = vmatpush1.msra.mxu0 %v2872
        %3129 = vmatprep.subr.mxu0 0.0
        %3130 = vmatpush1.msra.mxu0 %v2873
        %3131 = vmatprep.subr.mxu0 0.0
        %3132 = vmatpush1.msra.mxu0 %v2874
        %3133 = vmatprep.subr.mxu0 0.0
        %3134 = vmatpush1.msra.mxu0 %v2875
        %3135 = vmatprep.subr.mxu0 0.0
        %3136 = vmatpush1.msra.mxu0 %v2876
        %3137 = vmatprep.subr.mxu0 0.0
        %3138 = vmatpush1.msra.mxu0 %v2877
        %3139 = vmatprep.subr.mxu0 0.0
        %3140 = vmatpush1.msra.mxu0 %v2878
        %3141 = vmatprep.subr.mxu0 0.0
        %3142 = vmatpush1.msra.mxu0 %v2879
        %3143 = vmatprep.subr.mxu0 0.0
        %3144 = vmatpush1.msra.mxu0 %v2880
        %3145 = vmatprep.subr.mxu0 0.0
        %3146 = vmatpush1.msra.mxu0 %v2881
        %3147 = vmatprep.subr.mxu0 0.0
        %3148 = vmatpush1.msra.mxu0 %v2882
        %3149 = vmatprep.subr.mxu0 0.0
        %3150 = vmatpush1.msra.mxu0 %v2883
        %3151 = vmatprep.subr.mxu0 0.0
        %3152 = vmatpush1.msra.mxu0 %v2884
        %3153 = vmatprep.subr.mxu0 0.0
        %3154 = vmatpush1.msra.mxu0 %v2885
        %3155 = vmatprep.subr.mxu0 0.0
        %3156 = vmatpush1.msra.mxu0 %v2886
        %3157 = vmatprep.subr.mxu0 0.0
        %3158 = vmatpush1.msra.mxu0 %v2887
        %3159 = vmatprep.subr.mxu0 0.0
        %3160 = vmatpush1.msra.mxu0 %v2888
        %3161 = vmatprep.subr.mxu0 0.0
        %3162 = vmatpush1.msra.mxu0 %v2889
        %3163 = vmatprep.subr.mxu0 0.0
        %3164 = vmatpush1.msra.mxu0 %v2890
        %3165 = vmatprep.mubr.f32.mxu0 %v2762
        %3166 = vmatmul.mubr.f32.gmra.mrb[0].mxu0 %v2761
        %v3167 = vpop.f32.mrb[0].mxu0
        %v3168 = vadd.f32 %v3098, %v3167
        %v3169 = vpop.f32.mrb[0].mxu0
        %3170 = vdwg.mxu0
        %v3171 = vld [vmem:[%s10] sm:$0xff]
        %v3172 = vld [vmem:[%s10 + $0x8] sm:$0xff]
        %v3173 = vld [vmem:[%s10 + $0x10] sm:$0xff]
        %v3174 = vld [vmem:[%s10 + $0x18] sm:$0xff]
        %v3175 = vld [vmem:[%s11] sm:$0xff]
        %v3176 = vld [vmem:[%s11 + $0x8] sm:$0xff]
        %v3177 = vld [vmem:[%s11 + $0x10] sm:$0xff]
        %v3178 = vld [vmem:[%s11 + $0x18] sm:$0xff]
        %v3180 = vsel %vm469, %v3168, 0
        %3182 = vmatprep.subr.mxu0 0.0
        %3183 = vmatpush1.msra.mxu0 %v3175
        %3184 = vmatprep.subr.mxu0 0.0
        %3185 = vmatpush1.msra.mxu0 %v3176
        %3186 = vmatprep.subr.mxu0 0.0
        %3187 = vmatpush1.msra.mxu0 %v3177
        %3188 = vmatprep.subr.mxu0 0.0
        %3189 = vmatpush1.msra.mxu0 %v3178
        %3190 = vmatprep.subr.mxu0 0.0
        %3191 = vmatpush1.msra.mxu0 0.0
        %3192 = vmatprep.subr.mxu0 0.0
        %3193 = vmatpush1.msra.mxu0 0.0
        %3194 = vmatprep.subr.mxu0 0.0
        %3195 = vmatpush1.msra.mxu0 0.0
        %3196 = vmatprep.subr.mxu0 0.0
        %3197 = vmatpush1.msra.mxu0 0.0
        %3198 = vmatprep.subr.mxu0 0.0
        %3199 = vmatpush1.msra.mxu0 0.0
        %3200 = vmatprep.subr.mxu0 0.0
        %3201 = vmatpush1.msra.mxu0 0.0
        %3202 = vmatprep.subr.mxu0 0.0
        %3203 = vmatpush1.msra.mxu0 0.0
        %3204 = vmatprep.subr.mxu0 0.0
        %3205 = vmatpush1.msra.mxu0 0.0
        %3206 = vmatprep.subr.mxu0 0.0
        %3207 = vmatpush1.msra.mxu0 0.0
        %3208 = vmatprep.subr.mxu0 0.0
        %3209 = vmatpush1.msra.mxu0 0.0
        %3210 = vmatprep.subr.mxu0 0.0
        %3211 = vmatpush1.msra.mxu0 0.0
        %3212 = vmatprep.subr.mxu0 0.0
        %3213 = vmatpush1.msra.mxu0 0.0
        %3214 = vmatprep.subr.mxu0 0.0
        %3215 = vmatpush1.msra.mxu0 0.0
        %3216 = vmatprep.subr.mxu0 0.0
        %3217 = vmatpush1.msra.mxu0 0.0
        %3218 = vmatprep.subr.mxu0 0.0
        %3219 = vmatpush1.msra.mxu0 0.0
        %3220 = vmatprep.subr.mxu0 0.0
        %3221 = vmatpush1.msra.mxu0 0.0
        %3222 = vmatprep.subr.mxu0 0.0
        %3223 = vmatpush1.msra.mxu0 0.0
        %3224 = vmatprep.subr.mxu0 0.0
        %3225 = vmatpush1.msra.mxu0 0.0
        %3226 = vmatprep.subr.mxu0 0.0
        %3227 = vmatpush1.msra.mxu0 0.0
        %3228 = vmatprep.subr.mxu0 0.0
        %3229 = vmatpush1.msra.mxu0 0.0
        %3230 = vmatprep.subr.mxu0 0.0
        %3231 = vmatpush1.msra.mxu0 0.0
        %3232 = vmatprep.subr.mxu0 0.0
        %3233 = vmatpush1.msra.mxu0 0.0
        %3234 = vmatprep.subr.mxu0 0.0
        %3235 = vmatpush1.msra.mxu0 0.0
        %3236 = vmatprep.subr.mxu0 0.0
        %3237 = vmatpush1.msra.mxu0 0.0
        %3238 = vmatprep.subr.mxu0 0.0
        %3239 = vmatpush1.msra.mxu0 0.0
        %3240 = vmatprep.subr.mxu0 0.0
        %3241 = vmatpush1.msra.mxu0 0.0
        %3242 = vmatprep.subr.mxu0 0.0
        %3243 = vmatpush1.msra.mxu0 0.0
        %3244 = vmatprep.subr.mxu0 0.0
        %3245 = vmatpush1.msra.mxu0 0.0
        %3246 = vmatprep.mubr.f32.mxu0 0.0
        %3247 = vmatmul.mubr.f32.gmra.mrb[0].mxu0 %v3180
        %v3248 = vpop.f32.mrb[0].mxu0
        %v3249 = vadd.f32 0.0, %v3248
        %v3250 = vpop.f32.mrb[0].mxu0
        %3251 = vdwg.mxu0
        %3252 = vmatprep.subr.mxu0 0.0
        %3253 = vmatpush1.msra.mxu0 %v3171
        %3254 = vmatprep.subr.mxu0 0.0
        %3255 = vmatpush1.msra.mxu0 %v3172
        %3256 = vmatprep.subr.mxu0 0.0
        %3257 = vmatpush1.msra.mxu0 %v3173
        %3258 = vmatprep.subr.mxu0 0.0
        %3259 = vmatpush1.msra.mxu0 %v3174
        %3260 = vmatprep.subr.mxu0 0.0
        %3261 = vmatpush1.msra.mxu0 0.0
        %3262 = vmatprep.subr.mxu0 0.0
        %3263 = vmatpush1.msra.mxu0 0.0
        %3264 = vmatprep.subr.mxu0 0.0
        %3265 = vmatpush1.msra.mxu0 0.0
        %3266 = vmatprep.subr.mxu0 0.0
        %3267 = vmatpush1.msra.mxu0 0.0
        %3268 = vmatprep.subr.mxu0 0.0
        %3269 = vmatpush1.msra.mxu0 0.0
        %3270 = vmatprep.subr.mxu0 0.0
        %3271 = vmatpush1.msra.mxu0 0.0
        %3272 = vmatprep.subr.mxu0 0.0
        %3273 = vmatpush1.msra.mxu0 0.0
        %3274 = vmatprep.subr.mxu0 0.0
        %3275 = vmatpush1.msra.mxu0 0.0
        %3276 = vmatprep.subr.mxu0 0.0
        %3277 = vmatpush1.msra.mxu0 0.0
        %3278 = vmatprep.subr.mxu0 0.0
        %3279 = vmatpush1.msra.mxu0 0.0
        %3280 = vmatprep.subr.mxu0 0.0
        %3281 = vmatpush1.msra.mxu0 0.0
        %3282 = vmatprep.subr.mxu0 0.0
        %3283 = vmatpush1.msra.mxu0 0.0
        %3284 = vmatprep.subr.mxu0 0.0
        %3285 = vmatpush1.msra.mxu0 0.0
        %3286 = vmatprep.subr.mxu0 0.0
        %3287 = vmatpush1.msra.mxu0 0.0
        %3288 = vmatprep.subr.mxu0 0.0
        %3289 = vmatpush1.msra.mxu0 0.0
        %3290 = vmatprep.subr.mxu0 0.0
        %3291 = vmatpush1.msra.mxu0 0.0
        %3292 = vmatprep.subr.mxu0 0.0
        %3293 = vmatpush1.msra.mxu0 0.0
        %3294 = vmatprep.subr.mxu0 0.0
        %3295 = vmatpush1.msra.mxu0 0.0
        %3296 = vmatprep.subr.mxu0 0.0
        %3297 = vmatpush1.msra.mxu0 0.0
        %3298 = vmatprep.subr.mxu0 0.0
        %3299 = vmatpush1.msra.mxu0 0.0
        %3300 = vmatprep.subr.mxu0 0.0
        %3301 = vmatpush1.msra.mxu0 0.0
        %3302 = vmatprep.subr.mxu0 0.0
        %3303 = vmatpush1.msra.mxu0 0.0
        %3304 = vmatprep.subr.mxu0 0.0
        %3305 = vmatpush1.msra.mxu0 0.0
        %3306 = vmatprep.subr.mxu0 0.0
        %3307 = vmatpush1.msra.mxu0 0.0
        %3308 = vmatprep.subr.mxu0 0.0
        %3309 = vmatpush1.msra.mxu0 0.0
        %3310 = vmatprep.subr.mxu0 0.0
        %3311 = vmatpush1.msra.mxu0 0.0
        %3312 = vmatprep.subr.mxu0 0.0
        %3313 = vmatpush1.msra.mxu0 0.0
        %3314 = vmatprep.subr.mxu0 0.0
        %3315 = vmatpush1.msra.mxu0 0.0
        %3316 = vmatprep.mubr.f32.mxu0 0.0
        %3317 = vmatmul.mubr.f32.gmra.mrb[0].mxu0 %v471
        %v3318 = vpop.f32.mrb[0].mxu0
        %v3319 = vadd.f32 %v3249, %v3318
        %v3320 = vpop.f32.mrb[0].mxu0
        %3321 = vdwg.mxu0
        %v3322 = vld [vmem:[%s12] sm:$0x1]
        %v3324 = vlaneseq
        %v3325 = vshrl.u32 %v3324, 7
        %v3326 = vsub.s32 0, %v3325
        %v3327 = vrot.slane %v3322, %v3326
        %v3329 = vadd.f32 %v3319, %v3327
        %vm3330 = vcmask 254976
        %3331 = vst.msk [vmem:[%s446] sm:$0x3] %vm3330, %v3329
        %s3332 = sand.u32 %s318, 1
        %s3333 = scalar_lea.sflag [#allocation3], %s3332
        %s3334 = sand.u32 %s318, 1
        %s3335 = smul.addr %s3334, 2
        %s3336 = scalar_lea.vmem [#allocation2], %s3335
        // Predicated region
        $region73: #{temporal_pattern_attention.1} parent=71 // pred_check
          %p3337 = pneg %p328
        $region74: #{temporal_pattern_attention.1} parent=71 // pred_check_branch
          %3339 = sbr.rel (%p3337) target = $region76
        $region75: #{temporal_pattern_attention.1} parent=71 // pred_region
          %s3341 = ssub.s32 32, 32
          %3342 = vsyncadd %s3333, %s3341
          %s3343 = smul.addr %s27, 32
          %s3344 = scalar_lea.hbm %s13, %s3343
          %s3346 = sshll.u32 %s3336, 4
          %s3347 = int_to_ptr.vmem [resolvable:$true] %s3346
          %3349 = dma.vmem_to_hbm [thread:$0]  %s3347, 32, %s3344, %s3333
        $region76: #{temporal_pattern_attention.1} parent=71 // pred_fallthru
          _
      $region72: #{temporal_pattern_attention.1} parent=5 // pred_fallthru
        _
      %p3350 = scmp.le.s32.totalorder 2, %s22
      // Predicated region
      $region77: #{temporal_pattern_attention.1} parent=5 // pred_check
        %p3351 = pneg %p3350
      $region78: #{temporal_pattern_attention.1} parent=5 // pred_check_branch
        %3353 = sbr.rel (%p3351) target = $region80
      $region79: #{temporal_pattern_attention.1} parent=5 // pred_region
        %s3354 = ssub.s32 %s22, 2
        // Predicated region
        $region81: #{temporal_pattern_attention.1} parent=79 // pred_check
          %p3355 = pneg %p334
        $region82: #{temporal_pattern_attention.1} parent=79 // pred_check_branch
          %3357 = sbr.rel (%p3355) target = $region84
        $region83: #{temporal_pattern_attention.1} parent=79 // pred_region
          %s3358 = sand.u32 %s319, 1
          %s3359 = scalar_lea.sflag [#allocation3], %s3358
          %s3360 = sand.u32 %s319, 1
          %s3361 = smul.addr %s3360, 2
          %s3362 = scalar_lea.vmem [#allocation2], %s3361
          %3363 = dma.done %s3359, 32
        $region84: #{temporal_pattern_attention.1} parent=79 // pred_fallthru
          _
      $region80: #{temporal_pattern_attention.1} parent=5 // pred_fallthru
        _
    $region6: #{temporal_pattern_attention.1} parent=1 // loop_footer
      %s26 = sadd.s32 1, %s22
    $region7: #{temporal_pattern_attention.1} parent=1 // loop_footer_branch
      %21 = sbr.rel target = $region3
    $region8: #{temporal_pattern_attention.1} parent=1 // loop_exit
      _
    %3364 = vsyncpa [#allocation3], 1
    %s3365 = scalar_lea.sflag [#allocation3], 1
    %3366 = vsyncpa %s3365, 1

</llo_original>
